<compile_context>
chip_gen: v7x
topology: tpu7x:2x2x1
jax: 0.10.0
libtpu: 0.0.40
codegen_flags: <defaults>
</compile_context>

<pallas_src>
import functools
import math

import jax
import jax.numpy as jnp
from jax import lax
from jax.experimental import pallas as pl
from jax.experimental.pallas import tpu as pltpu


# ----------------------------- small helpers -------------------------------

def _rup(n, m=128):
    """Round n up to a multiple of m (lane alignment)."""
    return ((n + m - 1) // m) * m


def _silu(x):
    return x * jax.nn.sigmoid(x)


def _bf16(x):
    return x.astype(jnp.bfloat16)


def _vec_layout(Dp, Zp, Hp, Fp):
    """Offsets of the packed per-feature vectors (every width is a multiple
    of 128, so every offset is 128-aligned -> free in-kernel slice views)."""
    segs = [('omega', Dp), ('v_b', Hp), ('mx_b', 2 * Dp + Zp + Hp), ('h_b', Dp),
            ('qg', Zp), ('qb', Zp), ('kg', Zp), ('kb', Zp),
            ('ln1_g', Dp), ('ln1_b', Dp), ('fc1_b', Fp), ('fc2_b', Dp),
            ('ln2_g', Dp), ('ln2_b', Dp)]
    off, cur = {}, 0
    for name, w in segs:
        off[name] = (cur, w)
        cur += w
    return off, cur


def _masked_layer_norm(x, g, b, mask, d_real, eps=1e-5):
    """LayerNorm over the first d_real lanes.  Relies on pad lanes of x being
    exactly zero (maintained by zero-padded weights/biases), and zero-padded
    gamma/beta so pad lanes of the output are exactly zero again."""
    inv_d = 1.0 / d_real
    mu = jnp.sum(x, axis=-1, keepdims=True) * inv_d
    xc = jnp.where(mask, x - mu, 0.0)
    var = jnp.sum(xc * xc, axis=-1, keepdims=True) * inv_d
    return xc * lax.rsqrt(var + eps) * g + b


def _default_vmem_limit():
    cap = 128 * 1024 * 1024
    try:
        info = pltpu.get_tpu_info()
        cap = int(getattr(info, 'vmem_capacity_bytes', cap))
    except Exception:
        pass
    # ~60% of physical VMEM, capped at 64 MiB:  ~38 MiB on v7x (64 MiB/TC),
    # 64 MiB on v5e/v6e (128 MiB) -- leaves headroom for double-buffered blocks.
    return int(min(cap * 6 // 10, 64 * 1024 * 1024))


# ------------------------------ Pallas kernel ------------------------------
# One grid step == b_blk batch elements.  Row-wise ops run on (b_blk*L, dim);
# attention runs KV-tiled with online-softmax scratch.

def mega_layer_kernel(x_ref, ema_ref, vec_ref,
                      vw_ref, mxw_ref, hw_ref, fc1w_ref, fc2w_ref,
                      bias_ref, o_ref,
                      k_sc, v_sc, m_sc, l_sc, acc_sc,
                      *, d_real, layout):
    Bb, L, Dp = x_ref.shape
    n_kv, _, tk = bias_ref.shape
    Zp = k_sc.shape[-1]
    Hp = v_sc.shape[-1]
    M = Bb * L

    def seg(name):
        a, w = layout[name]
        return vec_ref[:, a:a + w]                  # (1, w), 128-aligned slice

    lane = lax.broadcasted_iota(jnp.int32, (M, Dp), 1)
    d_mask = lane < d_real

    x = x_ref[...].reshape(M, Dp)                   # L % 8 == 0 -> free retiling
    residual = x

    # ---- value projection: v = silu(x @ Wv + bv) ---------------------------
    v = _silu(jnp.dot(_bf16(x), vw_ref[...],
                      preferred_element_type=jnp.float32) + seg('v_b'))     # (M, Hp)

    # ---- mx = silu(EMA(x) + x * omega); EMA precomputed outside (bf16) -----
    mx = _silu(ema_ref[...].astype(jnp.float32).reshape(M, Dp) + x * seg('omega'))

    # ---- fused mx projection, segments [u | z | r | hx] 128-aligned ---------
    proj = (jnp.dot(_bf16(mx), mxw_ref[...],
                    preferred_element_type=jnp.float32) + seg('mx_b'))
    u_gate = jax.nn.sigmoid(proj[:, :Dp])
    z = _silu(proj[:, Dp:Dp + Zp])
    r = _silu(proj[:, Dp + Zp:Dp + Zp + Hp])
    hx = proj[:, Dp + Zp + Hp:]

    # ---- q / k per-head affine (1/sqrt(Z) scaling folded into qg/qb) --------
    q = z * seg('qg') + seg('qb')
    k = z * seg('kg') + seg('kb')

    q3 = _bf16(q.reshape(Bb, L, Zp))
    k_sc[...] = k.reshape(Bb, L, Zp).astype(k_sc.dtype)
    v_sc[...] = v.reshape(Bb, L, Hp).astype(v_sc.dtype)

    # ---- KV-tiled softmax attention with online-softmax scratch -------------
    m_sc[...] = jnp.full(m_sc.shape, -jnp.inf, jnp.float32)
    l_sc[...] = jnp.zeros(l_sc.shape, jnp.float32)
    acc_sc[...] = jnp.zeros(acc_sc.shape, jnp.float32)

    def kv_step(t, carry):
        off = pl.multiple_of(t * tk, tk)
        kt = k_sc[:, pl.ds(off, tk), :]                        # (Bb, tk, Zp) bf16
        vt = v_sc[:, pl.ds(off, tk), :]                        # (Bb, tk, Hp) bf16
        bt = bias_ref[pl.ds(t, 1)]                             # (1, L, tk)  bf16
        s = jnp.einsum('bqz,bkz->bqk', q3, kt,
                       preferred_element_type=jnp.float32)
        s = s + bt.astype(jnp.float32)
        m_new = jnp.maximum(m_sc[...], jnp.max(s, axis=-1, keepdims=True))
        alpha = jnp.exp(m_sc[...] - m_new)
        p = jnp.exp(s - m_new)
        l_sc[...] = alpha * l_sc[...] + jnp.sum(p, axis=-1, keepdims=True)
        acc_sc[...] = alpha * acc_sc[...] + jnp.einsum(
            'bqk,bkh->bqh', _bf16(p), vt, preferred_element_type=jnp.float32)
        m_sc[...] = m_new
        return carry

    lax.fori_loop(0, n_kv, kv_step, 0)

    attn = acc_sc[...] * pl.reciprocal(l_sc[...], approx=True)              # (Bb, L, Hp)

    # ---- output gate + residual (torch.addcmul), post-norm ------------------
    h = _silu(hx + jnp.dot(_bf16(attn.reshape(M, Hp) * r), hw_ref[...],
                           preferred_element_type=jnp.float32) + seg('h_b'))
    out = residual + u_gate * (h - residual)
    out = _masked_layer_norm(out, seg('ln1_g'), seg('ln1_b'), d_mask, d_real)

    # ---- NormalizedFeedForwardNetwork (post-norm) ----------------------------
    y = _silu(jnp.dot(_bf16(out), fc1w_ref[...],
                      preferred_element_type=jnp.float32) + seg('fc1_b'))
    y = jnp.dot(_bf16(y), fc2w_ref[...],
                preferred_element_type=jnp.float32) + seg('fc2_b')
    y = _masked_layer_norm(y + out, seg('ln2_g'), seg('ln2_b'), d_mask, d_real)

    o_ref[...] = y.reshape(Bb, L, Dp).astype(o_ref.dtype)


# ----------------------------- parameter setup ------------------------------

def init_layer_params(key, d_model, hidden_dim, ffn_hidden_dim, z_dim, n_dim,
                      max_seq_len):
    D, H, Z, N, Fh, P = d_model, hidden_dim, z_dim, n_dim, ffn_hidden_dim, max_seq_len
    ks = jax.random.split(key, 16)
    std = 0.02
    kd = 2 * D                                      # bidirectional EMA
    p = {
        'ema_delta': jax.random.normal(ks[0], (kd, N, 1)) * 0.2,
        'ema_alpha': jax.random.normal(ks[1], (kd, N, 1)) * 0.2,
        'ema_beta':  jax.random.normal(ks[2], (kd, N, 1)) * std,
        'ema_gamma': jax.random.normal(ks[3], (kd, N)),
        'omega':     jax.random.normal(ks[4], (D,)) * std,
        'v_w': jax.random.normal(ks[5], (H, D)) * std,              # torch (out, in)
        'v_b': jax.random.normal(ks[6], (H,)) * std,
        'mx_w': jax.random.normal(ks[7], (Z + H + 2 * D, D)) * std,  # [u|z|r|hx]
        'mx_b': jax.random.normal(ks[8], (Z + H + 2 * D,)) * std,
        'h_w': jax.random.normal(ks[9], (D, H)) * std,
        'h_b': jax.random.normal(ks[10], (D,)) * std,
        'att_gamma': jax.random.normal(ks[11], (2, Z)) * std + 1.0,
        'att_beta':  jax.random.normal(ks[12], (2, Z)) * std,
        'rel_pos':   jax.random.normal(ks[13], (2 * P - 1,)) * std,
        'ln1_g': jnp.ones((D,)), 'ln1_b': jnp.zeros((D,)),
        'fc1_w': jax.random.normal(ks[14], (Fh, D)) * std,
        'fc1_b': jnp.zeros((Fh,)),
        'fc2_w': jax.random.normal(ks[15], (D, Fh)) * std,
        'fc2_b': jnp.zeros((D,)),
        'ln2_g': jnp.ones((D,)), 'ln2_b': jnp.zeros((D,)),
    }
    return jax.tree_util.tree_map(lambda a: a.astype(jnp.float32), p)


def ema_decay_kernels(p, L):
    """MultiHeadEMA._compute_kernel: per-channel decay kernels (fwd, bwd)."""
    N = p['ema_delta'].shape[1]
    scale = math.sqrt(1.0 / N)
    pp = jax.nn.sigmoid(p['ema_delta'])             # (2D, N, 1)
    alpha = jax.nn.sigmoid(p['ema_alpha'])
    qq = 1.0 - pp * alpha
    vander = jnp.arange(L, dtype=jnp.float32).reshape(1, 1, L) * jnp.log(qq)
    kern = (pp * p['ema_beta']) * jnp.exp(vander)   # (2D, N, L)
    k_dl = jnp.einsum('dnl,dn->dl', kern, p['ema_gamma'] * scale)   # (2D, L)
    D = k_dl.shape[0] // 2
    return k_dl[:D], k_dl[D:]                       # forward / backward, (D, L)


def prepare_layer(p, L, cfg, dims, kv_tile):
    """Static per-layer operands: EMA FFT kernel, tiled bias, padded weights,
    and one packed lane-aligned vector of all tiny per-feature operands."""
    D, H, Z, Fh, P = (cfg['d_model'], cfg['hidden_dim'], cfg['z_dim'],
                      cfg['ffn_hidden_dim'], cfg['max_seq_len'])
    Dp, Zp, Hp, Fp = dims
    assert L <= P and L % kv_tile == 0

    # --- bidirectional EMA as a circular conv kernel of length 2L (rFFT) -----
    k1, k2 = ema_decay_kernels(p, L)                # (D, L) each
    c = jnp.zeros((D, 2 * L), jnp.float32)
    c = c.at[:, 0].set(k1[:, 0] + k2[:, 0])
    c = c.at[:, 1:L].set(k1[:, 1:])
    c = c.at[:, L + 1:].set(k2[:, 1:][:, ::-1])
    ema_kf = jnp.fft.rfft(c, n=2 * L, axis=-1)      # (D, L+1) complex64
    ema_kf = jnp.pad(ema_kf, ((0, Dp - D), (0, 0)))  # pad channels -> Dp

    # --- simple rel-pos bias, pre-split into KV tiles, bf16 -------------------
    idx = jnp.arange(L)
    bias_mat = p['rel_pos'][P - 1 + (idx[None, :] - idx[:, None])]   # (L, L)
    n_kv = L // kv_tile
    bias = bias_mat.reshape(L, n_kv, kv_tile).transpose(1, 0, 2).astype(jnp.bfloat16)
    # TODO(synk): for very long L build the (L, tk) bias tile in-kernel from the
    #             1-D (2P-1) table instead of shipping the O(L^2) tensor.

    # --- weights: (in, out) layout, zero-padded to 128-aligned tiles, bf16 ----
    def padw(w_t, rows, cols):
        return _bf16(jnp.pad(w_t, ((0, rows - w_t.shape[0]),
                                   (0, cols - w_t.shape[1]))))

    mxT = p['mx_w'].T                               # (D, D+Z+H+D) = [u|z|r|hx]
    mx_segs = [mxT[:, :D], mxT[:, D:D + Z], mxT[:, D + Z:D + Z + H], mxT[:, D + Z + H:]]
    mx_widths = [Dp, Zp, Hp, Dp]
    mx_w = _bf16(jnp.concatenate(
        [jnp.pad(s, ((0, Dp - D), (0, w - s.shape[1])))
         for s, w in zip(mx_segs, mx_widths)], axis=1))              # (Dp, 2Dp+Zp+Hp)

    weights = dict(
        v_w=padw(p['v_w'].T, Dp, Hp), mx_w=mx_w, h_w=padw(p['h_w'].T, Hp, Dp),
        fc1_w=padw(p['fc1_w'].T, Dp, Fp), fc2_w=padw(p['fc2_w'].T, Fp, Dp))

    # --- pack every small per-feature vector into one lane-aligned row --------
    layout, vtot = _vec_layout(Dp, Zp, Hp, Fp)
    vec = jnp.zeros((1, vtot), jnp.float32)

    def put(v_, name, val):
        a, _ = layout[name]
        return v_.at[0, a:a + val.shape[0]].set(val.astype(jnp.float32))

    scaling = float(Z) ** -0.5
    mx_b = p['mx_b']
    mx_b_pad = jnp.concatenate([
        jnp.pad(mx_b[:D], (0, Dp - D)),
        jnp.pad(mx_b[D:D + Z], (0, Zp - Z)),
        jnp.pad(mx_b[D + Z:D + Z + H], (0, Hp - H)),
        jnp.pad(mx_b[D + Z + H:], (0, Dp - D))])
    vec = put(vec, 'omega', p['omega'])
    vec = put(vec, 'v_b', p['v_b'])
    vec = put(vec, 'mx_b', mx_b_pad)
    vec = put(vec, 'h_b', p['h_b'])
    vec = put(vec, 'qg', p['att_gamma'][0] * scaling)
    vec = put(vec, 'qb', p['att_beta'][0] * scaling)
    vec = put(vec, 'kg', p['att_gamma'][1])
    vec = put(vec, 'kb', p['att_beta'][1])
    vec = put(vec, 'ln1_g', p['ln1_g'])
    vec = put(vec, 'ln1_b', p['ln1_b'])
    vec = put(vec, 'fc1_b', p['fc1_b'])
    vec = put(vec, 'fc2_b', p['fc2_b'])
    vec = put(vec, 'ln2_g', p['ln2_g'])
    vec = put(vec, 'ln2_b', p['ln2_b'])

    return dict(ema_kf=ema_kf, vec=vec, bias=bias, **weights)


def ema_conv(x, ema_kf, L):
    """Bidirectional MultiHeadEMA long conv via rFFT (plain XLA, like torch)."""
    # TODO(synk): Pallas has no FFT primitive; this stays outside the kernel.
    x_f = jnp.fft.rfft(x, n=2 * L, axis=1)                       # (B, L+1, Dp)
    y = jnp.fft.irfft(x_f * jnp.transpose(ema_kf)[None, :, :], n=2 * L, axis=1)
    return y[:, :L, :]                                           # (B, L, Dp)


# ------------------------------ pallas wrapper ------------------------------

def mega_layer_forward(x, ema, st, *, d_real, dims, b_blk, vmem_limit):
    B, L, Dp = x.shape
    assert B % b_blk == 0
    _, Zp, Hp, Fp = dims
    layout, vtot = _vec_layout(Dp, Zp, Hp, Fp)
    n_kv, _, tk = st['bias'].shape
    Wp = 2 * Dp + Zp + Hp

    kernel = functools.partial(mega_layer_kernel, d_real=d_real, layout=layout)

    def data_spec():
        return pl.BlockSpec((b_blk, L, Dp), lambda b: (b, 0, 0))

    def full_spec(shape):
        return pl.BlockSpec(shape, lambda b, _n=len(shape): (0,) * _n)

    in_specs = [
        data_spec(),                       # x     (B, L, Dp) f32
        data_spec(),                       # ema   (B, L, Dp) bf16
        full_spec((1, vtot)),              # packed per-feature vectors, f32
        full_spec((Dp, Hp)),               # v_w   bf16
        full_spec((Dp, Wp)),               # fused mx_w [u|z|r|hx] bf16
        full_spec((Hp, Dp)),               # h_w   bf16
        full_spec((Dp, Fp)),               # fc1_w bf16
        full_spec((Fp, Dp)),               # fc2_w bf16
        full_spec((n_kv, L, tk)),          # rel-pos bias KV tiles, bf16
    ]
    scratch = [
        pltpu.VMEM((b_blk, L, Zp), jnp.bfloat16),   # k
        pltpu.VMEM((b_blk, L, Hp), jnp.bfloat16),   # v
        pltpu.VMEM((b_blk, L, 1), jnp.float32),     # online-softmax m
        pltpu.VMEM((b_blk, L, 1), jnp.float32),     # online-softmax l
        pltpu.VMEM((b_blk, L, Hp), jnp.float32),    # online-softmax acc
    ]

    return pl.pallas_call(
        kernel,
        out_shape=jax.ShapeDtypeStruct((B, L, Dp), jnp.float32),
        grid=(B // b_blk,),
        in_specs=in_specs,
        out_specs=data_spec(),
        scratch_shapes=scratch,
        compiler_params=pltpu.CompilerParams(
            dimension_semantics=("parallel",),      # batch elems independent
            vmem_limit_bytes=vmem_limit),
    )(x, ema, st['vec'], st['v_w'], st['mx_w'], st['h_w'],
      st['fc1_w'], st['fc2_w'], st['bias'])


def mega_lra_encoder_forward(x, layer_static, *, L, d_real, dims, b_blk, vmem_limit):
    """Mirrors MegaLRAEncoder.forward (last_state_only=True, final_norm=None)."""
    for st in layer_static:
        ema = ema_conv(x, st['ema_kf'], L).astype(jnp.bfloat16)  # bf16 HBM stream
        x = mega_layer_forward(x, ema, st, d_real=d_real, dims=dims,
                               b_blk=b_blk, vmem_limit=vmem_limit)
    # normalize_before=False -> final_norm is None
    return x, None


# --------------------------- pure-JAX reference -----------------------------
# Independent f32 reference at the ORIGINAL (unpadded) sizes: dense (L, L, D)
# EMA matrix (validates the FFT path) and unfused projections.

def mega_layer_reference(x, p, cfg, L):
    D, H, Z, P = cfg['d_model'], cfg['hidden_dim'], cfg['z_dim'], cfg['max_seq_len']
    k1, k2 = ema_decay_kernels(p, L)
    idx = jnp.arange(L)
    diff = idx[:, None] - idx[None, :]
    fwd = jnp.where((diff >= 0)[..., None], k1.T[jnp.clip(diff, 0, L - 1)], 0.0)
    bwd = jnp.where((diff <= 0)[..., None], k2.T[jnp.clip(-diff, 0, L - 1)], 0.0)
    wp = fwd + bwd                                   # (L, L, D)
    bias_mat = p['rel_pos'][P - 1 + (idx[None, :] - idx[:, None])]

    mx_wT, mx_b = p['mx_w'].T, p['mx_b']
    uw, zw = mx_wT[:, :D], mx_wT[:, D:D + Z]
    rw, hxw = mx_wT[:, D + Z:D + Z + H], mx_wT[:, D + Z + H:]
    ub, zb = mx_b[:D], mx_b[D:D + Z]
    rb, hxb = mx_b[D + Z:D + Z + H], mx_b[D + Z + H:]
    ag, ab = p['att_gamma'], p['att_beta']

    def ln(v, g, b):
        mu = v.mean(-1, keepdims=True)
        var = ((v - mu) ** 2).mean(-1, keepdims=True)
        return (v - mu) / jnp.sqrt(var + 1e-5) * g + b

    silu = lambda t: t * jax.nn.sigmoid(t)
    outs = []
    for bi in range(x.shape[0]):
        xb = x[bi]
        v = silu(xb @ p['v_w'].T + p['v_b'])
        mx = silu(jnp.einsum('tsd,sd->td', wp, xb) + xb * p['omega'])
        u_g = jax.nn.sigmoid(mx @ uw + ub)
        z = silu(mx @ zw + zb)
        r = silu(mx @ rw + rb)
        hx = mx @ hxw + hxb
        q = z * ag[0] + ab[0]
        k = z * ag[1] + ab[1]
        qk = (q * Z ** -0.5) @ k.T + bias_mat
        attn = jax.nn.softmax(qk, axis=-1)
        h = silu(hx + (attn @ v * r) @ p['h_w'].T + p['h_b'])
        out = ln(xb + u_g * (h - xb), p['ln1_g'], p['ln1_b'])
        y = silu(out @ p['fc1_w'].T + p['fc1_b']) @ p['fc2_w'].T + p['fc2_b']
        outs.append(ln(y + out, p['ln2_g'], p['ln2_b']))
    return jnp.stack(outs, 0)


# ----------------------------------- main ------------------------------------

if __name__ == "__main__":
    cfg = dict(d_model=32, hidden_dim=64, ffn_hidden_dim=32,
               num_encoder_layers=2, z_dim=16, n_dim=4, max_seq_len=32)
    B, L = 4, 32
    b_blk = 2          # grid of B//b_blk = 2 parallel steps (>=2 for v7x megacore)
    kv_tile = 16       # KV tile for the online-softmax loop (L % kv_tile == 0)
    assert L % 8 == 0 and L % kv_tile == 0 and kv_tile % 16 == 0

    D = cfg['d_model']
    dims = (_rup(D), _rup(cfg['z_dim']), _rup(cfg['hidden_dim']),
            _rup(cfg['ffn_hidden_dim']))            # (Dp, Zp, Hp, Fp)
    Dp = dims[0]

    key = jax.random.PRNGKey(0)
    k_in, k_par = jax.random.split(key)
    u = jax.random.normal(k_in, (B, L, D), dtype=jnp.float32)

    layer_keys = jax.random.split(k_par, cfg['num_encoder_layers'])
    layer_params = [init_layer_params(k, D, cfg['hidden_dim'],
                                      cfg['ffn_hidden_dim'], cfg['z_dim'],
                                      cfg['n_dim'], cfg['max_seq_len'])
                    for k in layer_keys]

    # static per-layer operands prepared once (hoisted out of the forward)
    layer_static = [prepare_layer(p, L, cfg, dims, kv_tile) for p in layer_params]

    vmem_limit = _default_vmem_limit()

    @jax.jit
    def fwd(u_in, statics):
        x = jnp.pad(u_in, ((0, 0), (0, 0), (0, Dp - D)))   # zero-pad feature lanes
        x, _ = mega_lra_encoder_forward(x, statics, L=L, d_real=D, dims=dims,
                                        b_blk=b_blk, vmem_limit=vmem_limit)
        return x[:, :, :D]

    out = jax.block_until_ready(fwd(u, layer_static))

    # sanity check against a pure-JAX f32 reference of the same math
    ref = u
    for p in layer_params:
        ref = mega_layer_reference(ref, p, cfg, L)
    max_diff = float(jnp.max(jnp.abs(out - ref)))
    assert jnp.all(jnp.isfinite(out)), "non-finite output"
    assert max_diff < 5e-2, f"kernel/reference mismatch: {max_diff}"

    print("KERNEL_OK")
</pallas_src>

<mosaic_0001>
module attributes {stable_mosaic.version = 11 : i64} {
  func.func @mega_layer_kernel(%arg0: i32, %arg1: memref<2x32x128xf32, #tpu.memory_space<vmem>>, %arg2: memref<2x32x128xbf16, #tpu.memory_space<vmem>>, %arg3: memref<1x2176xf32, #tpu.memory_space<vmem>>, %arg4: memref<128x128xbf16, #tpu.memory_space<vmem>>, %arg5: memref<128x512xbf16, #tpu.memory_space<vmem>>, %arg6: memref<128x128xbf16, #tpu.memory_space<vmem>>, %arg7: memref<128x128xbf16, #tpu.memory_space<vmem>>, %arg8: memref<128x128xbf16, #tpu.memory_space<vmem>>, %arg9: memref<2x32x16xbf16, #tpu.memory_space<vmem>>, %arg10: memref<2x32x128xf32, #tpu.memory_space<vmem>>, %arg11: memref<2x32x128xbf16, #tpu.memory_space<vmem>>, %arg12: memref<2x32x128xbf16, #tpu.memory_space<vmem>>, %arg13: memref<2x32x1xf32, #tpu.memory_space<vmem>>, %arg14: memref<2x32x1xf32, #tpu.memory_space<vmem>>, %arg15: memref<2x32x128xf32, #tpu.memory_space<vmem>>) attributes {dimension_semantics = [#tpu.dimension_semantics<parallel>], iteration_bounds = array<i64: 2>, scalar_prefetch = 0 : i64, scratch_operands = 5 : i64, tpu.core_type = #tpu.core_type<tc>, window_params = [{transform_indices = @transform_0, window_bounds = array<i64: 2, 32, 128>}, {transform_indices = @transform_1, window_bounds = array<i64: 2, 32, 128>}, {pipeline_mode = #tpu.pipeline_mode<synchronous>, transform_indices = @transform_2, window_bounds = array<i64: 1, 2176>}, {pipeline_mode = #tpu.pipeline_mode<synchronous>, transform_indices = @transform_3, window_bounds = array<i64: 128, 128>}, {pipeline_mode = #tpu.pipeline_mode<synchronous>, transform_indices = @transform_4, window_bounds = array<i64: 128, 512>}, {pipeline_mode = #tpu.pipeline_mode<synchronous>, transform_indices = @transform_5, window_bounds = array<i64: 128, 128>}, {pipeline_mode = #tpu.pipeline_mode<synchronous>, transform_indices = @transform_6, window_bounds = array<i64: 128, 128>}, {pipeline_mode = #tpu.pipeline_mode<synchronous>, transform_indices = @transform_7, window_bounds = array<i64: 128, 128>}, {pipeline_mode = #tpu.pipeline_mode<synchronous>, transform_indices = @transform_8, window_bounds = array<i64: 2, 32, 16>}, {transform_indices = @transform_9, window_bounds = array<i64: 2, 32, 128>}]} {
    %0 = tpu.iota {dimensions = array<i32: 1>} : vector<64x128xi32>
    %c32_i32 = arith.constant 32 : i32
    %1 = vector.broadcast %c32_i32 : i32 to vector<64x128xi32>
    %2 = arith.cmpi slt, %0, %1 : vector<64x128xi32>
    %c0 = arith.constant 0 : index
    %c0_0 = arith.constant 0 : index
    %c0_1 = arith.constant 0 : index
    %3 = vector.load %arg1[%c0, %c0_0, %c0_1] : memref<2x32x128xf32, #tpu.memory_space<vmem>>, vector<2x32x128xf32>
    %4 = vector.shape_cast %3 : vector<2x32x128xf32> to vector<64x128xf32>
    %5 = arith.truncf %4 : vector<64x128xf32> to vector<64x128xbf16>
    %c0_2 = arith.constant 0 : index
    %c0_3 = arith.constant 0 : index
    %6 = vector.load %arg4[%c0_2, %c0_3] : memref<128x128xbf16, #tpu.memory_space<vmem>>, vector<128x128xbf16>
    %cst = arith.constant dense<0.000000e+00> : vector<64x128xf32>
    %7 = tpu.matmul %5, %6, %cst {dimension_numbers = #tpu.dot_dimension_numbers<[1], [0], [0], [1], [0, 0, 1, 1], [], []>} : vector<64x128xbf16>, vector<128x128xbf16>, vector<64x128xf32> -> vector<64x128xf32>
    %c0_4 = arith.constant 0 : index
    %c128 = arith.constant 128 : index
    %8 = vector.load %arg3[%c0_4, %c128] : memref<1x2176xf32, #tpu.memory_space<vmem>>, vector<1x128xf32>
    %9 = vector.broadcast %8 : vector<1x128xf32> to vector<64x128xf32>
    %10 = arith.addf %7, %9 : vector<64x128xf32>
    %11 = arith.negf %10 : vector<64x128xf32>
    %12 = math.exp %11 : vector<64x128xf32>
    %cst_5 = arith.constant 1.000000e+00 : f32
    %13 = vector.broadcast %cst_5 : f32 to vector<64x128xf32>
    %14 = arith.addf %13, %12 : vector<64x128xf32>
    %15 = arith.divf %13, %14 : vector<64x128xf32>
    %16 = arith.mulf %10, %15 : vector<64x128xf32>
    %c0_6 = arith.constant 0 : index
    %c0_7 = arith.constant 0 : index
    %c0_8 = arith.constant 0 : index
    %17 = vector.load %arg2[%c0_6, %c0_7, %c0_8] : memref<2x32x128xbf16, #tpu.memory_space<vmem>>, vector<2x32x128xbf16>
    %18 = arith.extf %17 : vector<2x32x128xbf16> to vector<2x32x128xf32>
    %19 = vector.shape_cast %18 : vector<2x32x128xf32> to vector<64x128xf32>
    %c0_9 = arith.constant 0 : index
    %c0_10 = arith.constant 0 : index
    %20 = vector.load %arg3[%c0_9, %c0_10] : memref<1x2176xf32, #tpu.memory_space<vmem>>, vector<1x128xf32>
    %21 = vector.broadcast %20 : vector<1x128xf32> to vector<64x128xf32>
    %22 = arith.mulf %4, %21 : vector<64x128xf32>
    %23 = arith.addf %19, %22 : vector<64x128xf32>
    %24 = arith.negf %23 : vector<64x128xf32>
    %25 = math.exp %24 : vector<64x128xf32>
    %cst_11 = arith.constant 1.000000e+00 : f32
    %26 = vector.broadcast %cst_11 : f32 to vector<64x128xf32>
    %27 = arith.addf %26, %25 : vector<64x128xf32>
    %28 = arith.divf %26, %27 : vector<64x128xf32>
    %29 = arith.mulf %23, %28 : vector<64x128xf32>
    %30 = arith.truncf %29 : vector<64x128xf32> to vector<64x128xbf16>
    %c0_12 = arith.constant 0 : index
    %c0_13 = arith.constant 0 : index
    %31 = vector.load %arg5[%c0_12, %c0_13] : memref<128x512xbf16, #tpu.memory_space<vmem>>, vector<128x512xbf16>
    %cst_14 = arith.constant dense<0.000000e+00> : vector<64x512xf32>
    %32 = tpu.matmul %30, %31, %cst_14 {dimension_numbers = #tpu.dot_dimension_numbers<[1], [0], [0], [1], [0, 0, 1, 1], [], []>} : vector<64x128xbf16>, vector<128x512xbf16>, vector<64x512xf32> -> vector<64x512xf32>
    %c0_15 = arith.constant 0 : index
    %c256 = arith.constant 256 : index
    %33 = vector.load %arg3[%c0_15, %c256] : memref<1x2176xf32, #tpu.memory_space<vmem>>, vector<1x512xf32>
    %34 = vector.broadcast %33 : vector<1x512xf32> to vector<64x512xf32>
    %35 = arith.addf %32, %34 : vector<64x512xf32>
    %36 = vector.extract_strided_slice %35 {offsets = [0, 0], sizes = [64, 128], strides = [1, 1]} : vector<64x512xf32> to vector<64x128xf32>
    %37 = arith.negf %36 : vector<64x128xf32>
    %38 = math.exp %37 : vector<64x128xf32>
    %cst_16 = arith.constant 1.000000e+00 : f32
    %39 = vector.broadcast %cst_16 : f32 to vector<64x128xf32>
    %40 = arith.addf %39, %38 : vector<64x128xf32>
    %41 = arith.divf %39, %40 : vector<64x128xf32>
    %42 = vector.extract_strided_slice %35 {offsets = [0, 128], sizes = [64, 128], strides = [1, 1]} : vector<64x512xf32> to vector<64x128xf32>
    %43 = arith.negf %42 : vector<64x128xf32>
    %44 = math.exp %43 : vector<64x128xf32>
    %cst_17 = arith.constant 1.000000e+00 : f32
    %45 = vector.broadcast %cst_17 : f32 to vector<64x128xf32>
    %46 = arith.addf %45, %44 : vector<64x128xf32>
    %47 = arith.divf %45, %46 : vector<64x128xf32>
    %48 = arith.mulf %42, %47 : vector<64x128xf32>
    %49 = vector.extract_strided_slice %35 {offsets = [0, 256], sizes = [64, 128], strides = [1, 1]} : vector<64x512xf32> to vector<64x128xf32>
    %50 = arith.negf %49 : vector<64x128xf32>
    %51 = math.exp %50 : vector<64x128xf32>
    %cst_18 = arith.constant 1.000000e+00 : f32
    %52 = vector.broadcast %cst_18 : f32 to vector<64x128xf32>
    %53 = arith.addf %52, %51 : vector<64x128xf32>
    %54 = arith.divf %52, %53 : vector<64x128xf32>
    %55 = arith.mulf %49, %54 : vector<64x128xf32>
    %56 = vector.extract_strided_slice %35 {offsets = [0, 384], sizes = [64, 128], strides = [1, 1]} : vector<64x512xf32> to vector<64x128xf32>
    %c0_19 = arith.constant 0 : index
    %c896 = arith.constant 896 : index
    %57 = vector.load %arg3[%c0_19, %c896] : memref<1x2176xf32, #tpu.memory_space<vmem>>, vector<1x128xf32>
    %58 = vector.broadcast %57 : vector<1x128xf32> to vector<64x128xf32>
    %59 = arith.mulf %48, %58 : vector<64x128xf32>
    %c0_20 = arith.constant 0 : index
    %c1024 = arith.constant 1024 : index
    %60 = vector.load %arg3[%c0_20, %c1024] : memref<1x2176xf32, #tpu.memory_space<vmem>>, vector<1x128xf32>
    %61 = vector.broadcast %60 : vector<1x128xf32> to vector<64x128xf32>
    %62 = arith.addf %59, %61 : vector<64x128xf32>
    %c0_21 = arith.constant 0 : index
    %c1152 = arith.constant 1152 : index
    %63 = vector.load %arg3[%c0_21, %c1152] : memref<1x2176xf32, #tpu.memory_space<vmem>>, vector<1x128xf32>
    %64 = vector.broadcast %63 : vector<1x128xf32> to vector<64x128xf32>
    %65 = arith.mulf %48, %64 : vector<64x128xf32>
    %c0_22 = arith.constant 0 : index
    %c1280 = arith.constant 1280 : index
    %66 = vector.load %arg3[%c0_22, %c1280] : memref<1x2176xf32, #tpu.memory_space<vmem>>, vector<1x128xf32>
    %67 = vector.broadcast %66 : vector<1x128xf32> to vector<64x128xf32>
    %68 = arith.addf %65, %67 : vector<64x128xf32>
    %69 = vector.shape_cast %62 : vector<64x128xf32> to vector<2x32x128xf32>
    %70 = arith.truncf %69 : vector<2x32x128xf32> to vector<2x32x128xbf16>
    %71 = vector.shape_cast %68 : vector<64x128xf32> to vector<2x32x128xf32>
    %72 = arith.truncf %71 : vector<2x32x128xf32> to vector<2x32x128xbf16>
    %c0_23 = arith.constant 0 : index
    %c0_24 = arith.constant 0 : index
    %c0_25 = arith.constant 0 : index
    %73 = vector.load %arg11[%c0_23, %c0_24, %c0_25] : memref<2x32x128xbf16, #tpu.memory_space<vmem>>, vector<2x32x128xbf16>
    tpu.vector_store %arg11[%c0_23, %c0_24, %c0_25], %72 {strides = array<i32>} : memref<2x32x128xbf16, #tpu.memory_space<vmem>>, vector<2x32x128xbf16>,
    %74 = vector.shape_cast %16 : vector<64x128xf32> to vector<2x32x128xf32>
    %75 = arith.truncf %74 : vector<2x32x128xf32> to vector<2x32x128xbf16>
    %c0_26 = arith.constant 0 : index
    %c0_27 = arith.constant 0 : index
    %c0_28 = arith.constant 0 : index
    %76 = vector.load %arg12[%c0_26, %c0_27, %c0_28] : memref<2x32x128xbf16, #tpu.memory_space<vmem>>, vector<2x32x128xbf16>
    tpu.vector_store %arg12[%c0_26, %c0_27, %c0_28], %75 {strides = array<i32>} : memref<2x32x128xbf16, #tpu.memory_space<vmem>>, vector<2x32x128xbf16>,
    %cst_29 = arith.constant 0xFF800000 : f32
    %77 = vector.broadcast %cst_29 : f32 to vector<2x32x1xf32>
    %c0_30 = arith.constant 0 : index
    %c0_31 = arith.constant 0 : index
    %c0_32 = arith.constant 0 : index
    %78 = vector.load %arg13[%c0_30, %c0_31, %c0_32] : memref<2x32x1xf32, #tpu.memory_space<vmem>>, vector<2x32x1xf32>
    tpu.vector_store %arg13[%c0_30, %c0_31, %c0_32], %77 {strides = array<i32>} : memref<2x32x1xf32, #tpu.memory_space<vmem>>, vector<2x32x1xf32>,
    %cst_33 = arith.constant 0.000000e+00 : f32
    %79 = vector.broadcast %cst_33 : f32 to vector<2x32x1xf32>
    %c0_34 = arith.constant 0 : index
    %c0_35 = arith.constant 0 : index
    %c0_36 = arith.constant 0 : index
    %80 = vector.load %arg14[%c0_34, %c0_35, %c0_36] : memref<2x32x1xf32, #tpu.memory_space<vmem>>, vector<2x32x1xf32>
    tpu.vector_store %arg14[%c0_34, %c0_35, %c0_36], %79 {strides = array<i32>} : memref<2x32x1xf32, #tpu.memory_space<vmem>>, vector<2x32x1xf32>,
    %cst_37 = arith.constant 0.000000e+00 : f32
    %81 = vector.broadcast %cst_37 : f32 to vector<2x32x128xf32>
    %c0_38 = arith.constant 0 : index
    %c0_39 = arith.constant 0 : index
    %c0_40 = arith.constant 0 : index
    %82 = vector.load %arg15[%c0_38, %c0_39, %c0_40] : memref<2x32x128xf32, #tpu.memory_space<vmem>>, vector<2x32x128xf32>
    tpu.vector_store %arg15[%c0_38, %c0_39, %c0_40], %81 {strides = array<i32>} : memref<2x32x128xf32, #tpu.memory_space<vmem>>, vector<2x32x128xf32>,
    %c0_i32 = arith.constant 0 : i32
    %c2_i32 = arith.constant 2 : i32
    %83 = arith.addi %c0_i32, %c2_i32 : i32
    %c1_i32 = arith.constant 1 : i32
    scf.for %arg16 = %c0_i32 to %83 step %c1_i32  : i32 {
      %c16_i32 = arith.constant 16 : i32
      %176 = arith.muli %arg16, %c16_i32 : i32
      %177 = tpu.assume_multiple %176, 16 : i32
      %c0_81 = arith.constant 0 : index
      %178 = arith.index_cast %177 : i32 to index
      %c0_82 = arith.constant 0 : index
      %179 = vector.load %arg11[%c0_81, %178, %c0_82] : memref<2x32x128xbf16, #tpu.memory_space<vmem>>, vector<2x16x128xbf16>
      %c0_83 = arith.constant 0 : index
      %180 = arith.index_cast %177 : i32 to index
      %c0_84 = arith.constant 0 : index
      %181 = vector.load %arg12[%c0_83, %180, %c0_84] : memref<2x32x128xbf16, #tpu.memory_space<vmem>>, vector<2x16x128xbf16>
      %182 = arith.index_cast %arg16 : i32 to index
      %c0_85 = arith.constant 0 : index
      %c0_86 = arith.constant 0 : index
      %183 = vector.load %arg9[%182, %c0_85, %c0_86] : memref<2x32x16xbf16, #tpu.memory_space<vmem>>, vector<1x32x16xbf16>
      "tpu.trace_start"() <{level = 10 : i32, message = "bqz,bkz->bqk"}> : () -> ()
      %cst_87 = arith.constant dense<0.000000e+00> : vector<2x32x16xf32>
      %184 = tpu.matmul %70, %179, %cst_87 {dimension_numbers = #tpu.dot_dimension_numbers<[2], [2], [1], [1], [0, 0, 0, 1, 1, 1], [0], [0]>} : vector<2x32x128xbf16>, vector<2x16x128xbf16>, vector<2x32x16xf32> -> vector<2x32x16xf32>
      "tpu.trace_stop"() : () -> ()
      %185 = arith.extf %183 : vector<1x32x16xbf16> to vector<1x32x16xf32>
      %186 = vector.broadcast %185 : vector<1x32x16xf32> to vector<2x32x16xf32>
      %187 = arith.addf %184, %186 : vector<2x32x16xf32>
      %c0_88 = arith.constant 0 : index
      %c0_89 = arith.constant 0 : index
      %c0_90 = arith.constant 0 : index
      %188 = vector.load %arg13[%c0_88, %c0_89, %c0_90] : memref<2x32x1xf32, #tpu.memory_space<vmem>>, vector<2x32x1xf32>
      %cst_91 = arith.constant dense<0xFF800000> : vector<2x32xf32>
      %189 = vector.multi_reduction <maximumf>, %187, %cst_91 [2] : vector<2x32x16xf32> to vector<2x32xf32>
      %190 = vector.shape_cast %189 : vector<2x32xf32> to vector<2x32x1xf32>
      %191 = arith.maximumf %188, %190 : vector<2x32x1xf32>
      %c0_92 = arith.constant 0 : index
      %c0_93 = arith.constant 0 : index
      %c0_94 = arith.constant 0 : index
      %192 = vector.load %arg13[%c0_92, %c0_93, %c0_94] : memref<2x32x1xf32, #tpu.memory_space<vmem>>, vector<2x32x1xf32>
      %193 = arith.subf %192, %191 : vector<2x32x1xf32>
      %194 = math.exp %193 : vector<2x32x1xf32>
      %195 = vector.broadcast %191 : vector<2x32x1xf32> to vector<2x32x16xf32>
      %196 = arith.subf %187, %195 : vector<2x32x16xf32>
      %197 = math.exp %196 : vector<2x32x16xf32>
      %c0_95 = arith.constant 0 : index
      %c0_96 = arith.constant 0 : index
      %c0_97 = arith.constant 0 : index
      %198 = vector.load %arg14[%c0_95, %c0_96, %c0_97] : memref<2x32x1xf32, #tpu.memory_space<vmem>>, vector<2x32x1xf32>
      %199 = arith.mulf %194, %198 : vector<2x32x1xf32>
      %cst_98 = arith.constant dense<0.000000e+00> : vector<2x32xf32>
      %200 = vector.multi_reduction <add>, %197, %cst_98 [2] : vector<2x32x16xf32> to vector<2x32xf32>
      %201 = vector.shape_cast %200 : vector<2x32xf32> to vector<2x32x1xf32>
      %202 = arith.addf %199, %201 : vector<2x32x1xf32>
      %c0_99 = arith.constant 0 : index
      %c0_100 = arith.constant 0 : index
      %c0_101 = arith.constant 0 : index
      %203 = vector.load %arg14[%c0_99, %c0_100, %c0_101] : memref<2x32x1xf32, #tpu.memory_space<vmem>>, vector<2x32x1xf32>
      tpu.vector_store %arg14[%c0_99, %c0_100, %c0_101], %202 {strides = array<i32>} : memref<2x32x1xf32, #tpu.memory_space<vmem>>, vector<2x32x1xf32>,
      %c0_102 = arith.constant 0 : index
      %c0_103 = arith.constant 0 : index
      %c0_104 = arith.constant 0 : index
      %204 = vector.load %arg15[%c0_102, %c0_103, %c0_104] : memref<2x32x128xf32, #tpu.memory_space<vmem>>, vector<2x32x128xf32>
      %205 = vector.broadcast %194 : vector<2x32x1xf32> to vector<2x32x128xf32>
      %206 = arith.mulf %205, %204 : vector<2x32x128xf32>
      %207 = arith.truncf %197 : vector<2x32x16xf32> to vector<2x32x16xbf16>
      "tpu.trace_start"() <{level = 10 : i32, message = "bqk,bkh->bqh"}> : () -> ()
      %cst_105 = arith.constant dense<0.000000e+00> : vector<2x32x128xf32>
      %208 = tpu.matmul %207, %181, %cst_105 {dimension_numbers = #tpu.dot_dimension_numbers<[2], [1], [1], [2], [0, 0, 0, 1, 1, 2], [0], [0]>} : vector<2x32x16xbf16>, vector<2x16x128xbf16>, vector<2x32x128xf32> -> vector<2x32x128xf32>
      "tpu.trace_stop"() : () -> ()
      %209 = arith.addf %206, %208 : vector<2x32x128xf32>
      %c0_106 = arith.constant 0 : index
      %c0_107 = arith.constant 0 : index
      %c0_108 = arith.constant 0 : index
      %210 = vector.load %arg15[%c0_106, %c0_107, %c0_108] : memref<2x32x128xf32, #tpu.memory_space<vmem>>, vector<2x32x128xf32>
      tpu.vector_store %arg15[%c0_106, %c0_107, %c0_108], %209 {strides = array<i32>} : memref<2x32x128xf32, #tpu.memory_space<vmem>>, vector<2x32x128xf32>,
      %c0_109 = arith.constant 0 : index
      %c0_110 = arith.constant 0 : index
      %c0_111 = arith.constant 0 : index
      %211 = vector.load %arg13[%c0_109, %c0_110, %c0_111] : memref<2x32x1xf32, #tpu.memory_space<vmem>>, vector<2x32x1xf32>
      tpu.vector_store %arg13[%c0_109, %c0_110, %c0_111], %191 {strides = array<i32>} : memref<2x32x1xf32, #tpu.memory_space<vmem>>, vector<2x32x1xf32>,
    }
    %c2_i32_41 = arith.constant 2 : i32
    %c0_42 = arith.constant 0 : index
    %c0_43 = arith.constant 0 : index
    %c0_44 = arith.constant 0 : index
    %84 = vector.load %arg15[%c0_42, %c0_43, %c0_44] : memref<2x32x128xf32, #tpu.memory_space<vmem>>, vector<2x32x128xf32>
    %c0_45 = arith.constant 0 : index
    %c0_46 = arith.constant 0 : index
    %c0_47 = arith.constant 0 : index
    %85 = vector.load %arg14[%c0_45, %c0_46, %c0_47] : memref<2x32x1xf32, #tpu.memory_space<vmem>>, vector<2x32x1xf32>
    %86 = tpu.reciprocal %85 {approx = true} : vector<2x32x1xf32> -> vector<2x32x1xf32>
    %87 = vector.broadcast %86 : vector<2x32x1xf32> to vector<2x32x128xf32>
    %88 = arith.mulf %84, %87 : vector<2x32x128xf32>
    %89 = vector.shape_cast %88 : vector<2x32x128xf32> to vector<64x128xf32>
    %90 = arith.mulf %89, %55 : vector<64x128xf32>
    %91 = arith.truncf %90 : vector<64x128xf32> to vector<64x128xbf16>
    %c0_48 = arith.constant 0 : index
    %c0_49 = arith.constant 0 : index
    %92 = vector.load %arg6[%c0_48, %c0_49] : memref<128x128xbf16, #tpu.memory_space<vmem>>, vector<128x128xbf16>
    %cst_50 = arith.constant dense<0.000000e+00> : vector<64x128xf32>
    %93 = tpu.matmul %91, %92, %cst_50 {dimension_numbers = #tpu.dot_dimension_numbers<[1], [0], [0], [1], [0, 0, 1, 1], [], []>} : vector<64x128xbf16>, vector<128x128xbf16>, vector<64x128xf32> -> vector<64x128xf32>
    %94 = arith.addf %56, %93 : vector<64x128xf32>
    %c0_51 = arith.constant 0 : index
    %c768 = arith.constant 768 : index
    %95 = vector.load %arg3[%c0_51, %c768] : memref<1x2176xf32, #tpu.memory_space<vmem>>, vector<1x128xf32>
    %96 = vector.broadcast %95 : vector<1x128xf32> to vector<64x128xf32>
    %97 = arith.addf %94, %96 : vector<64x128xf32>
    %98 = arith.negf %97 : vector<64x128xf32>
    %99 = math.exp %98 : vector<64x128xf32>
    %cst_52 = arith.constant 1.000000e+00 : f32
    %100 = vector.broadcast %cst_52 : f32 to vector<64x128xf32>
    %101 = arith.addf %100, %99 : vector<64x128xf32>
    %102 = arith.divf %100, %101 : vector<64x128xf32>
    %103 = arith.mulf %97, %102 : vector<64x128xf32>
    %104 = arith.subf %103, %4 : vector<64x128xf32>
    %105 = arith.mulf %41, %104 : vector<64x128xf32>
    %106 = arith.addf %4, %105 : vector<64x128xf32>
    %c0_53 = arith.constant 0 : index
    %c1408 = arith.constant 1408 : index
    %107 = vector.load %arg3[%c0_53, %c1408] : memref<1x2176xf32, #tpu.memory_space<vmem>>, vector<1x128xf32>
    %c0_54 = arith.constant 0 : index
    %c1536 = arith.constant 1536 : index
    %108 = vector.load %arg3[%c0_54, %c1536] : memref<1x2176xf32, #tpu.memory_space<vmem>>, vector<1x128xf32>
    %cst_55 = arith.constant dense<0.000000e+00> : vector<64xf32>
    %109 = vector.multi_reduction <add>, %106, %cst_55 [1] : vector<64x128xf32> to vector<64xf32>
    %110 = vector.shape_cast %109 : vector<64xf32> to vector<64x1xf32>
    %cst_56 = arith.constant 3.125000e-02 : f32
    %111 = vector.broadcast %cst_56 : f32 to vector<64x1xf32>
    %112 = arith.mulf %110, %111 : vector<64x1xf32>
    %113 = vector.broadcast %112 : vector<64x1xf32> to vector<64x128xf32>
    %114 = arith.subf %106, %113 : vector<64x128xf32>
    %cst_57 = arith.constant 0.000000e+00 : f32
    %115 = vector.broadcast %cst_57 : f32 to vector<64x128xf32>
    %116 = arith.select %2, %114, %115 : vector<64x128xi1>, vector<64x128xf32>
    %117 = arith.mulf %116, %116 : vector<64x128xf32>
    %cst_58 = arith.constant dense<0.000000e+00> : vector<64xf32>
    %118 = vector.multi_reduction <add>, %117, %cst_58 [1] : vector<64x128xf32> to vector<64xf32>
    %119 = vector.shape_cast %118 : vector<64xf32> to vector<64x1xf32>
    %cst_59 = arith.constant 3.125000e-02 : f32
    %120 = vector.broadcast %cst_59 : f32 to vector<64x1xf32>
    %121 = arith.mulf %119, %120 : vector<64x1xf32>
    %cst_60 = arith.constant 9.99999974E-6 : f32
    %122 = vector.broadcast %cst_60 : f32 to vector<64x1xf32>
    %123 = arith.addf %121, %122 : vector<64x1xf32>
    %124 = math.rsqrt %123 : vector<64x1xf32>
    %125 = vector.broadcast %124 : vector<64x1xf32> to vector<64x128xf32>
    %126 = arith.mulf %116, %125 : vector<64x128xf32>
    %127 = vector.broadcast %107 : vector<1x128xf32> to vector<64x128xf32>
    %128 = arith.mulf %126, %127 : vector<64x128xf32>
    %129 = vector.broadcast %108 : vector<1x128xf32> to vector<64x128xf32>
    %130 = arith.addf %128, %129 : vector<64x128xf32>
    %131 = arith.truncf %130 : vector<64x128xf32> to vector<64x128xbf16>
    %c0_61 = arith.constant 0 : index
    %c0_62 = arith.constant 0 : index
    %132 = vector.load %arg7[%c0_61, %c0_62] : memref<128x128xbf16, #tpu.memory_space<vmem>>, vector<128x128xbf16>
    %cst_63 = arith.constant dense<0.000000e+00> : vector<64x128xf32>
    %133 = tpu.matmul %131, %132, %cst_63 {dimension_numbers = #tpu.dot_dimension_numbers<[1], [0], [0], [1], [0, 0, 1, 1], [], []>} : vector<64x128xbf16>, vector<128x128xbf16>, vector<64x128xf32> -> vector<64x128xf32>
    %c0_64 = arith.constant 0 : index
    %c1664 = arith.constant 1664 : index
    %134 = vector.load %arg3[%c0_64, %c1664] : memref<1x2176xf32, #tpu.memory_space<vmem>>, vector<1x128xf32>
    %135 = vector.broadcast %134 : vector<1x128xf32> to vector<64x128xf32>
    %136 = arith.addf %133, %135 : vector<64x128xf32>
    %137 = arith.negf %136 : vector<64x128xf32>
    %138 = math.exp %137 : vector<64x128xf32>
    %cst_65 = arith.constant 1.000000e+00 : f32
    %139 = vector.broadcast %cst_65 : f32 to vector<64x128xf32>
    %140 = arith.addf %139, %138 : vector<64x128xf32>
    %141 = arith.divf %139, %140 : vector<64x128xf32>
    %142 = arith.mulf %136, %141 : vector<64x128xf32>
    %143 = arith.truncf %142 : vector<64x128xf32> to vector<64x128xbf16>
    %c0_66 = arith.constant 0 : index
    %c0_67 = arith.constant 0 : index
    %144 = vector.load %arg8[%c0_66, %c0_67] : memref<128x128xbf16, #tpu.memory_space<vmem>>, vector<128x128xbf16>
    %cst_68 = arith.constant dense<0.000000e+00> : vector<64x128xf32>
    %145 = tpu.matmul %143, %144, %cst_68 {dimension_numbers = #tpu.dot_dimension_numbers<[1], [0], [0], [1], [0, 0, 1, 1], [], []>} : vector<64x128xbf16>, vector<128x128xbf16>, vector<64x128xf32> -> vector<64x128xf32>
    %c0_69 = arith.constant 0 : index
    %c1792 = arith.constant 1792 : index
    %146 = vector.load %arg3[%c0_69, %c1792] : memref<1x2176xf32, #tpu.memory_space<vmem>>, vector<1x128xf32>
    %147 = vector.broadcast %146 : vector<1x128xf32> to vector<64x128xf32>
    %148 = arith.addf %145, %147 : vector<64x128xf32>
    %149 = arith.addf %148, %130 : vector<64x128xf32>
    %c0_70 = arith.constant 0 : index
    %c1920 = arith.constant 1920 : index
    %150 = vector.load %arg3[%c0_70, %c1920] : memref<1x2176xf32, #tpu.memory_space<vmem>>, vector<1x128xf32>
    %c0_71 = arith.constant 0 : index
    %c2048 = arith.constant 2048 : index
    %151 = vector.load %arg3[%c0_71, %c2048] : memref<1x2176xf32, #tpu.memory_space<vmem>>, vector<1x128xf32>
    %cst_72 = arith.constant dense<0.000000e+00> : vector<64xf32>
    %152 = vector.multi_reduction <add>, %149, %cst_72 [1] : vector<64x128xf32> to vector<64xf32>
    %153 = vector.shape_cast %152 : vector<64xf32> to vector<64x1xf32>
    %cst_73 = arith.constant 3.125000e-02 : f32
    %154 = vector.broadcast %cst_73 : f32 to vector<64x1xf32>
    %155 = arith.mulf %153, %154 : vector<64x1xf32>
    %156 = vector.broadcast %155 : vector<64x1xf32> to vector<64x128xf32>
    %157 = arith.subf %149, %156 : vector<64x128xf32>
    %cst_74 = arith.constant 0.000000e+00 : f32
    %158 = vector.broadcast %cst_74 : f32 to vector<64x128xf32>
    %159 = arith.select %2, %157, %158 : vector<64x128xi1>, vector<64x128xf32>
    %160 = arith.mulf %159, %159 : vector<64x128xf32>
    %cst_75 = arith.constant dense<0.000000e+00> : vector<64xf32>
    %161 = vector.multi_reduction <add>, %160, %cst_75 [1] : vector<64x128xf32> to vector<64xf32>
    %162 = vector.shape_cast %161 : vector<64xf32> to vector<64x1xf32>
    %cst_76 = arith.constant 3.125000e-02 : f32
    %163 = vector.broadcast %cst_76 : f32 to vector<64x1xf32>
    %164 = arith.mulf %162, %163 : vector<64x1xf32>
    %cst_77 = arith.constant 9.99999974E-6 : f32
    %165 = vector.broadcast %cst_77 : f32 to vector<64x1xf32>
    %166 = arith.addf %164, %165 : vector<64x1xf32>
    %167 = math.rsqrt %166 : vector<64x1xf32>
    %168 = vector.broadcast %167 : vector<64x1xf32> to vector<64x128xf32>
    %169 = arith.mulf %159, %168 : vector<64x128xf32>
    %170 = vector.broadcast %150 : vector<1x128xf32> to vector<64x128xf32>
    %171 = arith.mulf %169, %170 : vector<64x128xf32>
    %172 = vector.broadcast %151 : vector<1x128xf32> to vector<64x128xf32>
    %173 = arith.addf %171, %172 : vector<64x128xf32>
    %174 = vector.shape_cast %173 : vector<64x128xf32> to vector<2x32x128xf32>
    %c0_78 = arith.constant 0 : index
    %c0_79 = arith.constant 0 : index
    %c0_80 = arith.constant 0 : index
    %175 = vector.load %arg10[%c0_78, %c0_79, %c0_80] : memref<2x32x128xf32, #tpu.memory_space<vmem>>, vector<2x32x128xf32>
    tpu.vector_store %arg10[%c0_78, %c0_79, %c0_80], %174 {strides = array<i32>} : memref<2x32x128xf32, #tpu.memory_space<vmem>>, vector<2x32x128xf32>,
    return
  }
  func.func @transform_0(%arg0: i32) -> (i32, i32, i32) {
    %c0_i32 = arith.constant 0 : i32
    %c0_i32_0 = arith.constant 0 : i32
    %c0_i32_1 = arith.constant 0 : i32
    return %arg0, %c0_i32, %c0_i32_0 : i32, i32, i32
  }
  func.func @transform_1(%arg0: i32) -> (i32, i32, i32) {
    %c0_i32 = arith.constant 0 : i32
    %c0_i32_0 = arith.constant 0 : i32
    %c0_i32_1 = arith.constant 0 : i32
    return %arg0, %c0_i32, %c0_i32_0 : i32, i32, i32
  }
  func.func @transform_2(%arg0: i32) -> (i32, i32) {
    %c0_i32 = arith.constant 0 : i32
    %c0_i32_0 = arith.constant 0 : i32
    %c0_i32_1 = arith.constant 0 : i32
    return %c0_i32, %c0_i32_0 : i32, i32
  }
  func.func @transform_3(%arg0: i32) -> (i32, i32) {
    %c0_i32 = arith.constant 0 : i32
    %c0_i32_0 = arith.constant 0 : i32
    %c0_i32_1 = arith.constant 0 : i32
    return %c0_i32, %c0_i32_0 : i32, i32
  }
  func.func @transform_4(%arg0: i32) -> (i32, i32) {
    %c0_i32 = arith.constant 0 : i32
    %c0_i32_0 = arith.constant 0 : i32
    %c0_i32_1 = arith.constant 0 : i32
    return %c0_i32, %c0_i32_0 : i32, i32
  }
  func.func @transform_5(%arg0: i32) -> (i32, i32) {
    %c0_i32 = arith.constant 0 : i32
    %c0_i32_0 = arith.constant 0 : i32
    %c0_i32_1 = arith.constant 0 : i32
    return %c0_i32, %c0_i32_0 : i32, i32
  }
  func.func @transform_6(%arg0: i32) -> (i32, i32) {
    %c0_i32 = arith.constant 0 : i32
    %c0_i32_0 = arith.constant 0 : i32
    %c0_i32_1 = arith.constant 0 : i32
    return %c0_i32, %c0_i32_0 : i32, i32
  }
  func.func @transform_7(%arg0: i32) -> (i32, i32) {
    %c0_i32 = arith.constant 0 : i32
    %c0_i32_0 = arith.constant 0 : i32
    %c0_i32_1 = arith.constant 0 : i32
    return %c0_i32, %c0_i32_0 : i32, i32
  }
  func.func @transform_8(%arg0: i32) -> (i32, i32, i32) {
    %c0_i32 = arith.constant 0 : i32
    %c0_i32_0 = arith.constant 0 : i32
    %c0_i32_1 = arith.constant 0 : i32
    %c0_i32_2 = arith.constant 0 : i32
    return %c0_i32, %c0_i32_0, %c0_i32_1 : i32, i32, i32
  }
  func.func @transform_9(%arg0: i32) -> (i32, i32, i32) {
    %c0_i32 = arith.constant 0 : i32
    %c0_i32_0 = arith.constant 0 : i32
    %c0_i32_1 = arith.constant 0 : i32
    return %arg0, %c0_i32, %c0_i32_0 : i32, i32, i32
  }
}

</mosaic_0001>

<llo_original>
// kernel: custom-call.1
$region0: #{custom-call.1}
  %s0 = inlined_call_operand.hbm [shape: c64[128,33], index: 0, kind: input, shape index: {}]
  %s1 = inlined_call_operand.vmem [shape: f32[128,33], index: 1, kind: output, shape index: {}]
  %s2 = scalar_lea.hbm %s0, 640
  $region1: #{custom-call.1} parent=0
    #allocation0 [shape = 's32[1]{0}', space=sflag, size = 0x4, scoped, tag = 'scoped memory for custom-call.1']
    %3 = vsyncpa [#allocation0], 0
    %s4 = sshll.u32 %s1, 4
    %s5 = int_to_ptr.vmem [resolvable:$true] %s4
    %7 = dma.hbm_to_vmem [thread:$0]  %s2, 640, %s5, [#allocation0]
    %8 = dma.done [#allocation0], 640
    %9 = vsyncpa [#allocation0], 1

// kernel: custom-call
$region0: #{custom-call}
  %s0 = inlined_call_operand.hbm [shape: c64[128,33], index: 0, kind: input, shape index: {}]
  %s1 = inlined_call_operand.vmem [shape: f32[128,33], index: 1, kind: output, shape index: {}]
  $region1: #{custom-call} parent=0
    #allocation0 [shape = 's32[1]{0}', space=sflag, size = 0x4, scoped, tag = 'scoped memory for custom-call']
    %2 = vsyncpa [#allocation0], 0
    %s3 = sshll.u32 %s1, 4
    %s4 = int_to_ptr.vmem [resolvable:$true] %s3
    %6 = dma.hbm_to_vmem [thread:$0]  %s0, 640, %s4, [#allocation0]
    %7 = dma.done [#allocation0], 640
    %8 = vsyncpa [#allocation0], 1

// kernel: reverse.5
$region0: #{reverse.5}
  %s0 = inlined_call_operand.vmem [shape: f32[4,128,31], index: 0, kind: input, shape index: {}]
  %s1 = inlined_call_operand.vmem [shape: f32[4,128,31], index: 1, kind: output, shape index: {}]
  $region1: #{reverse.5} parent=0
    #allocation0 [shape = 'u8[81920]{0}', space=vmem, size = 0x14000, scoped, tag = 'operand span for operand 0']
    #allocation1 [shape = 'u8[65536]{0}', space=vmem, size = 0x10000, scoped, tag = 'operand span for operand 1']
    %s2 = scalar_lea.vmem [#allocation0], 8
    // Predicated region
    $region2: #{reverse.5} parent=1 // pred_check
      _
    $region3: #{reverse.5} parent=1 // pred_check_branch
      %4 = sbr.rel (0) target = $region5
    $region4: #{reverse.5} parent=1 // pred_region
      // Predicated region
      $region6: #{reverse.5} parent=4 // pred_check
        _
      $region7: #{reverse.5} parent=4 // pred_check_branch
        %6 = sbr.rel (0) target = $region9
      $region8: #{reverse.5} parent=4 // pred_region
        // Predicated region
        $region21: #{reverse.5} parent=8 // pred_check
          _
        $region22: #{reverse.5} parent=8 // pred_check_branch
          %51 = sbr.rel (0) target = $region24
        $region23: #{reverse.5} parent=8 // pred_region
          loop: start=0, step=1, limit=1
          $region25: #{reverse.5} parent=23 // loop_pre_header
            _
          $region26: #{reverse.5} parent=23 // loop_header
            %s53 = sphi 0, %s57
            %p54 = scmp.ge.s32.totalorder %s53, 1
            %s58 = sphi %s0, %s0
            %s59 = sphi %s2, %s2
          $region27: #{reverse.5} parent=23 // loop_header_branch
            %56 = sbr.rel (%p54) target = $region31
          $region28: #{reverse.5} parent=23 // loop_body
            %v60 = vld [vmem:[%s58] sm:$0xff]
            %61 = vst [vmem:[%s59] sm:$0xff] %v60
            %v62 = vld [vmem:[%s58 + $0x8] sm:$0xff]
            %63 = vst [vmem:[%s59 + $0x8] sm:$0xff] %v62
            %v64 = vld [vmem:[%s58 + $0x10] sm:$0xff]
            %65 = vst [vmem:[%s59 + $0x10] sm:$0xff] %v64
            %v66 = vld [vmem:[%s58 + $0x18] sm:$0xff]
            %67 = vst [vmem:[%s59 + $0x18] sm:$0xff] %v66
            %v68 = vld [vmem:[%s58 + $0x20] sm:$0xff]
            %69 = vst [vmem:[%s59 + $0x28] sm:$0xff] %v68
            %v70 = vld [vmem:[%s58 + $0x28] sm:$0xff]
            %71 = vst [vmem:[%s59 + $0x30] sm:$0xff] %v70
            %v72 = vld [vmem:[%s58 + $0x30] sm:$0xff]
            %73 = vst [vmem:[%s59 + $0x38] sm:$0xff] %v72
            %v74 = vld [vmem:[%s58 + $0x38] sm:$0xff]
            %75 = vst [vmem:[%s59 + $0x40] sm:$0xff] %v74
            %v76 = vld [vmem:[%s58 + $0x40] sm:$0xff]
            %77 = vst [vmem:[%s59 + $0x50] sm:$0xff] %v76
            %v78 = vld [vmem:[%s58 + $0x48] sm:$0xff]
            %79 = vst [vmem:[%s59 + $0x58] sm:$0xff] %v78
            %v80 = vld [vmem:[%s58 + $0x50] sm:$0xff]
            %81 = vst [vmem:[%s59 + $0x60] sm:$0xff] %v80
            %v82 = vld [vmem:[%s58 + $0x58] sm:$0xff]
            %83 = vst [vmem:[%s59 + $0x68] sm:$0xff] %v82
            %v84 = vld [vmem:[%s58 + $0x60] sm:$0xff]
            %85 = vst [vmem:[%s59 + $0x78] sm:$0xff] %v84
            %v86 = vld [vmem:[%s58 + $0x68] sm:$0xff]
            %87 = vst [vmem:[%s59 + $0x80] sm:$0xff] %v86
            %v88 = vld [vmem:[%s58 + $0x70] sm:$0xff]
            %89 = vst [vmem:[%s59 + $0x88] sm:$0xff] %v88
            %v90 = vld [vmem:[%s58 + $0x78] sm:$0xff]
            %91 = vst [vmem:[%s59 + $0x90] sm:$0xff] %v90
          $region29: #{reverse.5} parent=23 // loop_footer
            %s57 = sadd.s32 1, %s53
          $region30: #{reverse.5} parent=23 // loop_footer_branch
            %52 = sbr.rel target = $region26
          $region31: #{reverse.5} parent=23 // loop_exit
            _
        $region24: #{reverse.5} parent=8 // pred_fallthru
          _
        // Predicated region
        $region32: #{reverse.5} parent=8 // pred_check
          _
        $region33: #{reverse.5} parent=8 // pred_check_branch
          %93 = sbr.rel target = $region35
        $region34: #{reverse.5} parent=8 // pred_region
          _
        $region35: #{reverse.5} parent=8 // pred_fallthru
          _
      $region9: #{reverse.5} parent=4 // pred_fallthru
        _
      // Predicated region
      $region10: #{reverse.5} parent=4 // pred_check
        _
      $region11: #{reverse.5} parent=4 // pred_check_branch
        %8 = sbr.rel target = $region13
      $region12: #{reverse.5} parent=4 // pred_region
        loop: start=0, step=1, limit=1
        $region14: #{reverse.5} parent=12 // loop_pre_header
          _
        $region15: #{reverse.5} parent=12 // loop_header
          %s11 = sphi 0, %s15
          %p12 = scmp.ge.s32.totalorder %s11, 1
          %s16 = sphi %s0, %s0
          %s17 = sphi %s2, %s2
        $region16: #{reverse.5} parent=12 // loop_header_branch
          %14 = sbr.rel (%p12) target = $region20
        $region17: #{reverse.5} parent=12 // loop_body
          %v18 = vld [vmem:[%s16] sm:$0xff]
          %19 = vst [vmem:[%s17] sm:$0xff] %v18
          %v20 = vld [vmem:[%s16 + $0x8] sm:$0xff]
          %21 = vst [vmem:[%s17 + $0x8] sm:$0xff] %v20
          %v22 = vld [vmem:[%s16 + $0x10] sm:$0xff]
          %23 = vst [vmem:[%s17 + $0x10] sm:$0xff] %v22
          %v24 = vld [vmem:[%s16 + $0x18] sm:$0xff]
          %25 = vst [vmem:[%s17 + $0x18] sm:$0xff] %v24
          %v26 = vld [vmem:[%s16 + $0x20] sm:$0xff]
          %27 = vst [vmem:[%s17 + $0x28] sm:$0xff] %v26
          %v28 = vld [vmem:[%s16 + $0x28] sm:$0xff]
          %29 = vst [vmem:[%s17 + $0x30] sm:$0xff] %v28
          %v30 = vld [vmem:[%s16 + $0x30] sm:$0xff]
          %31 = vst [vmem:[%s17 + $0x38] sm:$0xff] %v30
          %v32 = vld [vmem:[%s16 + $0x38] sm:$0xff]
          %33 = vst [vmem:[%s17 + $0x40] sm:$0xff] %v32
          %v34 = vld [vmem:[%s16 + $0x40] sm:$0xff]
          %35 = vst [vmem:[%s17 + $0x50] sm:$0xff] %v34
          %v36 = vld [vmem:[%s16 + $0x48] sm:$0xff]
          %37 = vst [vmem:[%s17 + $0x58] sm:$0xff] %v36
          %v38 = vld [vmem:[%s16 + $0x50] sm:$0xff]
          %39 = vst [vmem:[%s17 + $0x60] sm:$0xff] %v38
          %v40 = vld [vmem:[%s16 + $0x58] sm:$0xff]
          %41 = vst [vmem:[%s17 + $0x68] sm:$0xff] %v40
          %v42 = vld [vmem:[%s16 + $0x60] sm:$0xff]
          %43 = vst [vmem:[%s17 + $0x78] sm:$0xff] %v42
          %v44 = vld [vmem:[%s16 + $0x68] sm:$0xff]
          %45 = vst [vmem:[%s17 + $0x80] sm:$0xff] %v44
          %v46 = vld [vmem:[%s16 + $0x70] sm:$0xff]
          %47 = vst [vmem:[%s17 + $0x88] sm:$0xff] %v46
          %v48 = vld [vmem:[%s16 + $0x78] sm:$0xff]
          %49 = vst [vmem:[%s17 + $0x90] sm:$0xff] %v48
        $region18: #{reverse.5} parent=12 // loop_footer
          %s15 = sadd.s32 1, %s11
        $region19: #{reverse.5} parent=12 // loop_footer_branch
          %10 = sbr.rel target = $region15
        $region20: #{reverse.5} parent=12 // loop_exit
          _
      $region13: #{reverse.5} parent=4 // pred_fallthru
        _
    $region5: #{reverse.5} parent=1 // pred_fallthru
      _
    %94 = vnop
    %s95 = scalar_lea.vmem [#allocation0], 24
    %s96 = scalar_lea.vmem %s95, 7 [#allocation0]
    %v97 = vld [vmem:[%s96] ss:$-1 sm:$0xff]
    %v98 = vrot.slane %v97, 1
    %99 = vst [vmem:[#allocation1] sm:$0xff] %v98
    %s100 = scalar_lea.vmem [#allocation0], 32
    %s101 = scalar_lea.vmem %s100, 7 [#allocation0]
    %v102 = vld [vmem:[%s101] ss:$-1 sm:$0xff]
    %v103 = vrot.slane %v102, 1
    %v104 = vlaneseq
    %v105 = vshrl.u32 %v104, 7
    %vm106 = vcmp.lt.s32.totalorder %v105, 7
    %107 = vst.msk [vmem:[#allocation1] sm:$0xff] %vm106, %v103
    %s108 = scalar_lea.vmem [#allocation1], 8
    %s109 = scalar_lea.vmem [#allocation0], 16
    %s110 = scalar_lea.vmem %s109, 7 [#allocation0]
    %v111 = vld [vmem:[%s110] ss:$-1 sm:$0xff]
    %v112 = vrot.slane %v111, 1
    %113 = vst [vmem:[%s108] sm:$0xff] %v112
    %s114 = scalar_lea.vmem [#allocation0], 24
    %s115 = scalar_lea.vmem %s114, 7 [#allocation0]
    %v116 = vld [vmem:[%s115] ss:$-1 sm:$0xff]
    %v117 = vrot.slane %v116, 1
    %v118 = vlaneseq
    %v119 = vshrl.u32 %v118, 7
    %vm120 = vcmp.lt.s32.totalorder %v119, 7
    %121 = vst.msk [vmem:[%s108] sm:$0xff] %vm120, %v117
    %s122 = scalar_lea.vmem [#allocation1], 16
    %s123 = scalar_lea.vmem [#allocation0], 8
    %s124 = scalar_lea.vmem %s123, 7 [#allocation0]
    %v125 = vld [vmem:[%s124] ss:$-1 sm:$0xff]
    %v126 = vrot.slane %v125, 1
    %127 = vst [vmem:[%s122] sm:$0xff] %v126
    %s128 = scalar_lea.vmem [#allocation0], 16
    %s129 = scalar_lea.vmem %s128, 7 [#allocation0]
    %v130 = vld [vmem:[%s129] ss:$-1 sm:$0xff]
    %v131 = vrot.slane %v130, 1
    %v132 = vlaneseq
    %v133 = vshrl.u32 %v132, 7
    %vm134 = vcmp.lt.s32.totalorder %v133, 7
    %135 = vst.msk [vmem:[%s122] sm:$0xff] %vm134, %v131
    %s136 = scalar_lea.vmem [#allocation1], 24
    %s137 = scalar_lea.vmem [#allocation0], 7
    %v138 = vld [vmem:[%s137] ss:$-1 sm:$0xff]
    %v139 = vrot.slane %v138, 1
    %140 = vst [vmem:[%s136] sm:$0xff] %v139
    %s141 = scalar_lea.vmem [#allocation0], 8
    %s142 = scalar_lea.vmem %s141, 7 [#allocation0]
    %v143 = vld [vmem:[%s142] ss:$-1 sm:$0xff]
    %v144 = vrot.slane %v143, 1
    %v145 = vlaneseq
    %v146 = vshrl.u32 %v145, 7
    %vm147 = vcmp.lt.s32.totalorder %v146, 7
    %148 = vst.msk [vmem:[%s136] sm:$0xff] %vm147, %v144
    %s149 = scalar_lea.vmem [#allocation1], 32
    %s150 = scalar_lea.vmem [#allocation0], 40
    %s151 = scalar_lea.vmem %s150, 24 [#allocation0]
    %s152 = scalar_lea.vmem %s151, 7 [#allocation0]
    %v153 = vld [vmem:[%s152] ss:$-1 sm:$0xff]
    %v154 = vrot.slane %v153, 1
    %155 = vst [vmem:[%s149] sm:$0xff] %v154
    %s156 = scalar_lea.vmem %s150, 32 [#allocation0]
    %s157 = scalar_lea.vmem %s156, 7 [#allocation0]
    %v158 = vld [vmem:[%s157] ss:$-1 sm:$0xff]
    %v159 = vrot.slane %v158, 1
    %v160 = vlaneseq
    %v161 = vshrl.u32 %v160, 7
    %vm162 = vcmp.lt.s32.totalorder %v161, 7
    %163 = vst.msk [vmem:[%s149] sm:$0xff] %vm162, %v159
    %s164 = scalar_lea.vmem %s149, 8 [#allocation1]
    %s165 = scalar_lea.vmem %s150, 16 [#allocation0]
    %s166 = scalar_lea.vmem %s165, 7 [#allocation0]
    %v167 = vld [vmem:[%s166] ss:$-1 sm:$0xff]
    %v168 = vrot.slane %v167, 1
    %169 = vst [vmem:[%s164] sm:$0xff] %v168
    %s170 = scalar_lea.vmem %s150, 24 [#allocation0]
    %s171 = scalar_lea.vmem %s170, 7 [#allocation0]
    %v172 = vld [vmem:[%s171] ss:$-1 sm:$0xff]
    %v173 = vrot.slane %v172, 1
    %v174 = vlaneseq
    %v175 = vshrl.u32 %v174, 7
    %vm176 = vcmp.lt.s32.totalorder %v175, 7
    %177 = vst.msk [vmem:[%s164] sm:$0xff] %vm176, %v173
    %s178 = scalar_lea.vmem %s149, 16 [#allocation1]
    %s179 = scalar_lea.vmem %s150, 8 [#allocation0]
    %s180 = scalar_lea.vmem %s179, 7 [#allocation0]
    %v181 = vld [vmem:[%s180] ss:$-1 sm:$0xff]
    %v182 = vrot.slane %v181, 1
    %183 = vst [vmem:[%s178] sm:$0xff] %v182
    %s184 = scalar_lea.vmem %s150, 16 [#allocation0]
    %s185 = scalar_lea.vmem %s184, 7 [#allocation0]
    %v186 = vld [vmem:[%s185] ss:$-1 sm:$0xff]
    %v187 = vrot.slane %v186, 1
    %v188 = vlaneseq
    %v189 = vshrl.u32 %v188, 7
    %vm190 = vcmp.lt.s32.totalorder %v189, 7
    %191 = vst.msk [vmem:[%s178] sm:$0xff] %vm190, %v187
    %s192 = scalar_lea.vmem %s149, 24 [#allocation1]
    %s193 = scalar_lea.vmem %s150, 7 [#allocation0]
    %v194 = vld [vmem:[%s193] ss:$-1 sm:$0xff]
    %v195 = vrot.slane %v194, 1
    %196 = vst [vmem:[%s192] sm:$0xff] %v195
    %s197 = scalar_lea.vmem %s150, 8 [#allocation0]
    %s198 = scalar_lea.vmem %s197, 7 [#allocation0]
    %v199 = vld [vmem:[%s198] ss:$-1 sm:$0xff]
    %v200 = vrot.slane %v199, 1
    %v201 = vlaneseq
    %v202 = vshrl.u32 %v201, 7
    %vm203 = vcmp.lt.s32.totalorder %v202, 7
    %204 = vst.msk [vmem:[%s192] sm:$0xff] %vm203, %v200
    %s205 = scalar_lea.vmem [#allocation1], 64
    %s206 = scalar_lea.vmem [#allocation0], 80
    %s207 = scalar_lea.vmem %s206, 24 [#allocation0]
    %s208 = scalar_lea.vmem %s207, 7 [#allocation0]
    %v209 = vld [vmem:[%s208] ss:$-1 sm:$0xff]
    %v210 = vrot.slane %v209, 1
    %211 = vst [vmem:[%s205] sm:$0xff] %v210
    %s212 = scalar_lea.vmem %s206, 32 [#allocation0]
    %s213 = scalar_lea.vmem %s212, 7 [#allocation0]
    %v214 = vld [vmem:[%s213] ss:$-1 sm:$0xff]
    %v215 = vrot.slane %v214, 1
    %v216 = vlaneseq
    %v217 = vshrl.u32 %v216, 7
    %vm218 = vcmp.lt.s32.totalorder %v217, 7
    %219 = vst.msk [vmem:[%s205] sm:$0xff] %vm218, %v215
    %s220 = scalar_lea.vmem %s205, 8 [#allocation1]
    %s221 = scalar_lea.vmem %s206, 16 [#allocation0]
    %s222 = scalar_lea.vmem %s221, 7 [#allocation0]
    %v223 = vld [vmem:[%s222] ss:$-1 sm:$0xff]
    %v224 = vrot.slane %v223, 1
    %225 = vst [vmem:[%s220] sm:$0xff] %v224
    %s226 = scalar_lea.vmem %s206, 24 [#allocation0]
    %s227 = scalar_lea.vmem %s226, 7 [#allocation0]
    %v228 = vld [vmem:[%s227] ss:$-1 sm:$0xff]
    %v229 = vrot.slane %v228, 1
    %v230 = vlaneseq
    %v231 = vshrl.u32 %v230, 7
    %vm232 = vcmp.lt.s32.totalorder %v231, 7
    %233 = vst.msk [vmem:[%s220] sm:$0xff] %vm232, %v229
    %s234 = scalar_lea.vmem %s205, 16 [#allocation1]
    %s235 = scalar_lea.vmem %s206, 8 [#allocation0]
    %s236 = scalar_lea.vmem %s235, 7 [#allocation0]
    %v237 = vld [vmem:[%s236] ss:$-1 sm:$0xff]
    %v238 = vrot.slane %v237, 1
    %239 = vst [vmem:[%s234] sm:$0xff] %v238
    %s240 = scalar_lea.vmem %s206, 16 [#allocation0]
    %s241 = scalar_lea.vmem %s240, 7 [#allocation0]
    %v242 = vld [vmem:[%s241] ss:$-1 sm:$0xff]
    %v243 = vrot.slane %v242, 1
    %v244 = vlaneseq
    %v245 = vshrl.u32 %v244, 7
    %vm246 = vcmp.lt.s32.totalorder %v245, 7
    %247 = vst.msk [vmem:[%s234] sm:$0xff] %vm246, %v243
    %s248 = scalar_lea.vmem %s205, 24 [#allocation1]
    %s249 = scalar_lea.vmem %s206, 7 [#allocation0]
    %v250 = vld [vmem:[%s249] ss:$-1 sm:$0xff]
    %v251 = vrot.slane %v250, 1
    %252 = vst [vmem:[%s248] sm:$0xff] %v251
    %s253 = scalar_lea.vmem %s206, 8 [#allocation0]
    %s254 = scalar_lea.vmem %s253, 7 [#allocation0]
    %v255 = vld [vmem:[%s254] ss:$-1 sm:$0xff]
    %v256 = vrot.slane %v255, 1
    %v257 = vlaneseq
    %v258 = vshrl.u32 %v257, 7
    %vm259 = vcmp.lt.s32.totalorder %v258, 7
    %260 = vst.msk [vmem:[%s248] sm:$0xff] %vm259, %v256
    %s261 = scalar_lea.vmem [#allocation1], 96
    %s262 = scalar_lea.vmem [#allocation0], 120
    %s263 = scalar_lea.vmem %s262, 24 [#allocation0]
    %s264 = scalar_lea.vmem %s263, 7 [#allocation0]
    %v265 = vld [vmem:[%s264] ss:$-1 sm:$0xff]
    %v266 = vrot.slane %v265, 1
    %267 = vst [vmem:[%s261] sm:$0xff] %v266
    %s268 = scalar_lea.vmem %s262, 32 [#allocation0]
    %s269 = scalar_lea.vmem %s268, 7 [#allocation0]
    %v270 = vld [vmem:[%s269] ss:$-1 sm:$0xff]
    %v271 = vrot.slane %v270, 1
    %v272 = vlaneseq
    %v273 = vshrl.u32 %v272, 7
    %vm274 = vcmp.lt.s32.totalorder %v273, 7
    %275 = vst.msk [vmem:[%s261] sm:$0xff] %vm274, %v271
    %s276 = scalar_lea.vmem %s261, 8 [#allocation1]
    %s277 = scalar_lea.vmem %s262, 16 [#allocation0]
    %s278 = scalar_lea.vmem %s277, 7 [#allocation0]
    %v279 = vld [vmem:[%s278] ss:$-1 sm:$0xff]
    %v280 = vrot.slane %v279, 1
    %281 = vst [vmem:[%s276] sm:$0xff] %v280
    %s282 = scalar_lea.vmem %s262, 24 [#allocation0]
    %s283 = scalar_lea.vmem %s282, 7 [#allocation0]
    %v284 = vld [vmem:[%s283] ss:$-1 sm:$0xff]
    %v285 = vrot.slane %v284, 1
    %v286 = vlaneseq
    %v287 = vshrl.u32 %v286, 7
    %vm288 = vcmp.lt.s32.totalorder %v287, 7
    %289 = vst.msk [vmem:[%s276] sm:$0xff] %vm288, %v285
    %s290 = scalar_lea.vmem %s261, 16 [#allocation1]
    %s291 = scalar_lea.vmem %s262, 8 [#allocation0]
    %s292 = scalar_lea.vmem %s291, 7 [#allocation0]
    %v293 = vld [vmem:[%s292] ss:$-1 sm:$0xff]
    %v294 = vrot.slane %v293, 1
    %295 = vst [vmem:[%s290] sm:$0xff] %v294
    %s296 = scalar_lea.vmem %s262, 16 [#allocation0]
    %s297 = scalar_lea.vmem %s296, 7 [#allocation0]
    %v298 = vld [vmem:[%s297] ss:$-1 sm:$0xff]
    %v299 = vrot.slane %v298, 1
    %v300 = vlaneseq
    %v301 = vshrl.u32 %v300, 7
    %vm302 = vcmp.lt.s32.totalorder %v301, 7
    %303 = vst.msk [vmem:[%s290] sm:$0xff] %vm302, %v299
    %s304 = scalar_lea.vmem %s261, 24 [#allocation1]
    %s305 = scalar_lea.vmem %s262, 7 [#allocation0]
    %v306 = vld [vmem:[%s305] ss:$-1 sm:$0xff]
    %v307 = vrot.slane %v306, 1
    %308 = vst [vmem:[%s304] sm:$0xff] %v307
    %s309 = scalar_lea.vmem %s262, 8 [#allocation0]
    %s310 = scalar_lea.vmem %s309, 7 [#allocation0]
    %v311 = vld [vmem:[%s310] ss:$-1 sm:$0xff]
    %v312 = vrot.slane %v311, 1
    %v313 = vlaneseq
    %v314 = vshrl.u32 %v313, 7
    %vm315 = vcmp.lt.s32.totalorder %v314, 7
    %316 = vst.msk [vmem:[%s304] sm:$0xff] %vm315, %v312
    // Predicated region
    $region36: #{reverse.5} parent=1 // pred_check
      _
    $region37: #{reverse.5} parent=1 // pred_check_branch
      %318 = sbr.rel (0) target = $region39
    $region38: #{reverse.5} parent=1 // pred_region
      // Predicated region
      $region40: #{reverse.5} parent=38 // pred_check
        _
      $region41: #{reverse.5} parent=38 // pred_check_branch
        %320 = sbr.rel (0) target = $region43
      $region42: #{reverse.5} parent=38 // pred_region
        // Predicated region
        $region55: #{reverse.5} parent=42 // pred_check
          _
        $region56: #{reverse.5} parent=42 // pred_check_branch
          %365 = sbr.rel (0) target = $region58
        $region57: #{reverse.5} parent=42 // pred_region
          loop: start=0, step=1, limit=1
          $region59: #{reverse.5} parent=57 // loop_pre_header
            _
          $region60: #{reverse.5} parent=57 // loop_header
            %s367 = sphi 0, %s371
            %p368 = scmp.ge.s32.totalorder %s367, 1
            %s372 = sphi [#allocation1], [#allocation1]
            %s373 = sphi %s1, %s1
          $region61: #{reverse.5} parent=57 // loop_header_branch
            %370 = sbr.rel (%p368) target = $region65
          $region62: #{reverse.5} parent=57 // loop_body
            %v374 = vld [vmem:[%s372] sm:$0xff]
            %375 = vst [vmem:[%s373] sm:$0xff] %v374
            %v376 = vld [vmem:[%s372 + $0x8] sm:$0xff]
            %377 = vst [vmem:[%s373 + $0x8] sm:$0xff] %v376
            %v378 = vld [vmem:[%s372 + $0x10] sm:$0xff]
            %379 = vst [vmem:[%s373 + $0x10] sm:$0xff] %v378
            %v380 = vld [vmem:[%s372 + $0x18] sm:$0xff]
            %381 = vst [vmem:[%s373 + $0x18] sm:$0xff] %v380
            %v382 = vld [vmem:[%s372 + $0x20] sm:$0xff]
            %383 = vst [vmem:[%s373 + $0x20] sm:$0xff] %v382
            %v384 = vld [vmem:[%s372 + $0x28] sm:$0xff]
            %385 = vst [vmem:[%s373 + $0x28] sm:$0xff] %v384
            %v386 = vld [vmem:[%s372 + $0x30] sm:$0xff]
            %387 = vst [vmem:[%s373 + $0x30] sm:$0xff] %v386
            %v388 = vld [vmem:[%s372 + $0x38] sm:$0xff]
            %389 = vst [vmem:[%s373 + $0x38] sm:$0xff] %v388
            %v390 = vld [vmem:[%s372 + $0x40] sm:$0xff]
            %391 = vst [vmem:[%s373 + $0x40] sm:$0xff] %v390
            %v392 = vld [vmem:[%s372 + $0x48] sm:$0xff]
            %393 = vst [vmem:[%s373 + $0x48] sm:$0xff] %v392
            %v394 = vld [vmem:[%s372 + $0x50] sm:$0xff]
            %395 = vst [vmem:[%s373 + $0x50] sm:$0xff] %v394
            %v396 = vld [vmem:[%s372 + $0x58] sm:$0xff]
            %397 = vst [vmem:[%s373 + $0x58] sm:$0xff] %v396
            %v398 = vld [vmem:[%s372 + $0x60] sm:$0xff]
            %399 = vst [vmem:[%s373 + $0x60] sm:$0xff] %v398
            %v400 = vld [vmem:[%s372 + $0x68] sm:$0xff]
            %401 = vst [vmem:[%s373 + $0x68] sm:$0xff] %v400
            %v402 = vld [vmem:[%s372 + $0x70] sm:$0xff]
            %403 = vst [vmem:[%s373 + $0x70] sm:$0xff] %v402
            %v404 = vld [vmem:[%s372 + $0x78] sm:$0xff]
            %405 = vst [vmem:[%s373 + $0x78] sm:$0xff] %v404
          $region63: #{reverse.5} parent=57 // loop_footer
            %s371 = sadd.s32 1, %s367
          $region64: #{reverse.5} parent=57 // loop_footer_branch
            %366 = sbr.rel target = $region60
          $region65: #{reverse.5} parent=57 // loop_exit
            _
        $region58: #{reverse.5} parent=42 // pred_fallthru
          _
        // Predicated region
        $region66: #{reverse.5} parent=42 // pred_check
          _
        $region67: #{reverse.5} parent=42 // pred_check_branch
          %407 = sbr.rel target = $region69
        $region68: #{reverse.5} parent=42 // pred_region
          _
        $region69: #{reverse.5} parent=42 // pred_fallthru
          _
      $region43: #{reverse.5} parent=38 // pred_fallthru
        _
      // Predicated region
      $region44: #{reverse.5} parent=38 // pred_check
        _
      $region45: #{reverse.5} parent=38 // pred_check_branch
        %322 = sbr.rel target = $region47
      $region46: #{reverse.5} parent=38 // pred_region
        loop: start=0, step=1, limit=1
        $region48: #{reverse.5} parent=46 // loop_pre_header
          _
        $region49: #{reverse.5} parent=46 // loop_header
          %s325 = sphi 0, %s329
          %p326 = scmp.ge.s32.totalorder %s325, 1
          %s330 = sphi [#allocation1], [#allocation1]
          %s331 = sphi %s1, %s1
        $region50: #{reverse.5} parent=46 // loop_header_branch
          %328 = sbr.rel (%p326) target = $region54
        $region51: #{reverse.5} parent=46 // loop_body
          %v332 = vld [vmem:[%s330] sm:$0xff]
          %333 = vst [vmem:[%s331] sm:$0xff] %v332
          %v334 = vld [vmem:[%s330 + $0x8] sm:$0xff]
          %335 = vst [vmem:[%s331 + $0x8] sm:$0xff] %v334
          %v336 = vld [vmem:[%s330 + $0x10] sm:$0xff]
          %337 = vst [vmem:[%s331 + $0x10] sm:$0xff] %v336
          %v338 = vld [vmem:[%s330 + $0x18] sm:$0xff]
          %339 = vst [vmem:[%s331 + $0x18] sm:$0xff] %v338
          %v340 = vld [vmem:[%s330 + $0x20] sm:$0xff]
          %341 = vst [vmem:[%s331 + $0x20] sm:$0xff] %v340
          %v342 = vld [vmem:[%s330 + $0x28] sm:$0xff]
          %343 = vst [vmem:[%s331 + $0x28] sm:$0xff] %v342
          %v344 = vld [vmem:[%s330 + $0x30] sm:$0xff]
          %345 = vst [vmem:[%s331 + $0x30] sm:$0xff] %v344
          %v346 = vld [vmem:[%s330 + $0x38] sm:$0xff]
          %347 = vst [vmem:[%s331 + $0x38] sm:$0xff] %v346
          %v348 = vld [vmem:[%s330 + $0x40] sm:$0xff]
          %349 = vst [vmem:[%s331 + $0x40] sm:$0xff] %v348
          %v350 = vld [vmem:[%s330 + $0x48] sm:$0xff]
          %351 = vst [vmem:[%s331 + $0x48] sm:$0xff] %v350
          %v352 = vld [vmem:[%s330 + $0x50] sm:$0xff]
          %353 = vst [vmem:[%s331 + $0x50] sm:$0xff] %v352
          %v354 = vld [vmem:[%s330 + $0x58] sm:$0xff]
          %355 = vst [vmem:[%s331 + $0x58] sm:$0xff] %v354
          %v356 = vld [vmem:[%s330 + $0x60] sm:$0xff]
          %357 = vst [vmem:[%s331 + $0x60] sm:$0xff] %v356
          %v358 = vld [vmem:[%s330 + $0x68] sm:$0xff]
          %359 = vst [vmem:[%s331 + $0x68] sm:$0xff] %v358
          %v360 = vld [vmem:[%s330 + $0x70] sm:$0xff]
          %361 = vst [vmem:[%s331 + $0x70] sm:$0xff] %v360
          %v362 = vld [vmem:[%s330 + $0x78] sm:$0xff]
          %363 = vst [vmem:[%s331 + $0x78] sm:$0xff] %v362
        $region52: #{reverse.5} parent=46 // loop_footer
          %s329 = sadd.s32 1, %s325
        $region53: #{reverse.5} parent=46 // loop_footer_branch
          %324 = sbr.rel target = $region49
        $region54: #{reverse.5} parent=46 // loop_exit
          _
      $region47: #{reverse.5} parent=38 // pred_fallthru
        _
    $region39: #{reverse.5} parent=1 // pred_fallthru
      _
    %408 = vnop

// kernel: fwd.2
$region0: #{fwd.2}
  #allocation0 [shape = 'u32[]', space=smem, size = 0x4, offset = 0x4, fixed_abs, tag = 'smem constant byte address 0x4 - core index']
  #allocation1 [shape = 'u32[144,128]{1,0:T(1,128)}', space=vmem, size = 0x12000, scoped, tag = 'internal scratch']
  #allocation2 [shape = 'bf16[2,32,128]{2,1,0:T(16,128)(2,1)}', space=vmem, size = 0x4000, scoped, tag = 'scratch operand']
  #allocation3 [shape = 'bf16[2,32,128]{2,1,0:T(16,128)(2,1)}', space=vmem, size = 0x4000, scoped, tag = 'scratch operand']
  #allocation4 [shape = 'f32[2,32,1]{2,1,0:T(8,128)}', space=vmem, size = 0x8000, scoped, tag = 'scratch operand']
  #allocation5 [shape = 'f32[2,32,1]{2,1,0:T(8,128)}', space=vmem, size = 0x8000, scoped, tag = 'scratch operand']
  #allocation6 [shape = 'f32[2,32,128]{2,1,0:T(8,128)}', space=vmem, size = 0x8000, scoped, tag = 'scratch operand']
  %s0 = inlined_call_operand.hbm [shape: f32[4,32,128], index: 0, kind: input, shape index: {}]
  %s1 = inlined_call_operand.hbm [shape: bf16[4,32,128], index: 1, kind: input, shape index: {}]
  %s2 = inlined_call_operand.hbm [shape: f32[1,2176], index: 2, kind: input, shape index: {}]
  %s3 = inlined_call_operand.hbm [shape: bf16[128,128], index: 3, kind: input, shape index: {}]
  %s4 = inlined_call_operand.hbm [shape: bf16[128,512], index: 4, kind: input, shape index: {}]
  %s5 = inlined_call_operand.hbm [shape: bf16[128,128], index: 5, kind: input, shape index: {}]
  %s6 = inlined_call_operand.hbm [shape: bf16[128,128], index: 6, kind: input, shape index: {}]
  %s7 = inlined_call_operand.hbm [shape: bf16[128,128], index: 7, kind: input, shape index: {}]
  %s8 = inlined_call_operand.hbm [shape: bf16[2,32,16], index: 8, kind: input, shape index: {}]
  %s9 = inlined_call_operand.hbm [shape: f32[4,32,128], index: 9, kind: output, shape index: {}]
  %s10 = sld [smem:[#allocation0]]
  $region112: #{fwd.2} parent=0
    _
  %s12 = ssub.s32 1, %s10
  %s13 = scalar_select 0, %s12, %s10
  $region1: #{fwd.2} parent=0
    #allocation7 [shape = 'u8[65536]{0}', space=vmem, size = 0x10000, scoped, tag = 'input window, operand 0']
    #allocation8 [shape = 's32[2]{0}', space=sflag, size = 0x8, scoped, tag = 'scoped memory for fwd.2']
    #allocation9 [shape = 's32[2]{0}', space=sflag, size = 0x8, scoped, tag = 'scoped memory for fwd.2']
    #allocation10 [shape = 'u8[32768]{0}', space=vmem, size = 0x8000, scoped, tag = 'input window, operand 1']
    #allocation11 [shape = 's32[2]{0}', space=sflag, size = 0x8, scoped, tag = 'scoped memory for fwd.2']
    #allocation12 [shape = 'u8[8704]{0}', space=vmem, size = 0x2400, scoped, tag = 'input window, operand 2, single buffered']
    #allocation13 [shape = 'u8[32768]{0}', space=vmem, size = 0x8000, scoped, tag = 'input window, operand 3, single buffered']
    #allocation14 [shape = 's32[1]{0}', space=sflag, size = 0x4, scoped, tag = 'scoped memory for fwd.2']
    #allocation15 [shape = 'u8[131072]{0}', space=vmem, size = 0x20000, scoped, tag = 'input window, operand 4, single buffered']
    #allocation16 [shape = 'u8[32768]{0}', space=vmem, size = 0x8000, scoped, tag = 'input window, operand 5, single buffered']
    #allocation17 [shape = 's32[1]{0}', space=sflag, size = 0x4, scoped, tag = 'scoped memory for fwd.2']
    #allocation18 [shape = 'u8[32768]{0}', space=vmem, size = 0x8000, scoped, tag = 'input window, operand 6, single buffered']
    #allocation19 [shape = 'u8[32768]{0}', space=vmem, size = 0x8000, scoped, tag = 'input window, operand 7, single buffered']
    #allocation20 [shape = 's32[1]{0}', space=sflag, size = 0x4, scoped, tag = 'scoped memory for fwd.2']
    #allocation21 [shape = 'u8[16384]{0}', space=vmem, size = 0x4000, scoped, tag = 'input window, operand 8, single buffered']
    #allocation22 [shape = 'u8[65536]{0}', space=vmem, size = 0x10000, scoped, tag = 'output window, operand 0']
    %14 = vsyncpa [#allocation8], 0
    %s15 = scalar_lea.sflag [#allocation8], 1
    %16 = vsyncpa %s15, 0
    %17 = vsyncpa [#allocation11], 0
    %s18 = scalar_lea.sflag [#allocation11], 1
    %19 = vsyncpa %s18, 0
    %20 = vsyncpa [#allocation14], 0
    %21 = vsyncpa [#allocation17], 0
    %22 = vsyncpa [#allocation20], 0
    %23 = vsyncpa [#allocation9], 0
    %s24 = scalar_lea.sflag [#allocation9], 1
    %25 = vsyncpa %s24, 0
    loop: start=0, step=1, limit=4
    $region2: #{fwd.2} parent=1 // loop_pre_header
      _
    $region3: #{fwd.2} parent=1 // loop_header
      %s27 = sphi 0, %s31
      %p28 = scmp.ge.s32.totalorder %s27, 4
      %s37 = sphi 0, %s39
      %s40 = sphi 0, %s37
      %s41 = sphi 0, %s40
      %s57 = sphi 0, %s41
      %s63 = sphi 0, %s65
      %s66 = sphi 0, %s63
      %s67 = sphi 0, %s66
      %s83 = sphi 0, %s67
      %s87 = sphi 0, %s87
      %s89 = sphi 0, %s87
      %s90 = sphi 0, %s89
      %s104 = sphi 0, %s90
      %s108 = sphi 0, %s108
      %s110 = sphi 0, %s108
      %s111 = sphi 0, %s110
      %s125 = sphi 0, %s111
      %s129 = sphi 0, %s129
      %s131 = sphi 0, %s129
      %s132 = sphi 0, %s131
      %s146 = sphi 0, %s132
      %s150 = sphi 0, %s150
      %s152 = sphi 0, %s150
      %s153 = sphi 0, %s152
      %s167 = sphi 0, %s153
      %s171 = sphi 0, %s171
      %s173 = sphi 0, %s171
      %s174 = sphi 0, %s173
      %s188 = sphi 0, %s174
      %s192 = sphi 0, %s192
      %s194 = sphi 0, %s192
      %s195 = sphi 0, %s194
      %s209 = sphi 0, %s195
      %s213 = sphi 0, %s213
      %s215 = sphi 0, %s213
      %s216 = sphi 0, %s215
      %s230 = sphi 0, %s216
      %s236 = sphi 0, %s238
      %s239 = sphi 0, %s236
      %s240 = sphi 0, %s239
      %s256 = sphi 0, %s240
    $region4: #{fwd.2} parent=1 // loop_header_branch
      %30 = sbr.rel (%p28) target = $region8
    $region5: #{fwd.2} parent=1 // loop_body
      %s32 = ssub.s32 %s27, 1
      %s33 = ssub.s32 %s27, 2
      %s34 = sadd.s32 %s27, 1
      %s35 = ssub.s32 %s27, %s34
      %p36 = scmp.eq.s32.totalorder %s35, 0
      %s38 = sadd.s32 %s37, 1
      %s39 = scalar_select %p36, %s37, %s38
      %p42 = pneg %p36
      %p43 = scmp.eq.s32.totalorder %s27, 1
      %p44 = por %p42, %p43
      %p45 = scmp.ne.s32.totalorder %s37, %s40
      %p46 = scmp.eq.s32.totalorder %s27, 0
      %p47 = por %p45, %p46
      %p48 = scmp.ne.s32.totalorder %s37, %s40
      %p49 = scmp.eq.s32.totalorder %s32, 1
      %p50 = por %p48, %p49
      %p51 = scmp.ne.s32.totalorder %s40, %s41
      %p52 = scmp.eq.s32.totalorder %s32, 0
      %p53 = por %p51, %p52
      %p54 = scmp.ne.s32.totalorder %s40, %s41
      %p55 = scmp.eq.s32.totalorder %s33, 1
      %p56 = por %p54, %p55
      %p58 = scmp.ne.s32.totalorder %s41, %s57
      %p59 = scmp.eq.s32.totalorder %s33, 0
      %p60 = por %p58, %p59
      %s61 = ssub.s32 %s27, %s34
      %p62 = scmp.eq.s32.totalorder %s61, 0
      %s64 = sadd.s32 %s63, 1
      %s65 = scalar_select %p62, %s63, %s64
      %p68 = pneg %p62
      %p69 = scmp.eq.s32.totalorder %s27, 1
      %p70 = por %p68, %p69
      %p71 = scmp.ne.s32.totalorder %s63, %s66
      %p72 = scmp.eq.s32.totalorder %s27, 0
      %p73 = por %p71, %p72
      %p74 = scmp.ne.s32.totalorder %s63, %s66
      %p75 = scmp.eq.s32.totalorder %s32, 1
      %p76 = por %p74, %p75
      %p77 = scmp.ne.s32.totalorder %s66, %s67
      %p78 = scmp.eq.s32.totalorder %s32, 0
      %p79 = por %p77, %p78
      %p80 = scmp.ne.s32.totalorder %s66, %s67
      %p81 = scmp.eq.s32.totalorder %s33, 1
      %p82 = por %p80, %p81
      %p84 = scmp.ne.s32.totalorder %s67, %s83
      %p85 = scmp.eq.s32.totalorder %s33, 0
      %p86 = por %p84, %p85
      %s88 = sadd.s32 %s87, 1
      %p91 = scmp.eq.s32.totalorder %s27, 1
      %p92 = scmp.ne.s32.totalorder %s87, %s89
      %p93 = scmp.eq.s32.totalorder %s27, 0
      %p94 = por %p92, %p93
      %p95 = scmp.ne.s32.totalorder %s87, %s89
      %p96 = scmp.eq.s32.totalorder %s32, 1
      %p97 = por %p95, %p96
      %p98 = scmp.ne.s32.totalorder %s89, %s90
      %p99 = scmp.eq.s32.totalorder %s32, 0
      %p100 = por %p98, %p99
      %p101 = scmp.ne.s32.totalorder %s89, %s90
      %p102 = scmp.eq.s32.totalorder %s33, 1
      %p103 = por %p101, %p102
      %p105 = scmp.ne.s32.totalorder %s90, %s104
      %p106 = scmp.eq.s32.totalorder %s33, 0
      %p107 = por %p105, %p106
      %s109 = sadd.s32 %s108, 1
      %p112 = scmp.eq.s32.totalorder %s27, 1
      %p113 = scmp.ne.s32.totalorder %s108, %s110
      %p114 = scmp.eq.s32.totalorder %s27, 0
      %p115 = por %p113, %p114
      %p116 = scmp.ne.s32.totalorder %s108, %s110
      %p117 = scmp.eq.s32.totalorder %s32, 1
      %p118 = por %p116, %p117
      %p119 = scmp.ne.s32.totalorder %s110, %s111
      %p120 = scmp.eq.s32.totalorder %s32, 0
      %p121 = por %p119, %p120
      %p122 = scmp.ne.s32.totalorder %s110, %s111
      %p123 = scmp.eq.s32.totalorder %s33, 1
      %p124 = por %p122, %p123
      %p126 = scmp.ne.s32.totalorder %s111, %s125
      %p127 = scmp.eq.s32.totalorder %s33, 0
      %p128 = por %p126, %p127
      %s130 = sadd.s32 %s129, 1
      %p133 = scmp.eq.s32.totalorder %s27, 1
      %p134 = scmp.ne.s32.totalorder %s129, %s131
      %p135 = scmp.eq.s32.totalorder %s27, 0
      %p136 = por %p134, %p135
      %p137 = scmp.ne.s32.totalorder %s129, %s131
      %p138 = scmp.eq.s32.totalorder %s32, 1
      %p139 = por %p137, %p138
      %p140 = scmp.ne.s32.totalorder %s131, %s132
      %p141 = scmp.eq.s32.totalorder %s32, 0
      %p142 = por %p140, %p141
      %p143 = scmp.ne.s32.totalorder %s131, %s132
      %p144 = scmp.eq.s32.totalorder %s33, 1
      %p145 = por %p143, %p144
      %p147 = scmp.ne.s32.totalorder %s132, %s146
      %p148 = scmp.eq.s32.totalorder %s33, 0
      %p149 = por %p147, %p148
      %s151 = sadd.s32 %s150, 1
      %p154 = scmp.eq.s32.totalorder %s27, 1
      %p155 = scmp.ne.s32.totalorder %s150, %s152
      %p156 = scmp.eq.s32.totalorder %s27, 0
      %p157 = por %p155, %p156
      %p158 = scmp.ne.s32.totalorder %s150, %s152
      %p159 = scmp.eq.s32.totalorder %s32, 1
      %p160 = por %p158, %p159
      %p161 = scmp.ne.s32.totalorder %s152, %s153
      %p162 = scmp.eq.s32.totalorder %s32, 0
      %p163 = por %p161, %p162
      %p164 = scmp.ne.s32.totalorder %s152, %s153
      %p165 = scmp.eq.s32.totalorder %s33, 1
      %p166 = por %p164, %p165
      %p168 = scmp.ne.s32.totalorder %s153, %s167
      %p169 = scmp.eq.s32.totalorder %s33, 0
      %p170 = por %p168, %p169
      %s172 = sadd.s32 %s171, 1
      %p175 = scmp.eq.s32.totalorder %s27, 1
      %p176 = scmp.ne.s32.totalorder %s171, %s173
      %p177 = scmp.eq.s32.totalorder %s27, 0
      %p178 = por %p176, %p177
      %p179 = scmp.ne.s32.totalorder %s171, %s173
      %p180 = scmp.eq.s32.totalorder %s32, 1
      %p181 = por %p179, %p180
      %p182 = scmp.ne.s32.totalorder %s173, %s174
      %p183 = scmp.eq.s32.totalorder %s32, 0
      %p184 = por %p182, %p183
      %p185 = scmp.ne.s32.totalorder %s173, %s174
      %p186 = scmp.eq.s32.totalorder %s33, 1
      %p187 = por %p185, %p186
      %p189 = scmp.ne.s32.totalorder %s174, %s188
      %p190 = scmp.eq.s32.totalorder %s33, 0
      %p191 = por %p189, %p190
      %s193 = sadd.s32 %s192, 1
      %p196 = scmp.eq.s32.totalorder %s27, 1
      %p197 = scmp.ne.s32.totalorder %s192, %s194
      %p198 = scmp.eq.s32.totalorder %s27, 0
      %p199 = por %p197, %p198
      %p200 = scmp.ne.s32.totalorder %s192, %s194
      %p201 = scmp.eq.s32.totalorder %s32, 1
      %p202 = por %p200, %p201
      %p203 = scmp.ne.s32.totalorder %s194, %s195
      %p204 = scmp.eq.s32.totalorder %s32, 0
      %p205 = por %p203, %p204
      %p206 = scmp.ne.s32.totalorder %s194, %s195
      %p207 = scmp.eq.s32.totalorder %s33, 1
      %p208 = por %p206, %p207
      %p210 = scmp.ne.s32.totalorder %s195, %s209
      %p211 = scmp.eq.s32.totalorder %s33, 0
      %p212 = por %p210, %p211
      %s214 = sadd.s32 %s213, 1
      %p217 = scmp.eq.s32.totalorder %s27, 1
      %p218 = scmp.ne.s32.totalorder %s213, %s215
      %p219 = scmp.eq.s32.totalorder %s27, 0
      %p220 = por %p218, %p219
      %p221 = scmp.ne.s32.totalorder %s213, %s215
      %p222 = scmp.eq.s32.totalorder %s32, 1
      %p223 = por %p221, %p222
      %p224 = scmp.ne.s32.totalorder %s215, %s216
      %p225 = scmp.eq.s32.totalorder %s32, 0
      %p226 = por %p224, %p225
      %p227 = scmp.ne.s32.totalorder %s215, %s216
      %p228 = scmp.eq.s32.totalorder %s33, 1
      %p229 = por %p227, %p228
      %p231 = scmp.ne.s32.totalorder %s216, %s230
      %p232 = scmp.eq.s32.totalorder %s33, 0
      %p233 = por %p231, %p232
      %s234 = ssub.s32 %s27, %s34
      %p235 = scmp.eq.s32.totalorder %s234, 0
      %s237 = sadd.s32 %s236, 1
      %s238 = scalar_select %p235, %s236, %s237
      %p241 = pneg %p235
      %p242 = scmp.eq.s32.totalorder %s27, 1
      %p243 = por %p241, %p242
      %p244 = scmp.ne.s32.totalorder %s236, %s239
      %p245 = scmp.eq.s32.totalorder %s27, 0
      %p246 = por %p244, %p245
      %p247 = scmp.ne.s32.totalorder %s236, %s239
      %p248 = scmp.eq.s32.totalorder %s32, 1
      %p249 = por %p247, %p248
      %p250 = scmp.ne.s32.totalorder %s239, %s240
      %p251 = scmp.eq.s32.totalorder %s32, 0
      %p252 = por %p250, %p251
      %p253 = scmp.ne.s32.totalorder %s239, %s240
      %p254 = scmp.eq.s32.totalorder %s33, 1
      %p255 = por %p253, %p254
      %p257 = scmp.ne.s32.totalorder %s240, %s256
      %p258 = scmp.eq.s32.totalorder %s33, 0
      %p259 = por %p257, %p258
      %p260 = scmp.le.s32.totalorder 1, %s27
      %p261 = scmp.lt.s32.totalorder %s27, 3
      %p262 = pnand %p260, %p261
      %p263 = pneg %p262
      // Predicated region
      $region9: #{fwd.2} parent=5 // pred_check
        _
      $region10: #{fwd.2} parent=5 // pred_check_branch
        %265 = sbr.rel (%p262) target = $region12
      $region11: #{fwd.2} parent=5 // pred_region
        %s266 = ssub.s32 %s27, 1
        // Predicated region
        $region13: #{fwd.2} parent=11 // pred_check
          %p267 = pneg %p100
        $region14: #{fwd.2} parent=11 // pred_check_branch
          %269 = sbr.rel (%p267) target = $region16
        $region15: #{fwd.2} parent=11 // pred_region
          %s271 = ssub.s32 272, 272
          %272 = vsyncadd [#allocation11], %s271
          %s274 = sshll.u32 [#allocation12], 4
          %s275 = int_to_ptr.vmem [resolvable:$true] %s274
          %277 = dma.hbm_to_vmem [thread:$0]  %s2, 272, %s275, [#allocation11]
        $region16: #{fwd.2} parent=11 // pred_fallthru
          _
        // Predicated region
        $region17: #{fwd.2} parent=11 // pred_check
          %p278 = pneg %p121
        $region18: #{fwd.2} parent=11 // pred_check_branch
          %280 = sbr.rel (%p278) target = $region20
        $region19: #{fwd.2} parent=11 // pred_region
          %s282 = ssub.s32 1024, 1024
          %283 = vsyncadd [#allocation14], %s282
          %s284 = sshll.u32 [#allocation13], 4
          %s285 = int_to_ptr.vmem [resolvable:$true] %s284
          %290 = dma.hbm_to_vmem [thread:$0]  %s3, 1024, %s285, [#allocation14], 64, 64, 4
        $region20: #{fwd.2} parent=11 // pred_fallthru
          _
        // Predicated region
        $region21: #{fwd.2} parent=11 // pred_check
          %p291 = pneg %p142
        $region22: #{fwd.2} parent=11 // pred_check_branch
          %293 = sbr.rel (%p291) target = $region24
        $region23: #{fwd.2} parent=11 // pred_region
          %s295 = ssub.s32 4096, 4096
          %296 = vsyncadd [#allocation14], %s295
          %s297 = sshll.u32 [#allocation15], 4
          %s298 = int_to_ptr.vmem [resolvable:$true] %s297
          %303 = dma.hbm_to_vmem [thread:$0]  %s4, 4096, %s298, [#allocation14], 256, 256, 16
        $region24: #{fwd.2} parent=11 // pred_fallthru
          _
        // Predicated region
        $region25: #{fwd.2} parent=11 // pred_check
          %p304 = pneg %p163
        $region26: #{fwd.2} parent=11 // pred_check_branch
          %306 = sbr.rel (%p304) target = $region28
        $region27: #{fwd.2} parent=11 // pred_region
          %s308 = ssub.s32 1024, 1024
          %309 = vsyncadd [#allocation17], %s308
          %s310 = sshll.u32 [#allocation16], 4
          %s311 = int_to_ptr.vmem [resolvable:$true] %s310
          %316 = dma.hbm_to_vmem [thread:$0]  %s5, 1024, %s311, [#allocation17], 64, 64, 4
        $region28: #{fwd.2} parent=11 // pred_fallthru
          _
        // Predicated region
        $region29: #{fwd.2} parent=11 // pred_check
          %p317 = pneg %p184
        $region30: #{fwd.2} parent=11 // pred_check_branch
          %319 = sbr.rel (%p317) target = $region32
        $region31: #{fwd.2} parent=11 // pred_region
          %s321 = ssub.s32 1024, 1024
          %322 = vsyncadd [#allocation17], %s321
          %s323 = sshll.u32 [#allocation18], 4
          %s324 = int_to_ptr.vmem [resolvable:$true] %s323
          %329 = dma.hbm_to_vmem [thread:$0]  %s6, 1024, %s324, [#allocation17], 64, 64, 4
        $region32: #{fwd.2} parent=11 // pred_fallthru
          _
        // Predicated region
        $region33: #{fwd.2} parent=11 // pred_check
          %p330 = pneg %p205
        $region34: #{fwd.2} parent=11 // pred_check_branch
          %332 = sbr.rel (%p330) target = $region36
        $region35: #{fwd.2} parent=11 // pred_region
          %s334 = ssub.s32 1024, 1024
          %335 = vsyncadd [#allocation20], %s334
          %s336 = sshll.u32 [#allocation19], 4
          %s337 = int_to_ptr.vmem [resolvable:$true] %s336
          %342 = dma.hbm_to_vmem [thread:$0]  %s7, 1024, %s337, [#allocation20], 64, 64, 4
        $region36: #{fwd.2} parent=11 // pred_fallthru
          _
        // Predicated region
        $region37: #{fwd.2} parent=11 // pred_check
          %p343 = pneg %p226
        $region38: #{fwd.2} parent=11 // pred_check_branch
          %345 = sbr.rel (%p343) target = $region40
        $region39: #{fwd.2} parent=11 // pred_region
          %s347 = ssub.s32 512, 512
          %348 = vsyncadd [#allocation20], %s347
          %s349 = sshll.u32 [#allocation21], 4
          %s350 = int_to_ptr.vmem [resolvable:$true] %s349
          %355 = dma.hbm_to_vmem [thread:$0]  %s8, 512, %s350, [#allocation20], 64, 64, 4
        $region40: #{fwd.2} parent=11 // pred_fallthru
          _
      $region12: #{fwd.2} parent=5 // pred_fallthru
        _
      %p356 = scmp.lt.s32.totalorder %s27, 2
      // Predicated region
      $region41: #{fwd.2} parent=5 // pred_check
        %p357 = pneg %p356
      $region42: #{fwd.2} parent=5 // pred_check_branch
        %359 = sbr.rel (%p357) target = $region44
      $region43: #{fwd.2} parent=5 // pred_region
        // Predicated region
        $region45: #{fwd.2} parent=43 // pred_check
          %p360 = pneg %p47
        $region46: #{fwd.2} parent=43 // pred_check_branch
          %362 = sbr.rel (%p360) target = $region48
        $region47: #{fwd.2} parent=43 // pred_region
          %s363 = sand.u32 %s37, 1
          %s364 = scalar_lea.sflag [#allocation8], %s363
          %s365 = sand.u32 %s37, 1
          %s366 = smul.addr %s365, 64
          %s367 = scalar_lea.vmem [#allocation7], %s366
          %s368 = smul.u32 2, %s27
          %s370 = ssub.s32 1024, 1024
          %371 = vsyncadd %s364, %s370
          %s372 = smul.addr %s368, 4
          %s373 = smul.addr %s372, 128
          %s374 = scalar_lea.hbm %s0, %s373
          %s375 = sshll.u32 %s367, 4
          %s376 = int_to_ptr.vmem [resolvable:$true] %s375
          %381 = dma.hbm_to_vmem [thread:$0]  %s374, 1024, %s376, %s364, 128, 128, 8
        $region48: #{fwd.2} parent=43 // pred_fallthru
          _
        // Predicated region
        $region49: #{fwd.2} parent=43 // pred_check
          %p382 = pneg %p73
        $region50: #{fwd.2} parent=43 // pred_check_branch
          %384 = sbr.rel (%p382) target = $region52
        $region51: #{fwd.2} parent=43 // pred_region
          %s385 = sand.u32 %s27, 1
          %s386 = scalar_lea.sflag [#allocation11], %s385
          %s387 = sand.u32 %s63, 1
          %s388 = smul.addr %s387, 32
          %s389 = scalar_lea.vmem [#allocation10], %s388
          %s390 = smul.u32 2, %s27
          %s392 = ssub.s32 512, 512
          %393 = vsyncadd %s386, %s392
          %s394 = smul.addr %s390, 4
          %s395 = smul.addr %s394, 64
          %s396 = scalar_lea.hbm %s1, %s395
          %s397 = sshll.u32 %s389, 4
          %s398 = int_to_ptr.vmem [resolvable:$true] %s397
          %403 = dma.hbm_to_vmem [thread:$0]  %s396, 512, %s398, %s386, 64, 64, 4
        $region52: #{fwd.2} parent=43 // pred_fallthru
          _
      $region44: #{fwd.2} parent=5 // pred_fallthru
        _
      %p404 = scmp.le.s32.totalorder 1, %s27
      %p405 = scmp.lt.s32.totalorder %s27, 3
      %p406 = pnand %p404, %p405
      %p407 = pneg %p406
      // Predicated region
      $region53: #{fwd.2} parent=5 // pred_check
        _
      $region54: #{fwd.2} parent=5 // pred_check_branch
        %409 = sbr.rel (%p406) target = $region56
      $region55: #{fwd.2} parent=5 // pred_region
        %s410 = ssub.s32 %s27, 1
        %s411 = sand.u32 %s40, 1
        %s412 = scalar_lea.sflag [#allocation8], %s411
        %s413 = sand.u32 %s40, 1
        %s414 = smul.addr %s413, 64
        %s415 = scalar_lea.vmem [#allocation7], %s414
        // Predicated region
        $region57: #{fwd.2} parent=55 // pred_check
          %p416 = pneg %p53
        $region58: #{fwd.2} parent=55 // pred_check_branch
          %418 = sbr.rel (%p416) target = $region60
        $region59: #{fwd.2} parent=55 // pred_region
          %419 = dma.done %s412, 1024
        $region60: #{fwd.2} parent=55 // pred_fallthru
          _
        %s420 = sand.u32 %s32, 1
        %s421 = scalar_lea.sflag [#allocation11], %s420
        %s422 = sand.u32 %s66, 1
        %s423 = smul.addr %s422, 32
        %s424 = scalar_lea.vmem [#allocation10], %s423
        // Predicated region
        $region61: #{fwd.2} parent=55 // pred_check
          %p425 = pneg %p79
        $region62: #{fwd.2} parent=55 // pred_check_branch
          %427 = sbr.rel (%p425) target = $region64
        $region63: #{fwd.2} parent=55 // pred_region
          %428 = dma.done %s421, 512
        $region64: #{fwd.2} parent=55 // pred_fallthru
          _
        // Predicated region
        $region65: #{fwd.2} parent=55 // pred_check
          %p429 = pneg %p100
        $region66: #{fwd.2} parent=55 // pred_check_branch
          %431 = sbr.rel (%p429) target = $region68
        $region67: #{fwd.2} parent=55 // pred_region
          %432 = dma.done [#allocation11], 272
        $region68: #{fwd.2} parent=55 // pred_fallthru
          _
        // Predicated region
        $region69: #{fwd.2} parent=55 // pred_check
          %p433 = pneg %p121
        $region70: #{fwd.2} parent=55 // pred_check_branch
          %435 = sbr.rel (%p433) target = $region72
        $region71: #{fwd.2} parent=55 // pred_region
          %436 = dma.done [#allocation14], 1024
        $region72: #{fwd.2} parent=55 // pred_fallthru
          _
        // Predicated region
        $region73: #{fwd.2} parent=55 // pred_check
          %p437 = pneg %p142
        $region74: #{fwd.2} parent=55 // pred_check_branch
          %439 = sbr.rel (%p437) target = $region76
        $region75: #{fwd.2} parent=55 // pred_region
          %440 = dma.done [#allocation14], 4096
        $region76: #{fwd.2} parent=55 // pred_fallthru
          _
        // Predicated region
        $region77: #{fwd.2} parent=55 // pred_check
          %p441 = pneg %p163
        $region78: #{fwd.2} parent=55 // pred_check_branch
          %443 = sbr.rel (%p441) target = $region80
        $region79: #{fwd.2} parent=55 // pred_region
          %444 = dma.done [#allocation17], 1024
        $region80: #{fwd.2} parent=55 // pred_fallthru
          _
        // Predicated region
        $region81: #{fwd.2} parent=55 // pred_check
          %p445 = pneg %p184
        $region82: #{fwd.2} parent=55 // pred_check_branch
          %447 = sbr.rel (%p445) target = $region84
        $region83: #{fwd.2} parent=55 // pred_region
          %448 = dma.done [#allocation17], 1024
        $region84: #{fwd.2} parent=55 // pred_fallthru
          _
        // Predicated region
        $region85: #{fwd.2} parent=55 // pred_check
          %p449 = pneg %p205
        $region86: #{fwd.2} parent=55 // pred_check_branch
          %451 = sbr.rel (%p449) target = $region88
        $region87: #{fwd.2} parent=55 // pred_region
          %452 = dma.done [#allocation20], 1024
        $region88: #{fwd.2} parent=55 // pred_fallthru
          _
        // Predicated region
        $region89: #{fwd.2} parent=55 // pred_check
          %p453 = pneg %p226
        $region90: #{fwd.2} parent=55 // pred_check_branch
          %455 = sbr.rel (%p453) target = $region92
        $region91: #{fwd.2} parent=55 // pred_region
          %456 = dma.done [#allocation20], 512
        $region92: #{fwd.2} parent=55 // pred_fallthru
          _
        %s457 = sand.u32 %s40, 1
        %s458 = scalar_lea.sflag [#allocation8], %s457
        %s459 = sand.u32 %s40, 1
        %s460 = smul.addr %s459, 64
        %s461 = scalar_lea.vmem [#allocation7], %s460
        %p462 = pneg %p53
        %p463 = pneg %p50
        %s464 = sand.u32 %s32, 1
        %s465 = scalar_lea.sflag [#allocation11], %s464
        %s466 = sand.u32 %s66, 1
        %s467 = smul.addr %s466, 32
        %s468 = scalar_lea.vmem [#allocation10], %s467
        %p469 = pneg %p79
        %p470 = pneg %p76
        %p471 = pneg %p100
        %p472 = pneg %p97
        %p473 = pneg %p121
        %p474 = pneg %p118
        %p475 = pneg %p142
        %p476 = pneg %p139
        %p477 = pneg %p163
        %p478 = pneg %p160
        %p479 = pneg %p184
        %p480 = pneg %p181
        %p481 = pneg %p205
        %p482 = pneg %p202
        %p483 = pneg %p226
        %p484 = pneg %p223
        %p485 = pneg %p252
        %p486 = pneg %p249
        %s487 = sand.u32 %s239, 1
        %s488 = scalar_lea.sflag [#allocation9], %s487
        %s489 = sand.u32 %s239, 1
        %s490 = smul.addr %s489, 64
        %s491 = scalar_lea.vmem [#allocation22], %s490
        %s492 = smul.u32 2, %s32
        %s493 = smul.u32 2, %s32
        %s494 = smul.u32 2, %s32
        %v496 = vlaneseq
        %v497 = vand.u32 %v496, 127
        %vm498 = vcmp.lt.s32.totalorder %v497, 32
        %v499 = vld [vmem:[%s415] sm:$0xff]
        %v500 = vld [vmem:[%s415 + $0x8] sm:$0xff]
        %v501 = vld [vmem:[%s415 + $0x10] sm:$0xff]
        %v502 = vld [vmem:[%s415 + $0x18] sm:$0xff]
        %v503 = vld [vmem:[%s415 + $0x20] sm:$0xff]
        %v504 = vld [vmem:[%s415 + $0x28] sm:$0xff]
        %v505 = vld [vmem:[%s415 + $0x30] sm:$0xff]
        %v506 = vld [vmem:[%s415 + $0x38] sm:$0xff]
        %v507 = vpack.c.bf16 %v500, %v499
        %v508 = vpack.c.bf16 %v502, %v501
        %v509 = vpack.c.bf16 %v504, %v503
        %v510 = vpack.c.bf16 %v506, %v505
        %v511 = vld [vmem:[#allocation13] sm:$0xf]
        %v512 = vld [vmem:[#allocation13 + $0x4] sm:$0xf]
        %v513 = vld [vmem:[#allocation13 + $0x8] sm:$0xf]
        %v514 = vld [vmem:[#allocation13 + $0xc] sm:$0xf]
        %v515 = vld [vmem:[#allocation13 + $0x10] sm:$0xf]
        %v516 = vld [vmem:[#allocation13 + $0x14] sm:$0xf]
        %v517 = vld [vmem:[#allocation13 + $0x18] sm:$0xf]
        %v518 = vld [vmem:[#allocation13 + $0x1c] sm:$0xf]
        %v519 = vld [vmem:[#allocation13 + $0x20] sm:$0xf]
        %v520 = vld [vmem:[#allocation13 + $0x24] sm:$0xf]
        %v521 = vld [vmem:[#allocation13 + $0x28] sm:$0xf]
        %v522 = vld [vmem:[#allocation13 + $0x2c] sm:$0xf]
        %v523 = vld [vmem:[#allocation13 + $0x30] sm:$0xf]
        %v524 = vld [vmem:[#allocation13 + $0x34] sm:$0xf]
        %v525 = vld [vmem:[#allocation13 + $0x38] sm:$0xf]
        %v526 = vld [vmem:[#allocation13 + $0x3c] sm:$0xf]
        %v527 = vld [vmem:[#allocation12 + $0x1] sm:$0x1]
        %v529 = vlaneseq
        %v530 = vshrl.u32 %v529, 7
        %v531 = vsub.s32 0, %v530
        %v532 = vrot.slane %v527, %v531
        %v550 = vunpack.c.l.b16 %v511
        %v551 = vunpack.c.l.b16 %v512
        %v552 = vunpack.c.l.b16 %v513
        %v553 = vunpack.c.l.b16 %v514
        %v554 = vunpack.c.l.b16 %v515
        %v555 = vunpack.c.l.b16 %v516
        %v556 = vunpack.c.l.b16 %v517
        %v557 = vunpack.c.l.b16 %v518
        %v558 = vunpack.c.l.b16 %v519
        %v559 = vunpack.c.l.b16 %v520
        %v560 = vunpack.c.l.b16 %v521
        %v561 = vunpack.c.l.b16 %v522
        %v562 = vunpack.c.l.b16 %v523
        %v563 = vunpack.c.l.b16 %v524
        %v564 = vunpack.c.l.b16 %v525
        %v565 = vunpack.c.l.b16 %v526
        %v566 = vpack.c.b16 %v551, %v550
        %v567 = vpack.c.b16 %v553, %v552
        %v568 = vpack.c.b16 %v555, %v554
        %v569 = vpack.c.b16 %v557, %v556
        %v570 = vpack.c.b16 %v559, %v558
        %v571 = vpack.c.b16 %v561, %v560
        %v572 = vpack.c.b16 %v563, %v562
        %v573 = vpack.c.b16 %v565, %v564
        %582 = vmatprep.subr.bf16.mxu0 0
        %583 = vmatpush1.bf16.msra.mxu0 %v566
        %584 = vmatprep.subr.bf16.mxu0 0
        %585 = vmatpush1.bf16.msra.mxu0 %v567
        %586 = vmatprep.subr.bf16.mxu0 0
        %587 = vmatpush1.bf16.msra.mxu0 %v568
        %588 = vmatprep.subr.bf16.mxu0 0
        %589 = vmatpush1.bf16.msra.mxu0 %v569
        %590 = vmatprep.subr.bf16.mxu0 0
        %591 = vmatpush1.bf16.msra.mxu0 %v570
        %592 = vmatprep.subr.bf16.mxu0 0
        %593 = vmatpush1.bf16.msra.mxu0 %v571
        %594 = vmatprep.subr.bf16.mxu0 0
        %595 = vmatpush1.bf16.msra.mxu0 %v572
        %596 = vmatprep.subr.bf16.mxu0 0
        %597 = vmatpush1.bf16.msra.mxu0 %v573
        %598 = vmatprep.subr.bf16.mxu0 0
        %599 = vmatpush1.bf16.msra.mxu0 0
        %600 = vmatprep.subr.bf16.mxu0 0
        %601 = vmatpush1.bf16.msra.mxu0 0
        %602 = vmatprep.subr.bf16.mxu0 0
        %603 = vmatpush1.bf16.msra.mxu0 0
        %604 = vmatprep.subr.bf16.mxu0 0
        %605 = vmatpush1.bf16.msra.mxu0 0
        %606 = vmatprep.subr.bf16.mxu0 0
        %607 = vmatpush1.bf16.msra.mxu0 0
        %608 = vmatprep.subr.bf16.mxu0 0
        %609 = vmatpush1.bf16.msra.mxu0 0
        %610 = vmatprep.subr.bf16.mxu0 0
        %611 = vmatpush1.bf16.msra.mxu0 0
        %612 = vmatprep.subr.bf16.mxu0 0
        %613 = vmatpush1.bf16.msra.mxu0 0
        %614 = vmatprep.mubr.bf16.mxu0 0
        %615 = vmatmul.mubr.bf16.gmra.mrb[0].mxu0 %v507
        %v616 = vpop.f32.mrb[0].mxu0
        %v617 = vadd.f32 %v532, %v616
        %v618 = vpop.f32.mrb[0].mxu0
        %v619 = vpop.f32.mrb[0].mxu0
        %v620 = vadd.f32 %v532, %v619
        %v621 = vpop.f32.mrb[0].mxu0
        %622 = vmatprep.mubr.bf16.mxu0 0
        %623 = vmatmul.mubr.bf16.gmra.mrb[0].mxu0 %v508
        %v624 = vpop.f32.mrb[0].mxu0
        %v625 = vadd.f32 %v532, %v624
        %v626 = vpop.f32.mrb[0].mxu0
        %v627 = vpop.f32.mrb[0].mxu0
        %v628 = vadd.f32 %v532, %v627
        %v629 = vpop.f32.mrb[0].mxu0
        %630 = vmatprep.mubr.bf16.mxu0 0
        %631 = vmatmul.mubr.bf16.gmra.mrb[0].mxu0 %v509
        %v632 = vpop.f32.mrb[0].mxu0
        %v633 = vadd.f32 %v532, %v632
        %v634 = vpop.f32.mrb[0].mxu0
        %v635 = vpop.f32.mrb[0].mxu0
        %v636 = vadd.f32 %v532, %v635
        %v637 = vpop.f32.mrb[0].mxu0
        %638 = vmatprep.mubr.bf16.mxu0 0
        %639 = vmatmul.mubr.bf16.gmra.mrb[0].mxu0 %v510
        %v640 = vpop.f32.mrb[0].mxu0
        %v641 = vadd.f32 %v532, %v640
        %v642 = vpop.f32.mrb[0].mxu0
        %v643 = vpop.f32.mrb[0].mxu0
        %v644 = vadd.f32 %v532, %v643
        %v645 = vpop.f32.mrb[0].mxu0
        %646 = vdwg.mxu0
        %v647 = vxor.u32 %v617, 2147483648
        %v648 = vxor.u32 %v620, 2147483648
        %v649 = vxor.u32 %v625, 2147483648
        %v650 = vxor.u32 %v628, 2147483648
        %v651 = vxor.u32 %v633, 2147483648
        %v652 = vxor.u32 %v636, 2147483648
        %v653 = vxor.u32 %v641, 2147483648
        %v654 = vxor.u32 %v644, 2147483648
        %v655 = vmul.f32 %v647, 1.442695
        %v656 = vpow.pop %v655
        %v657 = vmul.f32 %v648, 1.442695
        %v658 = vpow.pop %v657
        %v659 = vmul.f32 %v649, 1.442695
        %v660 = vpow.pop %v659
        %v661 = vmul.f32 %v650, 1.442695
        %v662 = vpow.pop %v661
        %v663 = vmul.f32 %v651, 1.442695
        %v664 = vpow.pop %v663
        %v665 = vmul.f32 %v652, 1.442695
        %v666 = vpow.pop %v665
        %v667 = vmul.f32 %v653, 1.442695
        %v668 = vpow.pop %v667
        %v669 = vmul.f32 %v654, 1.442695
        %v670 = vpow.pop %v669
        %v671 = vadd.f32 %v656, 1.0
        %v672 = vadd.f32 %v658, 1.0
        %v673 = vadd.f32 %v660, 1.0
        %v674 = vadd.f32 %v662, 1.0
        %v675 = vadd.f32 %v664, 1.0
        %v676 = vadd.f32 %v666, 1.0
        %v677 = vadd.f32 %v668, 1.0
        %v678 = vadd.f32 %v670, 1.0
        %v679 = vrcp.pop %v671
        %v680 = vmul.f32 1.0, %v679
        %v681 = vrcp.pop %v672
        %v682 = vmul.f32 1.0, %v681
        %v683 = vrcp.pop %v673
        %v684 = vmul.f32 1.0, %v683
        %v685 = vrcp.pop %v674
        %v686 = vmul.f32 1.0, %v685
        %v687 = vrcp.pop %v675
        %v688 = vmul.f32 1.0, %v687
        %v689 = vrcp.pop %v676
        %v690 = vmul.f32 1.0, %v689
        %v691 = vrcp.pop %v677
        %v692 = vmul.f32 1.0, %v691
        %v693 = vrcp.pop %v678
        %v694 = vmul.f32 1.0, %v693
        %v695 = vmul.f32 %v617, %v680
        %v696 = vmul.f32 %v620, %v682
        %v697 = vmul.f32 %v625, %v684
        %v698 = vmul.f32 %v628, %v686
        %v699 = vmul.f32 %v633, %v688
        %v700 = vmul.f32 %v636, %v690
        %v701 = vmul.f32 %v641, %v692
        %v702 = vmul.f32 %v644, %v694
        %v703 = vld [vmem:[%s424] sm:$0xf]
        %v704 = vld [vmem:[%s424 + $0x4] sm:$0xf]
        %v705 = vld [vmem:[%s424 + $0x8] sm:$0xf]
        %v706 = vld [vmem:[%s424 + $0xc] sm:$0xf]
        %v707 = vld [vmem:[%s424 + $0x10] sm:$0xf]
        %v708 = vld [vmem:[%s424 + $0x14] sm:$0xf]
        %v709 = vld [vmem:[%s424 + $0x18] sm:$0xf]
        %v710 = vld [vmem:[%s424 + $0x1c] sm:$0xf]
        %v711 = vunpack.c.l.bf16 %v703
        %v712 = vunpack.c.l.bf16 %v704
        %v713 = vunpack.c.l.bf16 %v705
        %v714 = vunpack.c.l.bf16 %v706
        %v715 = vunpack.c.l.bf16 %v707
        %v716 = vunpack.c.l.bf16 %v708
        %v717 = vunpack.c.l.bf16 %v709
        %v718 = vunpack.c.l.bf16 %v710
        %v719 = vld [vmem:[#allocation12] sm:$0x1]
        %v721 = vlaneseq
        %v722 = vshrl.u32 %v721, 7
        %v723 = vsub.s32 0, %v722
        %v724 = vrot.slane %v719, %v723
        %v726 = vmul.f32 %v499, %v724
        %v727 = vmul.f32 %v500, %v724
        %v728 = vmul.f32 %v501, %v724
        %v729 = vmul.f32 %v502, %v724
        %v730 = vmul.f32 %v503, %v724
        %v731 = vmul.f32 %v504, %v724
        %v732 = vmul.f32 %v505, %v724
        %v733 = vmul.f32 %v506, %v724
        %v734 = vadd.f32 %v711, %v726
        %v735 = vadd.f32 %v712, %v727
        %v736 = vadd.f32 %v713, %v728
        %v737 = vadd.f32 %v714, %v729
        %v738 = vadd.f32 %v715, %v730
        %v739 = vadd.f32 %v716, %v731
        %v740 = vadd.f32 %v717, %v732
        %v741 = vadd.f32 %v718, %v733
        %v742 = vxor.u32 %v734, 2147483648
        %v743 = vxor.u32 %v735, 2147483648
        %v744 = vxor.u32 %v736, 2147483648
        %v745 = vxor.u32 %v737, 2147483648
        %v746 = vxor.u32 %v738, 2147483648
        %v747 = vxor.u32 %v739, 2147483648
        %v748 = vxor.u32 %v740, 2147483648
        %v749 = vxor.u32 %v741, 2147483648
        %v750 = vmul.f32 %v742, 1.442695
        %v751 = vpow.pop %v750
        %v752 = vmul.f32 %v743, 1.442695
        %v753 = vpow.pop %v752
        %v754 = vmul.f32 %v744, 1.442695
        %v755 = vpow.pop %v754
        %v756 = vmul.f32 %v745, 1.442695
        %v757 = vpow.pop %v756
        %v758 = vmul.f32 %v746, 1.442695
        %v759 = vpow.pop %v758
        %v760 = vmul.f32 %v747, 1.442695
        %v761 = vpow.pop %v760
        %v762 = vmul.f32 %v748, 1.442695
        %v763 = vpow.pop %v762
        %v764 = vmul.f32 %v749, 1.442695
        %v765 = vpow.pop %v764
        %v766 = vadd.f32 %v751, 1.0
        %v767 = vadd.f32 %v753, 1.0
        %v768 = vadd.f32 %v755, 1.0
        %v769 = vadd.f32 %v757, 1.0
        %v770 = vadd.f32 %v759, 1.0
        %v771 = vadd.f32 %v761, 1.0
        %v772 = vadd.f32 %v763, 1.0
        %v773 = vadd.f32 %v765, 1.0
        %v774 = vrcp.pop %v766
        %v775 = vmul.f32 1.0, %v774
        %v776 = vrcp.pop %v767
        %v777 = vmul.f32 1.0, %v776
        %v778 = vrcp.pop %v768
        %v779 = vmul.f32 1.0, %v778
        %v780 = vrcp.pop %v769
        %v781 = vmul.f32 1.0, %v780
        %v782 = vrcp.pop %v770
        %v783 = vmul.f32 1.0, %v782
        %v784 = vrcp.pop %v771
        %v785 = vmul.f32 1.0, %v784
        %v786 = vrcp.pop %v772
        %v787 = vmul.f32 1.0, %v786
        %v788 = vrcp.pop %v773
        %v789 = vmul.f32 1.0, %v788
        %v790 = vmul.f32 %v734, %v775
        %v791 = vmul.f32 %v735, %v777
        %v792 = vmul.f32 %v736, %v779
        %v793 = vmul.f32 %v737, %v781
        %v794 = vmul.f32 %v738, %v783
        %v795 = vmul.f32 %v739, %v785
        %v796 = vmul.f32 %v740, %v787
        %v797 = vmul.f32 %v741, %v789
        %v798 = vpack.c.bf16 %v791, %v790
        %v799 = vpack.c.bf16 %v793, %v792
        %v800 = vpack.c.bf16 %v795, %v794
        %v801 = vpack.c.bf16 %v797, %v796
        %v802 = vld [vmem:[#allocation15] sm:$0xff]
        %v803 = vld [vmem:[#allocation15 + $0x8] sm:$0xff]
        %v804 = vld [vmem:[#allocation15 + $0x10] sm:$0xff]
        %v805 = vld [vmem:[#allocation15 + $0x18] sm:$0xff]
        %v806 = vld [vmem:[#allocation15 + $0x20] sm:$0xff]
        %v807 = vld [vmem:[#allocation15 + $0x28] sm:$0xff]
        %v808 = vld [vmem:[#allocation15 + $0x30] sm:$0xff]
        %v809 = vld [vmem:[#allocation15 + $0x38] sm:$0xff]
        %v810 = vld [vmem:[#allocation15 + $0x40] sm:$0xff]
        %v811 = vld [vmem:[#allocation15 + $0x48] sm:$0xff]
        %v812 = vld [vmem:[#allocation15 + $0x50] sm:$0xff]
        %v813 = vld [vmem:[#allocation15 + $0x58] sm:$0xff]
        %v814 = vld [vmem:[#allocation15 + $0x60] sm:$0xff]
        %v815 = vld [vmem:[#allocation15 + $0x68] sm:$0xff]
        %v816 = vld [vmem:[#allocation15 + $0x70] sm:$0xff]
        %v817 = vld [vmem:[#allocation15 + $0x78] sm:$0xff]
        %v818 = vld [vmem:[#allocation15 + $0x80] sm:$0xff]
        %v819 = vld [vmem:[#allocation15 + $0x88] sm:$0xff]
        %v820 = vld [vmem:[#allocation15 + $0x90] sm:$0xff]
        %v821 = vld [vmem:[#allocation15 + $0x98] sm:$0xff]
        %v822 = vld [vmem:[#allocation15 + $0xa0] sm:$0xff]
        %v823 = vld [vmem:[#allocation15 + $0xa8] sm:$0xff]
        %v824 = vld [vmem:[#allocation15 + $0xb0] sm:$0xff]
        %v825 = vld [vmem:[#allocation15 + $0xb8] sm:$0xff]
        %v826 = vld [vmem:[#allocation15 + $0xc0] sm:$0xff]
        %v827 = vld [vmem:[#allocation15 + $0xc8] sm:$0xff]
        %v828 = vld [vmem:[#allocation15 + $0xd0] sm:$0xff]
        %v829 = vld [vmem:[#allocation15 + $0xd8] sm:$0xff]
        %v830 = vld [vmem:[#allocation15 + $0xe0] sm:$0xff]
        %v831 = vld [vmem:[#allocation15 + $0xe8] sm:$0xff]
        %v832 = vld [vmem:[#allocation15 + $0xf0] sm:$0xff]
        %v833 = vld [vmem:[#allocation15 + $0xf8] sm:$0xff]
        %v834 = vld [vmem:[#allocation12 + $0x2] sm:$0xf]
        %v836 = vlaneseq
        %v837 = vshrl.u32 %v836, 7
        %v838 = vsub.s32 0, %v837
        %v839 = vrot.slane %v834, %v838
        %v840 = vlaneseq
        %v841 = vshrl.u32 %v840, 7
        %v842 = vsub.s32 1, %v841
        %v843 = vrot.slane %v834, %v842
        %v844 = vlaneseq
        %v845 = vshrl.u32 %v844, 7
        %v846 = vsub.s32 2, %v845
        %v847 = vrot.slane %v834, %v846
        %v848 = vlaneseq
        %v849 = vshrl.u32 %v848, 7
        %v850 = vsub.s32 3, %v849
        %v851 = vrot.slane %v834, %v850
        %v888 = vunpack.c.l.b16 %v802
        %v889 = vunpack.c.h.b16 %v802
        %v890 = vunpack.c.l.b16 %v803
        %v891 = vunpack.c.h.b16 %v803
        %v892 = vunpack.c.l.b16 %v804
        %v893 = vunpack.c.h.b16 %v804
        %v894 = vunpack.c.l.b16 %v805
        %v895 = vunpack.c.h.b16 %v805
        %v896 = vunpack.c.l.b16 %v806
        %v897 = vunpack.c.h.b16 %v806
        %v898 = vunpack.c.l.b16 %v807
        %v899 = vunpack.c.h.b16 %v807
        %v900 = vunpack.c.l.b16 %v808
        %v901 = vunpack.c.h.b16 %v808
        %v902 = vunpack.c.l.b16 %v809
        %v903 = vunpack.c.h.b16 %v809
        %v904 = vunpack.c.l.b16 %v810
        %v905 = vunpack.c.h.b16 %v810
        %v906 = vunpack.c.l.b16 %v811
        %v907 = vunpack.c.h.b16 %v811
        %v908 = vunpack.c.l.b16 %v812
        %v909 = vunpack.c.h.b16 %v812
        %v910 = vunpack.c.l.b16 %v813
        %v911 = vunpack.c.h.b16 %v813
        %v912 = vunpack.c.l.b16 %v814
        %v913 = vunpack.c.h.b16 %v814
        %v914 = vunpack.c.l.b16 %v815
        %v915 = vunpack.c.h.b16 %v815
        %v916 = vunpack.c.l.b16 %v816
        %v917 = vunpack.c.h.b16 %v816
        %v918 = vunpack.c.l.b16 %v817
        %v919 = vunpack.c.h.b16 %v817
        %v920 = vunpack.c.l.b16 %v818
        %v921 = vunpack.c.h.b16 %v818
        %v922 = vunpack.c.l.b16 %v819
        %v923 = vunpack.c.h.b16 %v819
        %v924 = vunpack.c.l.b16 %v820
        %v925 = vunpack.c.h.b16 %v820
        %v926 = vunpack.c.l.b16 %v821
        %v927 = vunpack.c.h.b16 %v821
        %v928 = vunpack.c.l.b16 %v822
        %v929 = vunpack.c.h.b16 %v822
        %v930 = vunpack.c.l.b16 %v823
        %v931 = vunpack.c.h.b16 %v823
        %v932 = vunpack.c.l.b16 %v824
        %v933 = vunpack.c.h.b16 %v824
        %v934 = vunpack.c.l.b16 %v825
        %v935 = vunpack.c.h.b16 %v825
        %v936 = vunpack.c.l.b16 %v826
        %v937 = vunpack.c.h.b16 %v826
        %v938 = vunpack.c.l.b16 %v827
        %v939 = vunpack.c.h.b16 %v827
        %v940 = vunpack.c.l.b16 %v828
        %v941 = vunpack.c.h.b16 %v828
        %v942 = vunpack.c.l.b16 %v829
        %v943 = vunpack.c.h.b16 %v829
        %v944 = vunpack.c.l.b16 %v830
        %v945 = vunpack.c.h.b16 %v830
        %v946 = vunpack.c.l.b16 %v831
        %v947 = vunpack.c.h.b16 %v831
        %v948 = vunpack.c.l.b16 %v832
        %v949 = vunpack.c.h.b16 %v832
        %v950 = vunpack.c.l.b16 %v833
        %v951 = vunpack.c.h.b16 %v833
        %v952 = vpack.c.b16 %v892, %v888
        %v953 = vpack.c.b16 %v893, %v889
        %v954 = vpack.c.b16 %v894, %v890
        %v955 = vpack.c.b16 %v895, %v891
        %v956 = vpack.c.b16 %v900, %v896
        %v957 = vpack.c.b16 %v901, %v897
        %v958 = vpack.c.b16 %v902, %v898
        %v959 = vpack.c.b16 %v903, %v899
        %v960 = vpack.c.b16 %v908, %v904
        %v961 = vpack.c.b16 %v909, %v905
        %v962 = vpack.c.b16 %v910, %v906
        %v963 = vpack.c.b16 %v911, %v907
        %v964 = vpack.c.b16 %v916, %v912
        %v965 = vpack.c.b16 %v917, %v913
        %v966 = vpack.c.b16 %v918, %v914
        %v967 = vpack.c.b16 %v919, %v915
        %v968 = vpack.c.b16 %v924, %v920
        %v969 = vpack.c.b16 %v925, %v921
        %v970 = vpack.c.b16 %v926, %v922
        %v971 = vpack.c.b16 %v927, %v923
        %v972 = vpack.c.b16 %v932, %v928
        %v973 = vpack.c.b16 %v933, %v929
        %v974 = vpack.c.b16 %v934, %v930
        %v975 = vpack.c.b16 %v935, %v931
        %v976 = vpack.c.b16 %v940, %v936
        %v977 = vpack.c.b16 %v941, %v937
        %v978 = vpack.c.b16 %v942, %v938
        %v979 = vpack.c.b16 %v943, %v939
        %v980 = vpack.c.b16 %v948, %v944
        %v981 = vpack.c.b16 %v949, %v945
        %v982 = vpack.c.b16 %v950, %v946
        %v983 = vpack.c.b16 %v951, %v947
        %1016 = vmatprep.subr.bf16.mxu0 %v953
        %1017 = vmatpush1.bf16.msra.mxu0 %v952
        %1018 = vmatprep.subr.bf16.mxu0 %v957
        %1019 = vmatpush1.bf16.msra.mxu0 %v956
        %1020 = vmatprep.subr.bf16.mxu0 %v961
        %1021 = vmatpush1.bf16.msra.mxu0 %v960
        %1022 = vmatprep.subr.bf16.mxu0 %v965
        %1023 = vmatpush1.bf16.msra.mxu0 %v964
        %1024 = vmatprep.subr.bf16.mxu0 %v969
        %1025 = vmatpush1.bf16.msra.mxu0 %v968
        %1026 = vmatprep.subr.bf16.mxu0 %v973
        %1027 = vmatpush1.bf16.msra.mxu0 %v972
        %1028 = vmatprep.subr.bf16.mxu0 %v977
        %1029 = vmatpush1.bf16.msra.mxu0 %v976
        %1030 = vmatprep.subr.bf16.mxu0 %v981
        %1031 = vmatpush1.bf16.msra.mxu0 %v980
        %1032 = vmatprep.subr.bf16.mxu0 0
        %1033 = vmatpush1.bf16.msra.mxu0 0
        %1034 = vmatprep.subr.bf16.mxu0 0
        %1035 = vmatpush1.bf16.msra.mxu0 0
        %1036 = vmatprep.subr.bf16.mxu0 0
        %1037 = vmatpush1.bf16.msra.mxu0 0
        %1038 = vmatprep.subr.bf16.mxu0 0
        %1039 = vmatpush1.bf16.msra.mxu0 0
        %1040 = vmatprep.subr.bf16.mxu0 0
        %1041 = vmatpush1.bf16.msra.mxu0 0
        %1042 = vmatprep.subr.bf16.mxu0 0
        %1043 = vmatpush1.bf16.msra.mxu0 0
        %1044 = vmatprep.subr.bf16.mxu0 0
        %1045 = vmatpush1.bf16.msra.mxu0 0
        %1046 = vmatprep.subr.bf16.mxu0 0
        %1047 = vmatpush1.bf16.msra.mxu0 0
        %1048 = vmatprep.mubr.bf16.mxu0 0
        %1049 = vmatmul.mubr.bf16.gmra.mrb[0].mxu0 %v798
        %v1050 = vpop.f32.mrb[0].mxu0
        %v1051 = vadd.f32 %v839, %v1050
        %v1052 = vpop.f32.mrb[0].mxu0
        %v1053 = vadd.f32 %v843, %v1052
        %v1054 = vpop.f32.mrb[0].mxu0
        %v1055 = vadd.f32 %v839, %v1054
        %v1056 = vpop.f32.mrb[0].mxu0
        %v1057 = vadd.f32 %v843, %v1056
        %1058 = vmatprep.mubr.bf16.mxu0 0
        %1059 = vmatmul.mubr.bf16.gmra.mrb[0].mxu0 %v799
        %v1060 = vpop.f32.mrb[0].mxu0
        %v1061 = vadd.f32 %v839, %v1060
        %v1062 = vpop.f32.mrb[0].mxu0
        %v1063 = vadd.f32 %v843, %v1062
        %v1064 = vpop.f32.mrb[0].mxu0
        %v1065 = vadd.f32 %v839, %v1064
        %v1066 = vpop.f32.mrb[0].mxu0
        %v1067 = vadd.f32 %v843, %v1066
        %1068 = vmatprep.mubr.bf16.mxu0 0
        %1069 = vmatmul.mubr.bf16.gmra.mrb[0].mxu0 %v800
        %v1070 = vpop.f32.mrb[0].mxu0
        %v1071 = vadd.f32 %v839, %v1070
        %v1072 = vpop.f32.mrb[0].mxu0
        %v1073 = vadd.f32 %v843, %v1072
        %v1074 = vpop.f32.mrb[0].mxu0
        %v1075 = vadd.f32 %v839, %v1074
        %v1076 = vpop.f32.mrb[0].mxu0
        %v1077 = vadd.f32 %v843, %v1076
        %1078 = vmatprep.mubr.bf16.mxu0 0
        %1079 = vmatmul.mubr.bf16.gmra.mrb[0].mxu0 %v801
        %v1080 = vpop.f32.mrb[0].mxu0
        %v1081 = vadd.f32 %v839, %v1080
        %v1082 = vpop.f32.mrb[0].mxu0
        %v1083 = vadd.f32 %v843, %v1082
        %v1084 = vpop.f32.mrb[0].mxu0
        %v1085 = vadd.f32 %v839, %v1084
        %v1086 = vpop.f32.mrb[0].mxu0
        %v1087 = vadd.f32 %v843, %v1086
        %1088 = vdwg.mxu0
        %1089 = vmatprep.subr.bf16.mxu0 %v955
        %1090 = vmatpush1.bf16.msra.mxu0 %v954
        %1091 = vmatprep.subr.bf16.mxu0 %v959
        %1092 = vmatpush1.bf16.msra.mxu0 %v958
        %1093 = vmatprep.subr.bf16.mxu0 %v963
        %1094 = vmatpush1.bf16.msra.mxu0 %v962
        %1095 = vmatprep.subr.bf16.mxu0 %v967
        %1096 = vmatpush1.bf16.msra.mxu0 %v966
        %1097 = vmatprep.subr.bf16.mxu0 %v971
        %1098 = vmatpush1.bf16.msra.mxu0 %v970
        %1099 = vmatprep.subr.bf16.mxu0 %v975
        %1100 = vmatpush1.bf16.msra.mxu0 %v974
        %1101 = vmatprep.subr.bf16.mxu0 %v979
        %1102 = vmatpush1.bf16.msra.mxu0 %v978
        %1103 = vmatprep.subr.bf16.mxu0 %v983
        %1104 = vmatpush1.bf16.msra.mxu0 %v982
        %1105 = vmatprep.subr.bf16.mxu0 0
        %1106 = vmatpush1.bf16.msra.mxu0 0
        %1107 = vmatprep.subr.bf16.mxu0 0
        %1108 = vmatpush1.bf16.msra.mxu0 0
        %1109 = vmatprep.subr.bf16.mxu0 0
        %1110 = vmatpush1.bf16.msra.mxu0 0
        %1111 = vmatprep.subr.bf16.mxu0 0
        %1112 = vmatpush1.bf16.msra.mxu0 0
        %1113 = vmatprep.subr.bf16.mxu0 0
        %1114 = vmatpush1.bf16.msra.mxu0 0
        %1115 = vmatprep.subr.bf16.mxu0 0
        %1116 = vmatpush1.bf16.msra.mxu0 0
        %1117 = vmatprep.subr.bf16.mxu0 0
        %1118 = vmatpush1.bf16.msra.mxu0 0
        %1119 = vmatprep.subr.bf16.mxu0 0
        %1120 = vmatpush1.bf16.msra.mxu0 0
        %1121 = vmatprep.mubr.bf16.mxu0 0
        %1122 = vmatmul.mubr.bf16.gmra.mrb[0].mxu0 %v798
        %v1123 = vpop.f32.mrb[0].mxu0
        %v1124 = vadd.f32 %v847, %v1123
        %v1125 = vpop.f32.mrb[0].mxu0
        %v1126 = vadd.f32 %v851, %v1125
        %v1127 = vpop.f32.mrb[0].mxu0
        %v1128 = vadd.f32 %v847, %v1127
        %v1129 = vpop.f32.mrb[0].mxu0
        %v1130 = vadd.f32 %v851, %v1129
        %1131 = vmatprep.mubr.bf16.mxu0 0
        %1132 = vmatmul.mubr.bf16.gmra.mrb[0].mxu0 %v799
        %v1133 = vpop.f32.mrb[0].mxu0
        %v1134 = vadd.f32 %v847, %v1133
        %v1135 = vpop.f32.mrb[0].mxu0
        %v1136 = vadd.f32 %v851, %v1135
        %v1137 = vpop.f32.mrb[0].mxu0
        %v1138 = vadd.f32 %v847, %v1137
        %v1139 = vpop.f32.mrb[0].mxu0
        %v1140 = vadd.f32 %v851, %v1139
        %1141 = vmatprep.mubr.bf16.mxu0 0
        %1142 = vmatmul.mubr.bf16.gmra.mrb[0].mxu0 %v800
        %v1143 = vpop.f32.mrb[0].mxu0
        %v1144 = vadd.f32 %v847, %v1143
        %v1145 = vpop.f32.mrb[0].mxu0
        %v1146 = vadd.f32 %v851, %v1145
        %v1147 = vpop.f32.mrb[0].mxu0
        %v1148 = vadd.f32 %v847, %v1147
        %v1149 = vpop.f32.mrb[0].mxu0
        %v1150 = vadd.f32 %v851, %v1149
        %1151 = vmatprep.mubr.bf16.mxu0 0
        %1152 = vmatmul.mubr.bf16.gmra.mrb[0].mxu0 %v801
        %v1153 = vpop.f32.mrb[0].mxu0
        %v1154 = vadd.f32 %v847, %v1153
        %v1155 = vpop.f32.mrb[0].mxu0
        %v1156 = vadd.f32 %v851, %v1155
        %v1157 = vpop.f32.mrb[0].mxu0
        %v1158 = vadd.f32 %v847, %v1157
        %v1159 = vpop.f32.mrb[0].mxu0
        %v1160 = vadd.f32 %v851, %v1159
        %1161 = vdwg.mxu0
        %v1162 = vxor.u32 %v1051, 2147483648
        %v1163 = vxor.u32 %v1055, 2147483648
        %v1164 = vxor.u32 %v1061, 2147483648
        %v1165 = vxor.u32 %v1065, 2147483648
        %v1166 = vxor.u32 %v1071, 2147483648
        %v1167 = vxor.u32 %v1075, 2147483648
        %v1168 = vxor.u32 %v1081, 2147483648
        %v1169 = vxor.u32 %v1085, 2147483648
        %v1170 = vmul.f32 %v1162, 1.442695
        %v1171 = vpow.pop %v1170
        %v1172 = vmul.f32 %v1163, 1.442695
        %v1173 = vpow.pop %v1172
        %v1174 = vmul.f32 %v1164, 1.442695
        %v1175 = vpow.pop %v1174
        %v1176 = vmul.f32 %v1165, 1.442695
        %v1177 = vpow.pop %v1176
        %v1178 = vmul.f32 %v1166, 1.442695
        %v1179 = vpow.pop %v1178
        %v1180 = vmul.f32 %v1167, 1.442695
        %v1181 = vpow.pop %v1180
        %v1182 = vmul.f32 %v1168, 1.442695
        %v1183 = vpow.pop %v1182
        %v1184 = vmul.f32 %v1169, 1.442695
        %v1185 = vpow.pop %v1184
        %v1186 = vadd.f32 %v1171, 1.0
        %v1187 = vadd.f32 %v1173, 1.0
        %v1188 = vadd.f32 %v1175, 1.0
        %v1189 = vadd.f32 %v1177, 1.0
        %v1190 = vadd.f32 %v1179, 1.0
        %v1191 = vadd.f32 %v1181, 1.0
        %v1192 = vadd.f32 %v1183, 1.0
        %v1193 = vadd.f32 %v1185, 1.0
        %v1194 = vrcp.pop %v1186
        %v1195 = vmul.f32 1.0, %v1194
        %v1196 = vrcp.pop %v1187
        %v1197 = vmul.f32 1.0, %v1196
        %v1198 = vrcp.pop %v1188
        %v1199 = vmul.f32 1.0, %v1198
        %v1200 = vrcp.pop %v1189
        %v1201 = vmul.f32 1.0, %v1200
        %v1202 = vrcp.pop %v1190
        %v1203 = vmul.f32 1.0, %v1202
        %v1204 = vrcp.pop %v1191
        %v1205 = vmul.f32 1.0, %v1204
        %v1206 = vrcp.pop %v1192
        %v1207 = vmul.f32 1.0, %v1206
        %v1208 = vrcp.pop %v1193
        %v1209 = vmul.f32 1.0, %v1208
        %v1210 = vxor.u32 %v1053, 2147483648
        %v1211 = vxor.u32 %v1057, 2147483648
        %v1212 = vxor.u32 %v1063, 2147483648
        %v1213 = vxor.u32 %v1067, 2147483648
        %v1214 = vxor.u32 %v1073, 2147483648
        %v1215 = vxor.u32 %v1077, 2147483648
        %v1216 = vxor.u32 %v1083, 2147483648
        %v1217 = vxor.u32 %v1087, 2147483648
        %v1218 = vmul.f32 %v1210, 1.442695
        %v1219 = vpow.pop %v1218
        %v1220 = vmul.f32 %v1211, 1.442695
        %v1221 = vpow.pop %v1220
        %v1222 = vmul.f32 %v1212, 1.442695
        %v1223 = vpow.pop %v1222
        %v1224 = vmul.f32 %v1213, 1.442695
        %v1225 = vpow.pop %v1224
        %v1226 = vmul.f32 %v1214, 1.442695
        %v1227 = vpow.pop %v1226
        %v1228 = vmul.f32 %v1215, 1.442695
        %v1229 = vpow.pop %v1228
        %v1230 = vmul.f32 %v1216, 1.442695
        %v1231 = vpow.pop %v1230
        %v1232 = vmul.f32 %v1217, 1.442695
        %v1233 = vpow.pop %v1232
        %v1234 = vadd.f32 %v1219, 1.0
        %v1235 = vadd.f32 %v1221, 1.0
        %v1236 = vadd.f32 %v1223, 1.0
        %v1237 = vadd.f32 %v1225, 1.0
        %v1238 = vadd.f32 %v1227, 1.0
        %v1239 = vadd.f32 %v1229, 1.0
        %v1240 = vadd.f32 %v1231, 1.0
        %v1241 = vadd.f32 %v1233, 1.0
        %v1242 = vrcp.pop %v1234
        %v1243 = vmul.f32 1.0, %v1242
        %v1244 = vrcp.pop %v1235
        %v1245 = vmul.f32 1.0, %v1244
        %v1246 = vrcp.pop %v1236
        %v1247 = vmul.f32 1.0, %v1246
        %v1248 = vrcp.pop %v1237
        %v1249 = vmul.f32 1.0, %v1248
        %v1250 = vrcp.pop %v1238
        %v1251 = vmul.f32 1.0, %v1250
        %v1252 = vrcp.pop %v1239
        %v1253 = vmul.f32 1.0, %v1252
        %v1254 = vrcp.pop %v1240
        %v1255 = vmul.f32 1.0, %v1254
        %v1256 = vrcp.pop %v1241
        %v1257 = vmul.f32 1.0, %v1256
        %v1258 = vmul.f32 %v1053, %v1243
        %v1259 = vmul.f32 %v1057, %v1245
        %v1260 = vmul.f32 %v1063, %v1247
        %v1261 = vmul.f32 %v1067, %v1249
        %v1262 = vmul.f32 %v1073, %v1251
        %v1263 = vmul.f32 %v1077, %v1253
        %v1264 = vmul.f32 %v1083, %v1255
        %v1265 = vmul.f32 %v1087, %v1257
        %v1266 = vxor.u32 %v1124, 2147483648
        %v1267 = vxor.u32 %v1128, 2147483648
        %v1268 = vxor.u32 %v1134, 2147483648
        %v1269 = vxor.u32 %v1138, 2147483648
        %v1270 = vxor.u32 %v1144, 2147483648
        %v1271 = vxor.u32 %v1148, 2147483648
        %v1272 = vxor.u32 %v1154, 2147483648
        %v1273 = vxor.u32 %v1158, 2147483648
        %v1274 = vmul.f32 %v1266, 1.442695
        %v1275 = vpow.pop %v1274
        %v1276 = vmul.f32 %v1267, 1.442695
        %v1277 = vpow.pop %v1276
        %v1278 = vmul.f32 %v1268, 1.442695
        %v1279 = vpow.pop %v1278
        %v1280 = vmul.f32 %v1269, 1.442695
        %v1281 = vpow.pop %v1280
        %v1282 = vmul.f32 %v1270, 1.442695
        %v1283 = vpow.pop %v1282
        %v1284 = vmul.f32 %v1271, 1.442695
        %v1285 = vpow.pop %v1284
        %v1286 = vmul.f32 %v1272, 1.442695
        %v1287 = vpow.pop %v1286
        %v1288 = vmul.f32 %v1273, 1.442695
        %v1289 = vpow.pop %v1288
        %v1290 = vadd.f32 %v1275, 1.0
        %v1291 = vadd.f32 %v1277, 1.0
        %v1292 = vadd.f32 %v1279, 1.0
        %v1293 = vadd.f32 %v1281, 1.0
        %v1294 = vadd.f32 %v1283, 1.0
        %v1295 = vadd.f32 %v1285, 1.0
        %v1296 = vadd.f32 %v1287, 1.0
        %v1297 = vadd.f32 %v1289, 1.0
        %v1298 = vrcp.pop %v1290
        %v1299 = vmul.f32 1.0, %v1298
        %v1300 = vrcp.pop %v1291
        %v1301 = vmul.f32 1.0, %v1300
        %v1302 = vrcp.pop %v1292
        %v1303 = vmul.f32 1.0, %v1302
        %v1304 = vrcp.pop %v1293
        %v1305 = vmul.f32 1.0, %v1304
        %v1306 = vrcp.pop %v1294
        %v1307 = vmul.f32 1.0, %v1306
        %v1308 = vrcp.pop %v1295
        %v1309 = vmul.f32 1.0, %v1308
        %v1310 = vrcp.pop %v1296
        %v1311 = vmul.f32 1.0, %v1310
        %v1312 = vrcp.pop %v1297
        %v1313 = vmul.f32 1.0, %v1312
        %v1314 = vmul.f32 %v1124, %v1299
        %v1315 = vmul.f32 %v1128, %v1301
        %v1316 = vmul.f32 %v1134, %v1303
        %v1317 = vmul.f32 %v1138, %v1305
        %v1318 = vmul.f32 %v1144, %v1307
        %v1319 = vmul.f32 %v1148, %v1309
        %v1320 = vmul.f32 %v1154, %v1311
        %v1321 = vmul.f32 %v1158, %v1313
        %v1322 = vld [vmem:[#allocation12 + $0x7] sm:$0x1]
        %v1324 = vlaneseq
        %v1325 = vshrl.u32 %v1324, 7
        %v1326 = vsub.s32 0, %v1325
        %v1327 = vrot.slane %v1322, %v1326
        %v1329 = vmul.f32 %v1258, %v1327
        %v1330 = vmul.f32 %v1259, %v1327
        %v1331 = vmul.f32 %v1260, %v1327
        %v1332 = vmul.f32 %v1261, %v1327
        %v1333 = vmul.f32 %v1262, %v1327
        %v1334 = vmul.f32 %v1263, %v1327
        %v1335 = vmul.f32 %v1264, %v1327
        %v1336 = vmul.f32 %v1265, %v1327
        %v1337 = vld [vmem:[#allocation12 + $0x8] sm:$0x1]
        %v1339 = vlaneseq
        %v1340 = vshrl.u32 %v1339, 7
        %v1341 = vsub.s32 0, %v1340
        %v1342 = vrot.slane %v1337, %v1341
        %v1344 = vadd.f32 %v1329, %v1342
        %v1345 = vadd.f32 %v1330, %v1342
        %v1346 = vadd.f32 %v1331, %v1342
        %v1347 = vadd.f32 %v1332, %v1342
        %v1348 = vadd.f32 %v1333, %v1342
        %v1349 = vadd.f32 %v1334, %v1342
        %v1350 = vadd.f32 %v1335, %v1342
        %v1351 = vadd.f32 %v1336, %v1342
        %v1352 = vld [vmem:[#allocation12 + $0x9] sm:$0x1]
        %v1354 = vlaneseq
        %v1355 = vshrl.u32 %v1354, 7
        %v1356 = vsub.s32 0, %v1355
        %v1357 = vrot.slane %v1352, %v1356
        %v1359 = vmul.f32 %v1258, %v1357
        %v1360 = vmul.f32 %v1259, %v1357
        %v1361 = vmul.f32 %v1260, %v1357
        %v1362 = vmul.f32 %v1261, %v1357
        %v1363 = vmul.f32 %v1262, %v1357
        %v1364 = vmul.f32 %v1263, %v1357
        %v1365 = vmul.f32 %v1264, %v1357
        %v1366 = vmul.f32 %v1265, %v1357
        %v1367 = vld [vmem:[#allocation12 + $0xa] sm:$0x1]
        %v1369 = vlaneseq
        %v1370 = vshrl.u32 %v1369, 7
        %v1371 = vsub.s32 0, %v1370
        %v1372 = vrot.slane %v1367, %v1371
        %v1374 = vadd.f32 %v1359, %v1372
        %v1375 = vadd.f32 %v1360, %v1372
        %v1376 = vadd.f32 %v1361, %v1372
        %v1377 = vadd.f32 %v1362, %v1372
        %v1378 = vadd.f32 %v1363, %v1372
        %v1379 = vadd.f32 %v1364, %v1372
        %v1380 = vadd.f32 %v1365, %v1372
        %v1381 = vadd.f32 %v1366, %v1372
        %v1382 = vpack.c.bf16 %v1345, %v1344
        %v1383 = vpack.c.bf16 %v1347, %v1346
        %v1384 = vpack.c.bf16 %v1349, %v1348
        %v1385 = vpack.c.bf16 %v1351, %v1350
        %v1386 = vpack.c.bf16 %v1375, %v1374
        %v1387 = vpack.c.bf16 %v1377, %v1376
        %v1388 = vpack.c.bf16 %v1379, %v1378
        %v1389 = vpack.c.bf16 %v1381, %v1380
        %1390 = vst [vmem:[#allocation2] sm:$0xff] %v1386
        %1391 = vst [vmem:[#allocation2 + $0x8] sm:$0xff] %v1387
        %1392 = vst [vmem:[#allocation2 + $0x10] sm:$0xff] %v1388
        %1393 = vst [vmem:[#allocation2 + $0x18] sm:$0xff] %v1389
        %v1394 = vpack.c.bf16 %v696, %v695
        %v1395 = vpack.c.bf16 %v698, %v697
        %v1396 = vpack.c.bf16 %v700, %v699
        %v1397 = vpack.c.bf16 %v702, %v701
        %1398 = vst [vmem:[#allocation3] sm:$0xff] %v1394
        %1399 = vst [vmem:[#allocation3 + $0x8] sm:$0xff] %v1395
        %1400 = vst [vmem:[#allocation3 + $0x10] sm:$0xff] %v1396
        %1401 = vst [vmem:[#allocation3 + $0x18] sm:$0xff] %v1397
        %vm1402 = vcmask 7168
        %1403 = vst.msk [vmem:[#allocation4] sm:$0xff] %vm1402, -inf
        %1404 = vst.msk [vmem:[#allocation4 + $0x8] sm:$0xff] %vm1402, -inf
        %1405 = vst.msk [vmem:[#allocation4 + $0x10] sm:$0xff] %vm1402, -inf
        %1406 = vst.msk [vmem:[#allocation4 + $0x18] sm:$0xff] %vm1402, -inf
        %1407 = vst.msk [vmem:[#allocation4 + $0x20] sm:$0xff] %vm1402, -inf
        %1408 = vst.msk [vmem:[#allocation4 + $0x28] sm:$0xff] %vm1402, -inf
        %1409 = vst.msk [vmem:[#allocation4 + $0x30] sm:$0xff] %vm1402, -inf
        %1410 = vst.msk [vmem:[#allocation4 + $0x38] sm:$0xff] %vm1402, -inf
        %1411 = vst.msk [vmem:[#allocation5] sm:$0xff] %vm1402, 0.0
        %1412 = vst.msk [vmem:[#allocation5 + $0x8] sm:$0xff] %vm1402, 0.0
        %1413 = vst.msk [vmem:[#allocation5 + $0x10] sm:$0xff] %vm1402, 0.0
        %1414 = vst.msk [vmem:[#allocation5 + $0x18] sm:$0xff] %vm1402, 0.0
        %1415 = vst.msk [vmem:[#allocation5 + $0x20] sm:$0xff] %vm1402, 0.0
        %1416 = vst.msk [vmem:[#allocation5 + $0x28] sm:$0xff] %vm1402, 0.0
        %1417 = vst.msk [vmem:[#allocation5 + $0x30] sm:$0xff] %vm1402, 0.0
        %1418 = vst.msk [vmem:[#allocation5 + $0x38] sm:$0xff] %vm1402, 0.0
        %1419 = vst [vmem:[#allocation6] sm:$0xff] 0.0
        %1420 = vst [vmem:[#allocation6 + $0x8] sm:$0xff] 0.0
        %1421 = vst [vmem:[#allocation6 + $0x10] sm:$0xff] 0.0
        %1422 = vst [vmem:[#allocation6 + $0x18] sm:$0xff] 0.0
        %1423 = vst [vmem:[#allocation6 + $0x20] sm:$0xff] 0.0
        %1424 = vst [vmem:[#allocation6 + $0x28] sm:$0xff] 0.0
        %1425 = vst [vmem:[#allocation6 + $0x30] sm:$0xff] 0.0
        %1426 = vst [vmem:[#allocation6 + $0x38] sm:$0xff] 0.0
        loop: start=0, step=1, limit=2
        $region93: #{fwd.2} parent=55 // loop_pre_header
          _
        $region94: #{fwd.2} parent=55 // loop_header
          %s1428 = sphi 0, %s1432
          %p1429 = scmp.ge.s32.totalorder %s1428, 2
        $region95: #{fwd.2} parent=55 // loop_header_branch
          %1431 = sbr.rel (%p1429) target = $region99
        $region96: #{fwd.2} parent=55 // loop_body
          %s1433 = smul.u32 %s1428, 16
          %s1434 = sshra.s32 %s1433, 4
          %s1435 = sand.u32 %s1433, 15
          %s1436 = smul.addr %s1434, 8
          %s1437 = scalar_lea.vmem [#allocation2], %s1436
          %v1438 = vld [vmem:[%s1437] sm:$0xff]
          %v1439 = vld [vmem:[%s1437 + $0x10] sm:$0xff]
          %s1440 = smul.addr %s1434, 8
          %s1441 = scalar_lea.vmem [#allocation3], %s1440
          %v1442 = vld [vmem:[%s1441] sm:$0xff]
          %v1443 = vld [vmem:[%s1441 + $0x10] sm:$0xff]
          %s1444 = smul.u32 %s1428, 4
          %s1445 = smul.addr %s1444, 4
          %s1446 = scalar_lea.vmem [#allocation21], %s1445
          %v1447 = vld [vmem:[%s1446] sm:$0xf]
          %v1448 = vld [vmem:[%s1446 + $0x4] sm:$0xf]
          %v1449 = vld [vmem:[%s1446 + $0x8] sm:$0xf]
          %v1450 = vld [vmem:[%s1446 + $0xc] sm:$0xf]
          %v1451 = vunpack.c.l.bf16 %v1447
          %v1452 = vunpack.c.l.bf16 %v1448
          %v1453 = vunpack.c.l.bf16 %v1449
          %v1454 = vunpack.c.l.bf16 %v1450
          %1455 = vmatprep.subr.bf16.mxu0 0
          %1456 = vmatpush1.bf16.xpose.msra.mxu0 %v1438
          %1457 = vmatprep.subr.bf16.mxu0 0
          %1458 = vmatpush1.bf16.xpose.msra.mxu0 0
          %1459 = vmatprep.subr.bf16.mxu0 0
          %1460 = vmatpush1.bf16.xpose.msra.mxu0 0
          %1461 = vmatprep.subr.bf16.mxu0 0
          %1462 = vmatpush1.bf16.xpose.msra.mxu0 0
          %1463 = vmatprep.subr.bf16.mxu0 0
          %1464 = vmatpush1.bf16.xpose.msra.mxu0 0
          %1465 = vmatprep.subr.bf16.mxu0 0
          %1466 = vmatpush1.bf16.xpose.msra.mxu0 0
          %1467 = vmatprep.subr.bf16.mxu0 0
          %1468 = vmatpush1.bf16.xpose.msra.mxu0 0
          %1469 = vmatprep.subr.bf16.mxu0 0
          %1470 = vmatpush1.bf16.xpose.msra.mxu0 0
          %1471 = vmatprep.subr.bf16.mxu0 0
          %1472 = vmatpush1.bf16.xpose.msra.mxu0 0
          %1473 = vmatprep.subr.bf16.mxu0 0
          %1474 = vmatpush1.bf16.xpose.msra.mxu0 0
          %1475 = vmatprep.subr.bf16.mxu0 0
          %1476 = vmatpush1.bf16.xpose.msra.mxu0 0
          %1477 = vmatprep.subr.bf16.mxu0 0
          %1478 = vmatpush1.bf16.xpose.msra.mxu0 0
          %1479 = vmatprep.subr.bf16.mxu0 0
          %1480 = vmatpush1.bf16.xpose.msra.mxu0 0
          %1481 = vmatprep.subr.bf16.mxu0 0
          %1482 = vmatpush1.bf16.xpose.msra.mxu0 0
          %1483 = vmatprep.subr.bf16.mxu0 0
          %1484 = vmatpush1.bf16.xpose.msra.mxu0 0
          %1485 = vmatprep.subr.bf16.mxu0 0
          %1486 = vmatpush1.bf16.xpose.msra.mxu0 0
          %1487 = vmatprep.mubr.bf16.mxu0 0
          %1488 = vmatmul.mubr.bf16.gmra.mrb[0].mxu0 %v1382
          %v1489 = vpop.f32.mrb[0].mxu0
          %v1490 = vadd.f32 %v1451, %v1489
          %v1491 = vpop.f32.mrb[0].mxu0
          %v1492 = vpop.f32.mrb[0].mxu0
          %v1493 = vadd.f32 %v1452, %v1492
          %v1494 = vpop.f32.mrb[0].mxu0
          %1495 = vmatprep.mubr.bf16.mxu0 0
          %1496 = vmatmul.mubr.bf16.gmra.mrb[0].mxu0 %v1383
          %v1497 = vpop.f32.mrb[0].mxu0
          %v1498 = vadd.f32 %v1453, %v1497
          %v1499 = vpop.f32.mrb[0].mxu0
          %v1500 = vpop.f32.mrb[0].mxu0
          %v1501 = vadd.f32 %v1454, %v1500
          %v1502 = vpop.f32.mrb[0].mxu0
          %1503 = vdwg.mxu0
          %1504 = vmatprep.subr.bf16.mxu0 0
          %1505 = vmatpush1.bf16.xpose.msra.mxu0 %v1439
          %1506 = vmatprep.subr.bf16.mxu0 0
          %1507 = vmatpush1.bf16.xpose.msra.mxu0 0
          %1508 = vmatprep.subr.bf16.mxu0 0
          %1509 = vmatpush1.bf16.xpose.msra.mxu0 0
          %1510 = vmatprep.subr.bf16.mxu0 0
          %1511 = vmatpush1.bf16.xpose.msra.mxu0 0
          %1512 = vmatprep.subr.bf16.mxu0 0
          %1513 = vmatpush1.bf16.xpose.msra.mxu0 0
          %1514 = vmatprep.subr.bf16.mxu0 0
          %1515 = vmatpush1.bf16.xpose.msra.mxu0 0
          %1516 = vmatprep.subr.bf16.mxu0 0
          %1517 = vmatpush1.bf16.xpose.msra.mxu0 0
          %1518 = vmatprep.subr.bf16.mxu0 0
          %1519 = vmatpush1.bf16.xpose.msra.mxu0 0
          %1520 = vmatprep.subr.bf16.mxu0 0
          %1521 = vmatpush1.bf16.xpose.msra.mxu0 0
          %1522 = vmatprep.subr.bf16.mxu0 0
          %1523 = vmatpush1.bf16.xpose.msra.mxu0 0
          %1524 = vmatprep.subr.bf16.mxu0 0
          %1525 = vmatpush1.bf16.xpose.msra.mxu0 0
          %1526 = vmatprep.subr.bf16.mxu0 0
          %1527 = vmatpush1.bf16.xpose.msra.mxu0 0
          %1528 = vmatprep.subr.bf16.mxu0 0
          %1529 = vmatpush1.bf16.xpose.msra.mxu0 0
          %1530 = vmatprep.subr.bf16.mxu0 0
          %1531 = vmatpush1.bf16.xpose.msra.mxu0 0
          %1532 = vmatprep.subr.bf16.mxu0 0
          %1533 = vmatpush1.bf16.xpose.msra.mxu0 0
          %1534 = vmatprep.subr.bf16.mxu0 0
          %1535 = vmatpush1.bf16.xpose.msra.mxu0 0
          %1536 = vmatprep.mubr.bf16.mxu0 0
          %1537 = vmatmul.mubr.bf16.gmra.mrb[0].mxu0 %v1384
          %v1538 = vpop.f32.mrb[0].mxu0
          %v1539 = vadd.f32 %v1451, %v1538
          %v1540 = vpop.f32.mrb[0].mxu0
          %v1541 = vpop.f32.mrb[0].mxu0
          %v1542 = vadd.f32 %v1452, %v1541
          %v1543 = vpop.f32.mrb[0].mxu0
          %1544 = vmatprep.mubr.bf16.mxu0 0
          %1545 = vmatmul.mubr.bf16.gmra.mrb[0].mxu0 %v1385
          %v1546 = vpop.f32.mrb[0].mxu0
          %v1547 = vadd.f32 %v1453, %v1546
          %v1548 = vpop.f32.mrb[0].mxu0
          %v1549 = vpop.f32.mrb[0].mxu0
          %v1550 = vadd.f32 %v1454, %v1549
          %v1551 = vpop.f32.mrb[0].mxu0
          %1552 = vdwg.mxu0
          %v1553 = vld [vmem:[#allocation4] sm:$0xff]
          %v1554 = vld [vmem:[#allocation4 + $0x8] sm:$0xff]
          %v1555 = vld [vmem:[#allocation4 + $0x10] sm:$0xff]
          %v1556 = vld [vmem:[#allocation4 + $0x18] sm:$0xff]
          %v1557 = vld [vmem:[#allocation4 + $0x20] sm:$0xff]
          %v1558 = vld [vmem:[#allocation4 + $0x28] sm:$0xff]
          %v1559 = vld [vmem:[#allocation4 + $0x30] sm:$0xff]
          %v1560 = vld [vmem:[#allocation4 + $0x38] sm:$0xff]
          %vm1561 = vcmask 130048
          %v1562 = vsel %vm1561, %v1490, -inf
          %1563 = vmax.xlane.f32.xlu0 %v1562
          %v1564 = vpop.xlane.xlu0 %1563
          %v1565 = vsel %vm1561, %v1493, -inf
          %1566 = vmax.xlane.f32.xlu0 %v1565
          %v1567 = vpop.xlane.xlu0 %1566
          %v1568 = vsel %vm1561, %v1498, -inf
          %1569 = vmax.xlane.f32.xlu0 %v1568
          %v1570 = vpop.xlane.xlu0 %1569
          %v1571 = vsel %vm1561, %v1501, -inf
          %1572 = vmax.xlane.f32.xlu0 %v1571
          %v1573 = vpop.xlane.xlu0 %1572
          %v1574 = vsel %vm1561, %v1539, -inf
          %1575 = vmax.xlane.f32.xlu0 %v1574
          %v1576 = vpop.xlane.xlu0 %1575
          %v1577 = vsel %vm1561, %v1542, -inf
          %1578 = vmax.xlane.f32.xlu0 %v1577
          %v1579 = vpop.xlane.xlu0 %1578
          %v1580 = vsel %vm1561, %v1547, -inf
          %1581 = vmax.xlane.f32.xlu0 %v1580
          %v1582 = vpop.xlane.xlu0 %1581
          %v1583 = vsel %vm1561, %v1550, -inf
          %1584 = vmax.xlane.f32.xlu0 %v1583
          %v1585 = vpop.xlane.xlu0 %1584
          %v1586 = vmax.f32 %v1553, %v1564
          %v1587 = vmax.f32 %v1554, %v1567
          %v1588 = vmax.f32 %v1555, %v1570
          %v1589 = vmax.f32 %v1556, %v1573
          %v1590 = vmax.f32 %v1557, %v1576
          %v1591 = vmax.f32 %v1558, %v1579
          %v1592 = vmax.f32 %v1559, %v1582
          %v1593 = vmax.f32 %v1560, %v1585
          %v1594 = vsub.f32 %v1553, %v1586
          %v1595 = vsub.f32 %v1554, %v1587
          %v1596 = vsub.f32 %v1555, %v1588
          %v1597 = vsub.f32 %v1556, %v1589
          %v1598 = vsub.f32 %v1557, %v1590
          %v1599 = vsub.f32 %v1558, %v1591
          %v1600 = vsub.f32 %v1559, %v1592
          %v1601 = vsub.f32 %v1560, %v1593
          %v1602 = vmul.f32 %v1594, 1.442695
          %v1603 = vpow.pop %v1602
          %v1604 = vmul.f32 %v1595, 1.442695
          %v1605 = vpow.pop %v1604
          %v1606 = vmul.f32 %v1596, 1.442695
          %v1607 = vpow.pop %v1606
          %v1608 = vmul.f32 %v1597, 1.442695
          %v1609 = vpow.pop %v1608
          %v1610 = vmul.f32 %v1598, 1.442695
          %v1611 = vpow.pop %v1610
          %v1612 = vmul.f32 %v1599, 1.442695
          %v1613 = vpow.pop %v1612
          %v1614 = vmul.f32 %v1600, 1.442695
          %v1615 = vpow.pop %v1614
          %v1616 = vmul.f32 %v1601, 1.442695
          %v1617 = vpow.pop %v1616
          %1619 = vset.pattern.permute.xlu0 0
          %1620 = vperm.xlu0 %1619, %v1586
          %v1621 = vpop.permute.xlu0 %1620
          %1624 = vset.pattern.permute.xlu0 0
          %1625 = vperm.xlu0 %1624, %v1587
          %v1626 = vpop.permute.xlu0 %1625
          %1629 = vset.pattern.permute.xlu0 0
          %1630 = vperm.xlu0 %1629, %v1588
          %v1631 = vpop.permute.xlu0 %1630
          %1634 = vset.pattern.permute.xlu0 0
          %1635 = vperm.xlu0 %1634, %v1589
          %v1636 = vpop.permute.xlu0 %1635
          %1639 = vset.pattern.permute.xlu0 0
          %1640 = vperm.xlu0 %1639, %v1590
          %v1641 = vpop.permute.xlu0 %1640
          %1644 = vset.pattern.permute.xlu0 0
          %1645 = vperm.xlu0 %1644, %v1591
          %v1646 = vpop.permute.xlu0 %1645
          %1649 = vset.pattern.permute.xlu0 0
          %1650 = vperm.xlu0 %1649, %v1592
          %v1651 = vpop.permute.xlu0 %1650
          %1654 = vset.pattern.permute.xlu0 0
          %1655 = vperm.xlu0 %1654, %v1593
          %v1656 = vpop.permute.xlu0 %1655
          %v1658 = vsub.f32 %v1490, %v1621
          %v1659 = vsub.f32 %v1493, %v1626
          %v1660 = vsub.f32 %v1498, %v1631
          %v1661 = vsub.f32 %v1501, %v1636
          %v1662 = vsub.f32 %v1539, %v1641
          %v1663 = vsub.f32 %v1542, %v1646
          %v1664 = vsub.f32 %v1547, %v1651
          %v1665 = vsub.f32 %v1550, %v1656
          %v1666 = vmul.f32 %v1658, 1.442695
          %v1667 = vpow.pop %v1666
          %v1668 = vmul.f32 %v1659, 1.442695
          %v1669 = vpow.pop %v1668
          %v1670 = vmul.f32 %v1660, 1.442695
          %v1671 = vpow.pop %v1670
          %v1672 = vmul.f32 %v1661, 1.442695
          %v1673 = vpow.pop %v1672
          %v1674 = vmul.f32 %v1662, 1.442695
          %v1675 = vpow.pop %v1674
          %v1676 = vmul.f32 %v1663, 1.442695
          %v1677 = vpow.pop %v1676
          %v1678 = vmul.f32 %v1664, 1.442695
          %v1679 = vpow.pop %v1678
          %v1680 = vmul.f32 %v1665, 1.442695
          %v1681 = vpow.pop %v1680
          %v1682 = vld [vmem:[#allocation5] sm:$0xff]
          %v1683 = vld [vmem:[#allocation5 + $0x8] sm:$0xff]
          %v1684 = vld [vmem:[#allocation5 + $0x10] sm:$0xff]
          %v1685 = vld [vmem:[#allocation5 + $0x18] sm:$0xff]
          %v1686 = vld [vmem:[#allocation5 + $0x20] sm:$0xff]
          %v1687 = vld [vmem:[#allocation5 + $0x28] sm:$0xff]
          %v1688 = vld [vmem:[#allocation5 + $0x30] sm:$0xff]
          %v1689 = vld [vmem:[#allocation5 + $0x38] sm:$0xff]
          %v1690 = vmul.f32 %v1603, %v1682
          %v1691 = vmul.f32 %v1605, %v1683
          %v1692 = vmul.f32 %v1607, %v1684
          %v1693 = vmul.f32 %v1609, %v1685
          %v1694 = vmul.f32 %v1611, %v1686
          %v1695 = vmul.f32 %v1613, %v1687
          %v1696 = vmul.f32 %v1615, %v1688
          %v1697 = vmul.f32 %v1617, %v1689
          %v1698 = vsel %vm1561, %v1667, 0.0
          %1699 = vadd.xlane.f32.xlu0 %v1698
          %v1700 = vpop.xlane.xlu0 %1699
          %v1701 = vsel %vm1561, %v1669, 0.0
          %1702 = vadd.xlane.f32.xlu0 %v1701
          %v1703 = vpop.xlane.xlu0 %1702
          %v1704 = vsel %vm1561, %v1671, 0.0
          %1705 = vadd.xlane.f32.xlu0 %v1704
          %v1706 = vpop.xlane.xlu0 %1705
          %v1707 = vsel %vm1561, %v1673, 0.0
          %1708 = vadd.xlane.f32.xlu0 %v1707
          %v1709 = vpop.xlane.xlu0 %1708
          %v1710 = vsel %vm1561, %v1675, 0.0
          %1711 = vadd.xlane.f32.xlu0 %v1710
          %v1712 = vpop.xlane.xlu0 %1711
          %v1713 = vsel %vm1561, %v1677, 0.0
          %1714 = vadd.xlane.f32.xlu0 %v1713
          %v1715 = vpop.xlane.xlu0 %1714
          %v1716 = vsel %vm1561, %v1679, 0.0
          %1717 = vadd.xlane.f32.xlu0 %v1716
          %v1718 = vpop.xlane.xlu0 %1717
          %v1719 = vsel %vm1561, %v1681, 0.0
          %1720 = vadd.xlane.f32.xlu0 %v1719
          %v1721 = vpop.xlane.xlu0 %1720
          %v1722 = vadd.f32 %v1690, %v1700
          %v1723 = vadd.f32 %v1691, %v1703
          %v1724 = vadd.f32 %v1692, %v1706
          %v1725 = vadd.f32 %v1693, %v1709
          %v1726 = vadd.f32 %v1694, %v1712
          %v1727 = vadd.f32 %v1695, %v1715
          %v1728 = vadd.f32 %v1696, %v1718
          %v1729 = vadd.f32 %v1697, %v1721
          %1730 = vst.msk [vmem:[#allocation5] sm:$0xff] %vm1402, %v1722
          %1731 = vst.msk [vmem:[#allocation5 + $0x8] sm:$0xff] %vm1402, %v1723
          %1732 = vst.msk [vmem:[#allocation5 + $0x10] sm:$0xff] %vm1402, %v1724
          %1733 = vst.msk [vmem:[#allocation5 + $0x18] sm:$0xff] %vm1402, %v1725
          %1734 = vst.msk [vmem:[#allocation5 + $0x20] sm:$0xff] %vm1402, %v1726
          %1735 = vst.msk [vmem:[#allocation5 + $0x28] sm:$0xff] %vm1402, %v1727
          %1736 = vst.msk [vmem:[#allocation5 + $0x30] sm:$0xff] %vm1402, %v1728
          %1737 = vst.msk [vmem:[#allocation5 + $0x38] sm:$0xff] %vm1402, %v1729
          %v1738 = vld [vmem:[#allocation6] sm:$0xff]
          %v1739 = vld [vmem:[#allocation6 + $0x8] sm:$0xff]
          %v1740 = vld [vmem:[#allocation6 + $0x10] sm:$0xff]
          %v1741 = vld [vmem:[#allocation6 + $0x18] sm:$0xff]
          %v1742 = vld [vmem:[#allocation6 + $0x20] sm:$0xff]
          %v1743 = vld [vmem:[#allocation6 + $0x28] sm:$0xff]
          %v1744 = vld [vmem:[#allocation6 + $0x30] sm:$0xff]
          %v1745 = vld [vmem:[#allocation6 + $0x38] sm:$0xff]
          %1747 = vset.pattern.permute.xlu0 0
          %1748 = vperm.xlu0 %1747, %v1603
          %v1749 = vpop.permute.xlu0 %1748
          %1752 = vset.pattern.permute.xlu0 0
          %1753 = vperm.xlu0 %1752, %v1605
          %v1754 = vpop.permute.xlu0 %1753
          %1757 = vset.pattern.permute.xlu0 0
          %1758 = vperm.xlu0 %1757, %v1607
          %v1759 = vpop.permute.xlu0 %1758
          %1762 = vset.pattern.permute.xlu0 0
          %1763 = vperm.xlu0 %1762, %v1609
          %v1764 = vpop.permute.xlu0 %1763
          %1767 = vset.pattern.permute.xlu0 0
          %1768 = vperm.xlu0 %1767, %v1611
          %v1769 = vpop.permute.xlu0 %1768
          %1772 = vset.pattern.permute.xlu0 0
          %1773 = vperm.xlu0 %1772, %v1613
          %v1774 = vpop.permute.xlu0 %1773
          %1777 = vset.pattern.permute.xlu0 0
          %1778 = vperm.xlu0 %1777, %v1615
          %v1779 = vpop.permute.xlu0 %1778
          %1782 = vset.pattern.permute.xlu0 0
          %1783 = vperm.xlu0 %1782, %v1617
          %v1784 = vpop.permute.xlu0 %1783
          %v1786 = vmul.f32 %v1749, %v1738
          %v1787 = vmul.f32 %v1754, %v1739
          %v1788 = vmul.f32 %v1759, %v1740
          %v1789 = vmul.f32 %v1764, %v1741
          %v1790 = vmul.f32 %v1769, %v1742
          %v1791 = vmul.f32 %v1774, %v1743
          %v1792 = vmul.f32 %v1779, %v1744
          %v1793 = vmul.f32 %v1784, %v1745
          %v1794 = vpack.c.bf16 %v1669, %v1667
          %v1795 = vpack.c.bf16 %v1673, %v1671
          %v1796 = vpack.c.bf16 %v1677, %v1675
          %v1797 = vpack.c.bf16 %v1681, %v1679
          %v1799 = vsel %vm1561, %v1794, 0
          %v1802 = vsel %vm1561, %v1795, 0
          %1804 = vmatprep.subr.bf16.mxu0 0
          %1805 = vmatpush1.bf16.msra.mxu0 %v1442
          %1806 = vmatprep.subr.bf16.mxu0 0
          %1807 = vmatpush1.bf16.msra.mxu0 0
          %1808 = vmatprep.subr.bf16.mxu0 0
          %1809 = vmatpush1.bf16.msra.mxu0 0
          %1810 = vmatprep.subr.bf16.mxu0 0
          %1811 = vmatpush1.bf16.msra.mxu0 0
          %1812 = vmatprep.subr.bf16.mxu0 0
          %1813 = vmatpush1.bf16.msra.mxu0 0
          %1814 = vmatprep.subr.bf16.mxu0 0
          %1815 = vmatpush1.bf16.msra.mxu0 0
          %1816 = vmatprep.subr.bf16.mxu0 0
          %1817 = vmatpush1.bf16.msra.mxu0 0
          %1818 = vmatprep.subr.bf16.mxu0 0
          %1819 = vmatpush1.bf16.msra.mxu0 0
          %1820 = vmatprep.subr.bf16.mxu0 0
          %1821 = vmatpush1.bf16.msra.mxu0 0
          %1822 = vmatprep.subr.bf16.mxu0 0
          %1823 = vmatpush1.bf16.msra.mxu0 0
          %1824 = vmatprep.subr.bf16.mxu0 0
          %1825 = vmatpush1.bf16.msra.mxu0 0
          %1826 = vmatprep.subr.bf16.mxu0 0
          %1827 = vmatpush1.bf16.msra.mxu0 0
          %1828 = vmatprep.subr.bf16.mxu0 0
          %1829 = vmatpush1.bf16.msra.mxu0 0
          %1830 = vmatprep.subr.bf16.mxu0 0
          %1831 = vmatpush1.bf16.msra.mxu0 0
          %1832 = vmatprep.subr.bf16.mxu0 0
          %1833 = vmatpush1.bf16.msra.mxu0 0
          %1834 = vmatprep.subr.bf16.mxu0 0
          %1835 = vmatpush1.bf16.msra.mxu0 0
          %1836 = vmatprep.mubr.bf16.mxu0 0
          %1837 = vmatmul.mubr.bf16.gmra.mrb[0].mxu0 %v1799
          %v1838 = vpop.f32.mrb[0].mxu0
          %v1839 = vadd.f32 0.0, %v1838
          %v1840 = vpop.f32.mrb[0].mxu0
          %v1841 = vpop.f32.mrb[0].mxu0
          %v1842 = vadd.f32 0.0, %v1841
          %v1843 = vpop.f32.mrb[0].mxu0
          %1844 = vmatprep.mubr.bf16.mxu0 0
          %1845 = vmatmul.mubr.bf16.gmra.mrb[0].mxu0 %v1802
          %v1846 = vpop.f32.mrb[0].mxu0
          %v1847 = vadd.f32 0.0, %v1846
          %v1848 = vpop.f32.mrb[0].mxu0
          %v1849 = vpop.f32.mrb[0].mxu0
          %v1850 = vadd.f32 0.0, %v1849
          %v1851 = vpop.f32.mrb[0].mxu0
          %1852 = vdwg.mxu0
          %v1854 = vsel %vm1561, %v1796, 0
          %v1857 = vsel %vm1561, %v1797, 0
          %1859 = vmatprep.subr.bf16.mxu0 0
          %1860 = vmatpush1.bf16.msra.mxu0 %v1443
          %1861 = vmatprep.subr.bf16.mxu0 0
          %1862 = vmatpush1.bf16.msra.mxu0 0
          %1863 = vmatprep.subr.bf16.mxu0 0
          %1864 = vmatpush1.bf16.msra.mxu0 0
          %1865 = vmatprep.subr.bf16.mxu0 0
          %1866 = vmatpush1.bf16.msra.mxu0 0
          %1867 = vmatprep.subr.bf16.mxu0 0
          %1868 = vmatpush1.bf16.msra.mxu0 0
          %1869 = vmatprep.subr.bf16.mxu0 0
          %1870 = vmatpush1.bf16.msra.mxu0 0
          %1871 = vmatprep.subr.bf16.mxu0 0
          %1872 = vmatpush1.bf16.msra.mxu0 0
          %1873 = vmatprep.subr.bf16.mxu0 0
          %1874 = vmatpush1.bf16.msra.mxu0 0
          %1875 = vmatprep.subr.bf16.mxu0 0
          %1876 = vmatpush1.bf16.msra.mxu0 0
          %1877 = vmatprep.subr.bf16.mxu0 0
          %1878 = vmatpush1.bf16.msra.mxu0 0
          %1879 = vmatprep.subr.bf16.mxu0 0
          %1880 = vmatpush1.bf16.msra.mxu0 0
          %1881 = vmatprep.subr.bf16.mxu0 0
          %1882 = vmatpush1.bf16.msra.mxu0 0
          %1883 = vmatprep.subr.bf16.mxu0 0
          %1884 = vmatpush1.bf16.msra.mxu0 0
          %1885 = vmatprep.subr.bf16.mxu0 0
          %1886 = vmatpush1.bf16.msra.mxu0 0
          %1887 = vmatprep.subr.bf16.mxu0 0
          %1888 = vmatpush1.bf16.msra.mxu0 0
          %1889 = vmatprep.subr.bf16.mxu0 0
          %1890 = vmatpush1.bf16.msra.mxu0 0
          %1891 = vmatprep.mubr.bf16.mxu0 0
          %1892 = vmatmul.mubr.bf16.gmra.mrb[0].mxu0 %v1854
          %v1893 = vpop.f32.mrb[0].mxu0
          %v1894 = vadd.f32 0.0, %v1893
          %v1895 = vpop.f32.mrb[0].mxu0
          %v1896 = vpop.f32.mrb[0].mxu0
          %v1897 = vadd.f32 0.0, %v1896
          %v1898 = vpop.f32.mrb[0].mxu0
          %1899 = vmatprep.mubr.bf16.mxu0 0
          %1900 = vmatmul.mubr.bf16.gmra.mrb[0].mxu0 %v1857
          %v1901 = vpop.f32.mrb[0].mxu0
          %v1902 = vadd.f32 0.0, %v1901
          %v1903 = vpop.f32.mrb[0].mxu0
          %v1904 = vpop.f32.mrb[0].mxu0
          %v1905 = vadd.f32 0.0, %v1904
          %v1906 = vpop.f32.mrb[0].mxu0
          %1907 = vdwg.mxu0
          %v1908 = vadd.f32 %v1786, %v1839
          %v1909 = vadd.f32 %v1787, %v1842
          %v1910 = vadd.f32 %v1788, %v1847
          %v1911 = vadd.f32 %v1789, %v1850
          %v1912 = vadd.f32 %v1790, %v1894
          %v1913 = vadd.f32 %v1791, %v1897
          %v1914 = vadd.f32 %v1792, %v1902
          %v1915 = vadd.f32 %v1793, %v1905
          %1916 = vst [vmem:[#allocation6] sm:$0xff] %v1908
          %1917 = vst [vmem:[#allocation6 + $0x8] sm:$0xff] %v1909
          %1918 = vst [vmem:[#allocation6 + $0x10] sm:$0xff] %v1910
          %1919 = vst [vmem:[#allocation6 + $0x18] sm:$0xff] %v1911
          %1920 = vst [vmem:[#allocation6 + $0x20] sm:$0xff] %v1912
          %1921 = vst [vmem:[#allocation6 + $0x28] sm:$0xff] %v1913
          %1922 = vst [vmem:[#allocation6 + $0x30] sm:$0xff] %v1914
          %1923 = vst [vmem:[#allocation6 + $0x38] sm:$0xff] %v1915
          %1924 = vst.msk [vmem:[#allocation4] sm:$0xff] %vm1402, %v1586
          %1925 = vst.msk [vmem:[#allocation4 + $0x8] sm:$0xff] %vm1402, %v1587
          %1926 = vst.msk [vmem:[#allocation4 + $0x10] sm:$0xff] %vm1402, %v1588
          %1927 = vst.msk [vmem:[#allocation4 + $0x18] sm:$0xff] %vm1402, %v1589
          %1928 = vst.msk [vmem:[#allocation4 + $0x20] sm:$0xff] %vm1402, %v1590
          %1929 = vst.msk [vmem:[#allocation4 + $0x28] sm:$0xff] %vm1402, %v1591
          %1930 = vst.msk [vmem:[#allocation4 + $0x30] sm:$0xff] %vm1402, %v1592
          %1931 = vst.msk [vmem:[#allocation4 + $0x38] sm:$0xff] %vm1402, %v1593
        $region97: #{fwd.2} parent=55 // loop_footer
          %s1432 = sadd.s32 1, %s1428
        $region98: #{fwd.2} parent=55 // loop_footer_branch
          %1427 = sbr.rel target = $region94
        $region99: #{fwd.2} parent=55 // loop_exit
          _
        %v1932 = vld [vmem:[#allocation6] sm:$0xff]
        %v1933 = vld [vmem:[#allocation6 + $0x8] sm:$0xff]
        %v1934 = vld [vmem:[#allocation6 + $0x10] sm:$0xff]
        %v1935 = vld [vmem:[#allocation6 + $0x18] sm:$0xff]
        %v1936 = vld [vmem:[#allocation6 + $0x20] sm:$0xff]
        %v1937 = vld [vmem:[#allocation6 + $0x28] sm:$0xff]
        %v1938 = vld [vmem:[#allocation6 + $0x30] sm:$0xff]
        %v1939 = vld [vmem:[#allocation6 + $0x38] sm:$0xff]
        %v1940 = vld [vmem:[#allocation5] sm:$0xff]
        %v1941 = vld [vmem:[#allocation5 + $0x8] sm:$0xff]
        %v1942 = vld [vmem:[#allocation5 + $0x10] sm:$0xff]
        %v1943 = vld [vmem:[#allocation5 + $0x18] sm:$0xff]
        %v1944 = vld [vmem:[#allocation5 + $0x20] sm:$0xff]
        %v1945 = vld [vmem:[#allocation5 + $0x28] sm:$0xff]
        %v1946 = vld [vmem:[#allocation5 + $0x30] sm:$0xff]
        %v1947 = vld [vmem:[#allocation5 + $0x38] sm:$0xff]
        %v1948 = vrcp.pop %v1940
        %v1949 = vrcp.pop %v1941
        %v1950 = vrcp.pop %v1942
        %v1951 = vrcp.pop %v1943
        %v1952 = vrcp.pop %v1944
        %v1953 = vrcp.pop %v1945
        %v1954 = vrcp.pop %v1946
        %v1955 = vrcp.pop %v1947
        %1957 = vset.pattern.permute.xlu0 0
        %1958 = vperm.xlu0 %1957, %v1948
        %v1959 = vpop.permute.xlu0 %1958
        %1962 = vset.pattern.permute.xlu0 0
        %1963 = vperm.xlu0 %1962, %v1949
        %v1964 = vpop.permute.xlu0 %1963
        %1967 = vset.pattern.permute.xlu0 0
        %1968 = vperm.xlu0 %1967, %v1950
        %v1969 = vpop.permute.xlu0 %1968
        %1972 = vset.pattern.permute.xlu0 0
        %1973 = vperm.xlu0 %1972, %v1951
        %v1974 = vpop.permute.xlu0 %1973
        %1977 = vset.pattern.permute.xlu0 0
        %1978 = vperm.xlu0 %1977, %v1952
        %v1979 = vpop.permute.xlu0 %1978
        %1982 = vset.pattern.permute.xlu0 0
        %1983 = vperm.xlu0 %1982, %v1953
        %v1984 = vpop.permute.xlu0 %1983
        %1987 = vset.pattern.permute.xlu0 0
        %1988 = vperm.xlu0 %1987, %v1954
        %v1989 = vpop.permute.xlu0 %1988
        %1992 = vset.pattern.permute.xlu0 0
        %1993 = vperm.xlu0 %1992, %v1955
        %v1994 = vpop.permute.xlu0 %1993
        %v1996 = vmul.f32 %v1932, %v1959
        %v1997 = vmul.f32 %v1933, %v1964
        %v1998 = vmul.f32 %v1934, %v1969
        %v1999 = vmul.f32 %v1935, %v1974
        %v2000 = vmul.f32 %v1936, %v1979
        %v2001 = vmul.f32 %v1937, %v1984
        %v2002 = vmul.f32 %v1938, %v1989
        %v2003 = vmul.f32 %v1939, %v1994
        %v2004 = vmul.f32 %v1996, %v1314
        %v2005 = vmul.f32 %v1997, %v1315
        %v2006 = vmul.f32 %v1998, %v1316
        %v2007 = vmul.f32 %v1999, %v1317
        %v2008 = vmul.f32 %v2000, %v1318
        %v2009 = vmul.f32 %v2001, %v1319
        %v2010 = vmul.f32 %v2002, %v1320
        %v2011 = vmul.f32 %v2003, %v1321
        %v2012 = vpack.c.bf16 %v2005, %v2004
        %v2013 = vpack.c.bf16 %v2007, %v2006
        %v2014 = vpack.c.bf16 %v2009, %v2008
        %v2015 = vpack.c.bf16 %v2011, %v2010
        %v2016 = vld [vmem:[#allocation16] sm:$0xf]
        %v2017 = vld [vmem:[#allocation16 + $0x4] sm:$0xf]
        %v2018 = vld [vmem:[#allocation16 + $0x8] sm:$0xf]
        %v2019 = vld [vmem:[#allocation16 + $0xc] sm:$0xf]
        %v2020 = vld [vmem:[#allocation16 + $0x10] sm:$0xf]
        %v2021 = vld [vmem:[#allocation16 + $0x14] sm:$0xf]
        %v2022 = vld [vmem:[#allocation16 + $0x18] sm:$0xf]
        %v2023 = vld [vmem:[#allocation16 + $0x1c] sm:$0xf]
        %v2024 = vld [vmem:[#allocation16 + $0x20] sm:$0xf]
        %v2025 = vld [vmem:[#allocation16 + $0x24] sm:$0xf]
        %v2026 = vld [vmem:[#allocation16 + $0x28] sm:$0xf]
        %v2027 = vld [vmem:[#allocation16 + $0x2c] sm:$0xf]
        %v2028 = vld [vmem:[#allocation16 + $0x30] sm:$0xf]
        %v2029 = vld [vmem:[#allocation16 + $0x34] sm:$0xf]
        %v2030 = vld [vmem:[#allocation16 + $0x38] sm:$0xf]
        %v2031 = vld [vmem:[#allocation16 + $0x3c] sm:$0xf]
        %v2048 = vunpack.c.l.b16 %v2016
        %v2049 = vunpack.c.l.b16 %v2017
        %v2050 = vunpack.c.l.b16 %v2018
        %v2051 = vunpack.c.l.b16 %v2019
        %v2052 = vunpack.c.l.b16 %v2020
        %v2053 = vunpack.c.l.b16 %v2021
        %v2054 = vunpack.c.l.b16 %v2022
        %v2055 = vunpack.c.l.b16 %v2023
        %v2056 = vunpack.c.l.b16 %v2024
        %v2057 = vunpack.c.l.b16 %v2025
        %v2058 = vunpack.c.l.b16 %v2026
        %v2059 = vunpack.c.l.b16 %v2027
        %v2060 = vunpack.c.l.b16 %v2028
        %v2061 = vunpack.c.l.b16 %v2029
        %v2062 = vunpack.c.l.b16 %v2030
        %v2063 = vunpack.c.l.b16 %v2031
        %v2064 = vpack.c.b16 %v2049, %v2048
        %v2065 = vpack.c.b16 %v2051, %v2050
        %v2066 = vpack.c.b16 %v2053, %v2052
        %v2067 = vpack.c.b16 %v2055, %v2054
        %v2068 = vpack.c.b16 %v2057, %v2056
        %v2069 = vpack.c.b16 %v2059, %v2058
        %v2070 = vpack.c.b16 %v2061, %v2060
        %v2071 = vpack.c.b16 %v2063, %v2062
        %2080 = vmatprep.subr.bf16.mxu0 0
        %2081 = vmatpush1.bf16.msra.mxu0 %v2064
        %2082 = vmatprep.subr.bf16.mxu0 0
        %2083 = vmatpush1.bf16.msra.mxu0 %v2065
        %2084 = vmatprep.subr.bf16.mxu0 0
        %2085 = vmatpush1.bf16.msra.mxu0 %v2066
        %2086 = vmatprep.subr.bf16.mxu0 0
        %2087 = vmatpush1.bf16.msra.mxu0 %v2067
        %2088 = vmatprep.subr.bf16.mxu0 0
        %2089 = vmatpush1.bf16.msra.mxu0 %v2068
        %2090 = vmatprep.subr.bf16.mxu0 0
        %2091 = vmatpush1.bf16.msra.mxu0 %v2069
        %2092 = vmatprep.subr.bf16.mxu0 0
        %2093 = vmatpush1.bf16.msra.mxu0 %v2070
        %2094 = vmatprep.subr.bf16.mxu0 0
        %2095 = vmatpush1.bf16.msra.mxu0 %v2071
        %2096 = vmatprep.subr.bf16.mxu0 0
        %2097 = vmatpush1.bf16.msra.mxu0 0
        %2098 = vmatprep.subr.bf16.mxu0 0
        %2099 = vmatpush1.bf16.msra.mxu0 0
        %2100 = vmatprep.subr.bf16.mxu0 0
        %2101 = vmatpush1.bf16.msra.mxu0 0
        %2102 = vmatprep.subr.bf16.mxu0 0
        %2103 = vmatpush1.bf16.msra.mxu0 0
        %2104 = vmatprep.subr.bf16.mxu0 0
        %2105 = vmatpush1.bf16.msra.mxu0 0
        %2106 = vmatprep.subr.bf16.mxu0 0
        %2107 = vmatpush1.bf16.msra.mxu0 0
        %2108 = vmatprep.subr.bf16.mxu0 0
        %2109 = vmatpush1.bf16.msra.mxu0 0
        %2110 = vmatprep.subr.bf16.mxu0 0
        %2111 = vmatpush1.bf16.msra.mxu0 0
        %2112 = vmatprep.mubr.bf16.mxu0 0
        %2113 = vmatmul.mubr.bf16.gmra.mrb[0].mxu0 %v2012
        %v2114 = vpop.f32.mrb[0].mxu0
        %v2115 = vadd.f32 0.0, %v2114
        %v2116 = vpop.f32.mrb[0].mxu0
        %v2117 = vpop.f32.mrb[0].mxu0
        %v2118 = vadd.f32 0.0, %v2117
        %v2119 = vpop.f32.mrb[0].mxu0
        %2120 = vmatprep.mubr.bf16.mxu0 0
        %2121 = vmatmul.mubr.bf16.gmra.mrb[0].mxu0 %v2013
        %v2122 = vpop.f32.mrb[0].mxu0
        %v2123 = vadd.f32 0.0, %v2122
        %v2124 = vpop.f32.mrb[0].mxu0
        %v2125 = vpop.f32.mrb[0].mxu0
        %v2126 = vadd.f32 0.0, %v2125
        %v2127 = vpop.f32.mrb[0].mxu0
        %2128 = vmatprep.mubr.bf16.mxu0 0
        %2129 = vmatmul.mubr.bf16.gmra.mrb[0].mxu0 %v2014
        %v2130 = vpop.f32.mrb[0].mxu0
        %v2131 = vadd.f32 0.0, %v2130
        %v2132 = vpop.f32.mrb[0].mxu0
        %v2133 = vpop.f32.mrb[0].mxu0
        %v2134 = vadd.f32 0.0, %v2133
        %v2135 = vpop.f32.mrb[0].mxu0
        %2136 = vmatprep.mubr.bf16.mxu0 0
        %2137 = vmatmul.mubr.bf16.gmra.mrb[0].mxu0 %v2015
        %v2138 = vpop.f32.mrb[0].mxu0
        %v2139 = vadd.f32 0.0, %v2138
        %v2140 = vpop.f32.mrb[0].mxu0
        %v2141 = vpop.f32.mrb[0].mxu0
        %v2142 = vadd.f32 0.0, %v2141
        %v2143 = vpop.f32.mrb[0].mxu0
        %2144 = vdwg.mxu0
        %v2145 = vadd.f32 %v1126, %v2115
        %v2146 = vadd.f32 %v1130, %v2118
        %v2147 = vadd.f32 %v1136, %v2123
        %v2148 = vadd.f32 %v1140, %v2126
        %v2149 = vadd.f32 %v1146, %v2131
        %v2150 = vadd.f32 %v1150, %v2134
        %v2151 = vadd.f32 %v1156, %v2139
        %v2152 = vadd.f32 %v1160, %v2142
        %v2153 = vld [vmem:[#allocation12 + $0x6] sm:$0x1]
        %v2155 = vlaneseq
        %v2156 = vshrl.u32 %v2155, 7
        %v2157 = vsub.s32 0, %v2156
        %v2158 = vrot.slane %v2153, %v2157
        %v2160 = vadd.f32 %v2145, %v2158
        %v2161 = vadd.f32 %v2146, %v2158
        %v2162 = vadd.f32 %v2147, %v2158
        %v2163 = vadd.f32 %v2148, %v2158
        %v2164 = vadd.f32 %v2149, %v2158
        %v2165 = vadd.f32 %v2150, %v2158
        %v2166 = vadd.f32 %v2151, %v2158
        %v2167 = vadd.f32 %v2152, %v2158
        %v2168 = vxor.u32 %v2160, 2147483648
        %v2169 = vxor.u32 %v2161, 2147483648
        %v2170 = vxor.u32 %v2162, 2147483648
        %v2171 = vxor.u32 %v2163, 2147483648
        %v2172 = vxor.u32 %v2164, 2147483648
        %v2173 = vxor.u32 %v2165, 2147483648
        %v2174 = vxor.u32 %v2166, 2147483648
        %v2175 = vxor.u32 %v2167, 2147483648
        %v2176 = vmul.f32 %v2168, 1.442695
        %v2177 = vpow.pop %v2176
        %v2178 = vmul.f32 %v2169, 1.442695
        %v2179 = vpow.pop %v2178
        %v2180 = vmul.f32 %v2170, 1.442695
        %v2181 = vpow.pop %v2180
        %v2182 = vmul.f32 %v2171, 1.442695
        %v2183 = vpow.pop %v2182
        %v2184 = vmul.f32 %v2172, 1.442695
        %v2185 = vpow.pop %v2184
        %v2186 = vmul.f32 %v2173, 1.442695
        %v2187 = vpow.pop %v2186
        %v2188 = vmul.f32 %v2174, 1.442695
        %v2189 = vpow.pop %v2188
        %v2190 = vmul.f32 %v2175, 1.442695
        %v2191 = vpow.pop %v2190
        %v2192 = vadd.f32 %v2177, 1.0
        %v2193 = vadd.f32 %v2179, 1.0
        %v2194 = vadd.f32 %v2181, 1.0
        %v2195 = vadd.f32 %v2183, 1.0
        %v2196 = vadd.f32 %v2185, 1.0
        %v2197 = vadd.f32 %v2187, 1.0
        %v2198 = vadd.f32 %v2189, 1.0
        %v2199 = vadd.f32 %v2191, 1.0
        %v2200 = vrcp.pop %v2192
        %v2201 = vmul.f32 1.0, %v2200
        %v2202 = vrcp.pop %v2193
        %v2203 = vmul.f32 1.0, %v2202
        %v2204 = vrcp.pop %v2194
        %v2205 = vmul.f32 1.0, %v2204
        %v2206 = vrcp.pop %v2195
        %v2207 = vmul.f32 1.0, %v2206
        %v2208 = vrcp.pop %v2196
        %v2209 = vmul.f32 1.0, %v2208
        %v2210 = vrcp.pop %v2197
        %v2211 = vmul.f32 1.0, %v2210
        %v2212 = vrcp.pop %v2198
        %v2213 = vmul.f32 1.0, %v2212
        %v2214 = vrcp.pop %v2199
        %v2215 = vmul.f32 1.0, %v2214
        %v2216 = vmul.f32 %v2160, %v2201
        %v2217 = vmul.f32 %v2161, %v2203
        %v2218 = vmul.f32 %v2162, %v2205
        %v2219 = vmul.f32 %v2163, %v2207
        %v2220 = vmul.f32 %v2164, %v2209
        %v2221 = vmul.f32 %v2165, %v2211
        %v2222 = vmul.f32 %v2166, %v2213
        %v2223 = vmul.f32 %v2167, %v2215
        %v2224 = vsub.f32 %v2216, %v499
        %v2225 = vsub.f32 %v2217, %v500
        %v2226 = vsub.f32 %v2218, %v501
        %v2227 = vsub.f32 %v2219, %v502
        %v2228 = vsub.f32 %v2220, %v503
        %v2229 = vsub.f32 %v2221, %v504
        %v2230 = vsub.f32 %v2222, %v505
        %v2231 = vsub.f32 %v2223, %v506
        %v2232 = vmul.f32 %v1195, %v2224
        %v2233 = vmul.f32 %v1197, %v2225
        %v2234 = vmul.f32 %v1199, %v2226
        %v2235 = vmul.f32 %v1201, %v2227
        %v2236 = vmul.f32 %v1203, %v2228
        %v2237 = vmul.f32 %v1205, %v2229
        %v2238 = vmul.f32 %v1207, %v2230
        %v2239 = vmul.f32 %v1209, %v2231
        %v2240 = vadd.f32 %v499, %v2232
        %v2241 = vadd.f32 %v500, %v2233
        %v2242 = vadd.f32 %v501, %v2234
        %v2243 = vadd.f32 %v502, %v2235
        %v2244 = vadd.f32 %v503, %v2236
        %v2245 = vadd.f32 %v504, %v2237
        %v2246 = vadd.f32 %v505, %v2238
        %v2247 = vadd.f32 %v506, %v2239
        %v2248 = vld [vmem:[#allocation12 + $0xb] sm:$0x1]
        %v2249 = vld [vmem:[#allocation12 + $0xc] sm:$0x1]
        %2250 = vadd.xlane.f32.xlu0 %v2240
        %v2251 = vpop.xlane.xlu0 %2250
        %2252 = vadd.xlane.f32.xlu0 %v2241
        %v2253 = vpop.xlane.xlu0 %2252
        %2254 = vadd.xlane.f32.xlu0 %v2242
        %v2255 = vpop.xlane.xlu0 %2254
        %2256 = vadd.xlane.f32.xlu0 %v2243
        %v2257 = vpop.xlane.xlu0 %2256
        %2258 = vadd.xlane.f32.xlu0 %v2244
        %v2259 = vpop.xlane.xlu0 %2258
        %2260 = vadd.xlane.f32.xlu0 %v2245
        %v2261 = vpop.xlane.xlu0 %2260
        %2262 = vadd.xlane.f32.xlu0 %v2246
        %v2263 = vpop.xlane.xlu0 %2262
        %2264 = vadd.xlane.f32.xlu0 %v2247
        %v2265 = vpop.xlane.xlu0 %2264
        %v2266 = vmul.f32 %v2251, 0.03125
        %v2267 = vmul.f32 %v2253, 0.03125
        %v2268 = vmul.f32 %v2255, 0.03125
        %v2269 = vmul.f32 %v2257, 0.03125
        %v2270 = vmul.f32 %v2259, 0.03125
        %v2271 = vmul.f32 %v2261, 0.03125
        %v2272 = vmul.f32 %v2263, 0.03125
        %v2273 = vmul.f32 %v2265, 0.03125
        %v2274 = vsub.f32 %v2240, %v2266
        %v2275 = vsub.f32 %v2241, %v2267
        %v2276 = vsub.f32 %v2242, %v2268
        %v2277 = vsub.f32 %v2243, %v2269
        %v2278 = vsub.f32 %v2244, %v2270
        %v2279 = vsub.f32 %v2245, %v2271
        %v2280 = vsub.f32 %v2246, %v2272
        %v2281 = vsub.f32 %v2247, %v2273
        %v2282 = vsel %vm498, %v2274, 0.0
        %v2283 = vsel %vm498, %v2275, 0.0
        %v2284 = vsel %vm498, %v2276, 0.0
        %v2285 = vsel %vm498, %v2277, 0.0
        %v2286 = vsel %vm498, %v2278, 0.0
        %v2287 = vsel %vm498, %v2279, 0.0
        %v2288 = vsel %vm498, %v2280, 0.0
        %v2289 = vsel %vm498, %v2281, 0.0
        %v2290 = vmul.f32 %v2282, %v2282
        %v2291 = vmul.f32 %v2283, %v2283
        %v2292 = vmul.f32 %v2284, %v2284
        %v2293 = vmul.f32 %v2285, %v2285
        %v2294 = vmul.f32 %v2286, %v2286
        %v2295 = vmul.f32 %v2287, %v2287
        %v2296 = vmul.f32 %v2288, %v2288
        %v2297 = vmul.f32 %v2289, %v2289
        %2298 = vadd.xlane.f32.xlu0 %v2290
        %v2299 = vpop.xlane.xlu0 %2298
        %2300 = vadd.xlane.f32.xlu0 %v2291
        %v2301 = vpop.xlane.xlu0 %2300
        %2302 = vadd.xlane.f32.xlu0 %v2292
        %v2303 = vpop.xlane.xlu0 %2302
        %2304 = vadd.xlane.f32.xlu0 %v2293
        %v2305 = vpop.xlane.xlu0 %2304
        %2306 = vadd.xlane.f32.xlu0 %v2294
        %v2307 = vpop.xlane.xlu0 %2306
        %2308 = vadd.xlane.f32.xlu0 %v2295
        %v2309 = vpop.xlane.xlu0 %2308
        %2310 = vadd.xlane.f32.xlu0 %v2296
        %v2311 = vpop.xlane.xlu0 %2310
        %2312 = vadd.xlane.f32.xlu0 %v2297
        %v2313 = vpop.xlane.xlu0 %2312
        %v2314 = vmul.f32 %v2299, 0.03125
        %v2315 = vmul.f32 %v2301, 0.03125
        %v2316 = vmul.f32 %v2303, 0.03125
        %v2317 = vmul.f32 %v2305, 0.03125
        %v2318 = vmul.f32 %v2307, 0.03125
        %v2319 = vmul.f32 %v2309, 0.03125
        %v2320 = vmul.f32 %v2311, 0.03125
        %v2321 = vmul.f32 %v2313, 0.03125
        %v2322 = vadd.f32 %v2314, 1e-05
        %v2323 = vadd.f32 %v2315, 1e-05
        %v2324 = vadd.f32 %v2316, 1e-05
        %v2325 = vadd.f32 %v2317, 1e-05
        %v2326 = vadd.f32 %v2318, 1e-05
        %v2327 = vadd.f32 %v2319, 1e-05
        %v2328 = vadd.f32 %v2320, 1e-05
        %v2329 = vadd.f32 %v2321, 1e-05
        %v2330 = vrsqrt.pop %v2322
        %v2331 = vrsqrt.pop %v2323
        %v2332 = vrsqrt.pop %v2324
        %v2333 = vrsqrt.pop %v2325
        %v2334 = vrsqrt.pop %v2326
        %v2335 = vrsqrt.pop %v2327
        %v2336 = vrsqrt.pop %v2328
        %v2337 = vrsqrt.pop %v2329
        %v2338 = vmul.f32 %v2282, %v2330
        %v2339 = vmul.f32 %v2283, %v2331
        %v2340 = vmul.f32 %v2284, %v2332
        %v2341 = vmul.f32 %v2285, %v2333
        %v2342 = vmul.f32 %v2286, %v2334
        %v2343 = vmul.f32 %v2287, %v2335
        %v2344 = vmul.f32 %v2288, %v2336
        %v2345 = vmul.f32 %v2289, %v2337
        %v2347 = vlaneseq
        %v2348 = vshrl.u32 %v2347, 7
        %v2349 = vsub.s32 0, %v2348
        %v2350 = vrot.slane %v2248, %v2349
        %v2352 = vmul.f32 %v2338, %v2350
        %v2353 = vmul.f32 %v2339, %v2350
        %v2354 = vmul.f32 %v2340, %v2350
        %v2355 = vmul.f32 %v2341, %v2350
        %v2356 = vmul.f32 %v2342, %v2350
        %v2357 = vmul.f32 %v2343, %v2350
        %v2358 = vmul.f32 %v2344, %v2350
        %v2359 = vmul.f32 %v2345, %v2350
        %v2361 = vlaneseq
        %v2362 = vshrl.u32 %v2361, 7
        %v2363 = vsub.s32 0, %v2362
        %v2364 = vrot.slane %v2249, %v2363
        %v2366 = vadd.f32 %v2352, %v2364
        %v2367 = vadd.f32 %v2353, %v2364
        %v2368 = vadd.f32 %v2354, %v2364
        %v2369 = vadd.f32 %v2355, %v2364
        %v2370 = vadd.f32 %v2356, %v2364
        %v2371 = vadd.f32 %v2357, %v2364
        %v2372 = vadd.f32 %v2358, %v2364
        %v2373 = vadd.f32 %v2359, %v2364
        %v2374 = vpack.c.bf16 %v2367, %v2366
        %v2375 = vpack.c.bf16 %v2369, %v2368
        %v2376 = vpack.c.bf16 %v2371, %v2370
        %v2377 = vpack.c.bf16 %v2373, %v2372
        %v2378 = vld [vmem:[#allocation18] sm:$0xf]
        %v2379 = vld [vmem:[#allocation18 + $0x4] sm:$0xf]
        %v2380 = vld [vmem:[#allocation18 + $0x8] sm:$0xf]
        %v2381 = vld [vmem:[#allocation18 + $0xc] sm:$0xf]
        %v2382 = vld [vmem:[#allocation18 + $0x10] sm:$0xf]
        %v2383 = vld [vmem:[#allocation18 + $0x14] sm:$0xf]
        %v2384 = vld [vmem:[#allocation18 + $0x18] sm:$0xf]
        %v2385 = vld [vmem:[#allocation18 + $0x1c] sm:$0xf]
        %v2386 = vld [vmem:[#allocation18 + $0x20] sm:$0xf]
        %v2387 = vld [vmem:[#allocation18 + $0x24] sm:$0xf]
        %v2388 = vld [vmem:[#allocation18 + $0x28] sm:$0xf]
        %v2389 = vld [vmem:[#allocation18 + $0x2c] sm:$0xf]
        %v2390 = vld [vmem:[#allocation18 + $0x30] sm:$0xf]
        %v2391 = vld [vmem:[#allocation18 + $0x34] sm:$0xf]
        %v2392 = vld [vmem:[#allocation18 + $0x38] sm:$0xf]
        %v2393 = vld [vmem:[#allocation18 + $0x3c] sm:$0xf]
        %v2394 = vld [vmem:[#allocation12 + $0xd] sm:$0x1]
        %v2396 = vlaneseq
        %v2397 = vshrl.u32 %v2396, 7
        %v2398 = vsub.s32 0, %v2397
        %v2399 = vrot.slane %v2394, %v2398
        %v2417 = vunpack.c.l.b16 %v2378
        %v2418 = vunpack.c.l.b16 %v2379
        %v2419 = vunpack.c.l.b16 %v2380
        %v2420 = vunpack.c.l.b16 %v2381
        %v2421 = vunpack.c.l.b16 %v2382
        %v2422 = vunpack.c.l.b16 %v2383
        %v2423 = vunpack.c.l.b16 %v2384
        %v2424 = vunpack.c.l.b16 %v2385
        %v2425 = vunpack.c.l.b16 %v2386
        %v2426 = vunpack.c.l.b16 %v2387
        %v2427 = vunpack.c.l.b16 %v2388
        %v2428 = vunpack.c.l.b16 %v2389
        %v2429 = vunpack.c.l.b16 %v2390
        %v2430 = vunpack.c.l.b16 %v2391
        %v2431 = vunpack.c.l.b16 %v2392
        %v2432 = vunpack.c.l.b16 %v2393
        %v2433 = vpack.c.b16 %v2418, %v2417
        %v2434 = vpack.c.b16 %v2420, %v2419
        %v2435 = vpack.c.b16 %v2422, %v2421
        %v2436 = vpack.c.b16 %v2424, %v2423
        %v2437 = vpack.c.b16 %v2426, %v2425
        %v2438 = vpack.c.b16 %v2428, %v2427
        %v2439 = vpack.c.b16 %v2430, %v2429
        %v2440 = vpack.c.b16 %v2432, %v2431
        %2449 = vmatprep.subr.bf16.mxu0 0
        %2450 = vmatpush1.bf16.msra.mxu0 %v2433
        %2451 = vmatprep.subr.bf16.mxu0 0
        %2452 = vmatpush1.bf16.msra.mxu0 %v2434
        %2453 = vmatprep.subr.bf16.mxu0 0
        %2454 = vmatpush1.bf16.msra.mxu0 %v2435
        %2455 = vmatprep.subr.bf16.mxu0 0
        %2456 = vmatpush1.bf16.msra.mxu0 %v2436
        %2457 = vmatprep.subr.bf16.mxu0 0
        %2458 = vmatpush1.bf16.msra.mxu0 %v2437
        %2459 = vmatprep.subr.bf16.mxu0 0
        %2460 = vmatpush1.bf16.msra.mxu0 %v2438
        %2461 = vmatprep.subr.bf16.mxu0 0
        %2462 = vmatpush1.bf16.msra.mxu0 %v2439
        %2463 = vmatprep.subr.bf16.mxu0 0
        %2464 = vmatpush1.bf16.msra.mxu0 %v2440
        %2465 = vmatprep.subr.bf16.mxu0 0
        %2466 = vmatpush1.bf16.msra.mxu0 0
        %2467 = vmatprep.subr.bf16.mxu0 0
        %2468 = vmatpush1.bf16.msra.mxu0 0
        %2469 = vmatprep.subr.bf16.mxu0 0
        %2470 = vmatpush1.bf16.msra.mxu0 0
        %2471 = vmatprep.subr.bf16.mxu0 0
        %2472 = vmatpush1.bf16.msra.mxu0 0
        %2473 = vmatprep.subr.bf16.mxu0 0
        %2474 = vmatpush1.bf16.msra.mxu0 0
        %2475 = vmatprep.subr.bf16.mxu0 0
        %2476 = vmatpush1.bf16.msra.mxu0 0
        %2477 = vmatprep.subr.bf16.mxu0 0
        %2478 = vmatpush1.bf16.msra.mxu0 0
        %2479 = vmatprep.subr.bf16.mxu0 0
        %2480 = vmatpush1.bf16.msra.mxu0 0
        %2481 = vmatprep.mubr.bf16.mxu0 0
        %2482 = vmatmul.mubr.bf16.gmra.mrb[0].mxu0 %v2374
        %v2483 = vpop.f32.mrb[0].mxu0
        %v2484 = vadd.f32 %v2399, %v2483
        %v2485 = vpop.f32.mrb[0].mxu0
        %v2486 = vpop.f32.mrb[0].mxu0
        %v2487 = vadd.f32 %v2399, %v2486
        %v2488 = vpop.f32.mrb[0].mxu0
        %2489 = vmatprep.mubr.bf16.mxu0 0
        %2490 = vmatmul.mubr.bf16.gmra.mrb[0].mxu0 %v2375
        %v2491 = vpop.f32.mrb[0].mxu0
        %v2492 = vadd.f32 %v2399, %v2491
        %v2493 = vpop.f32.mrb[0].mxu0
        %v2494 = vpop.f32.mrb[0].mxu0
        %v2495 = vadd.f32 %v2399, %v2494
        %v2496 = vpop.f32.mrb[0].mxu0
        %2497 = vmatprep.mubr.bf16.mxu0 0
        %2498 = vmatmul.mubr.bf16.gmra.mrb[0].mxu0 %v2376
        %v2499 = vpop.f32.mrb[0].mxu0
        %v2500 = vadd.f32 %v2399, %v2499
        %v2501 = vpop.f32.mrb[0].mxu0
        %v2502 = vpop.f32.mrb[0].mxu0
        %v2503 = vadd.f32 %v2399, %v2502
        %v2504 = vpop.f32.mrb[0].mxu0
        %2505 = vmatprep.mubr.bf16.mxu0 0
        %2506 = vmatmul.mubr.bf16.gmra.mrb[0].mxu0 %v2377
        %v2507 = vpop.f32.mrb[0].mxu0
        %v2508 = vadd.f32 %v2399, %v2507
        %v2509 = vpop.f32.mrb[0].mxu0
        %v2510 = vpop.f32.mrb[0].mxu0
        %v2511 = vadd.f32 %v2399, %v2510
        %v2512 = vpop.f32.mrb[0].mxu0
        %2513 = vdwg.mxu0
        %v2514 = vxor.u32 %v2484, 2147483648
        %v2515 = vxor.u32 %v2487, 2147483648
        %v2516 = vxor.u32 %v2492, 2147483648
        %v2517 = vxor.u32 %v2495, 2147483648
        %v2518 = vxor.u32 %v2500, 2147483648
        %v2519 = vxor.u32 %v2503, 2147483648
        %v2520 = vxor.u32 %v2508, 2147483648
        %v2521 = vxor.u32 %v2511, 2147483648
        %v2522 = vmul.f32 %v2514, 1.442695
        %v2523 = vpow.pop %v2522
        %v2524 = vmul.f32 %v2515, 1.442695
        %v2525 = vpow.pop %v2524
        %v2526 = vmul.f32 %v2516, 1.442695
        %v2527 = vpow.pop %v2526
        %v2528 = vmul.f32 %v2517, 1.442695
        %v2529 = vpow.pop %v2528
        %v2530 = vmul.f32 %v2518, 1.442695
        %v2531 = vpow.pop %v2530
        %v2532 = vmul.f32 %v2519, 1.442695
        %v2533 = vpow.pop %v2532
        %v2534 = vmul.f32 %v2520, 1.442695
        %v2535 = vpow.pop %v2534
        %v2536 = vmul.f32 %v2521, 1.442695
        %v2537 = vpow.pop %v2536
        %v2538 = vadd.f32 %v2523, 1.0
        %v2539 = vadd.f32 %v2525, 1.0
        %v2540 = vadd.f32 %v2527, 1.0
        %v2541 = vadd.f32 %v2529, 1.0
        %v2542 = vadd.f32 %v2531, 1.0
        %v2543 = vadd.f32 %v2533, 1.0
        %v2544 = vadd.f32 %v2535, 1.0
        %v2545 = vadd.f32 %v2537, 1.0
        %v2546 = vrcp.pop %v2538
        %v2547 = vmul.f32 1.0, %v2546
        %v2548 = vrcp.pop %v2539
        %v2549 = vmul.f32 1.0, %v2548
        %v2550 = vrcp.pop %v2540
        %v2551 = vmul.f32 1.0, %v2550
        %v2552 = vrcp.pop %v2541
        %v2553 = vmul.f32 1.0, %v2552
        %v2554 = vrcp.pop %v2542
        %v2555 = vmul.f32 1.0, %v2554
        %v2556 = vrcp.pop %v2543
        %v2557 = vmul.f32 1.0, %v2556
        %v2558 = vrcp.pop %v2544
        %v2559 = vmul.f32 1.0, %v2558
        %v2560 = vrcp.pop %v2545
        %v2561 = vmul.f32 1.0, %v2560
        %v2562 = vmul.f32 %v2484, %v2547
        %v2563 = vmul.f32 %v2487, %v2549
        %v2564 = vmul.f32 %v2492, %v2551
        %v2565 = vmul.f32 %v2495, %v2553
        %v2566 = vmul.f32 %v2500, %v2555
        %v2567 = vmul.f32 %v2503, %v2557
        %v2568 = vmul.f32 %v2508, %v2559
        %v2569 = vmul.f32 %v2511, %v2561
        %v2570 = vpack.c.bf16 %v2563, %v2562
        %v2571 = vpack.c.bf16 %v2565, %v2564
        %v2572 = vpack.c.bf16 %v2567, %v2566
        %v2573 = vpack.c.bf16 %v2569, %v2568
        %v2574 = vld [vmem:[#allocation19] sm:$0xf]
        %v2575 = vld [vmem:[#allocation19 + $0x4] sm:$0xf]
        %v2576 = vld [vmem:[#allocation19 + $0x8] sm:$0xf]
        %v2577 = vld [vmem:[#allocation19 + $0xc] sm:$0xf]
        %v2578 = vld [vmem:[#allocation19 + $0x10] sm:$0xf]
        %v2579 = vld [vmem:[#allocation19 + $0x14] sm:$0xf]
        %v2580 = vld [vmem:[#allocation19 + $0x18] sm:$0xf]
        %v2581 = vld [vmem:[#allocation19 + $0x1c] sm:$0xf]
        %v2582 = vld [vmem:[#allocation19 + $0x20] sm:$0xf]
        %v2583 = vld [vmem:[#allocation19 + $0x24] sm:$0xf]
        %v2584 = vld [vmem:[#allocation19 + $0x28] sm:$0xf]
        %v2585 = vld [vmem:[#allocation19 + $0x2c] sm:$0xf]
        %v2586 = vld [vmem:[#allocation19 + $0x30] sm:$0xf]
        %v2587 = vld [vmem:[#allocation19 + $0x34] sm:$0xf]
        %v2588 = vld [vmem:[#allocation19 + $0x38] sm:$0xf]
        %v2589 = vld [vmem:[#allocation19 + $0x3c] sm:$0xf]
        %v2590 = vld [vmem:[#allocation12 + $0xe] sm:$0x1]
        %v2592 = vlaneseq
        %v2593 = vshrl.u32 %v2592, 7
        %v2594 = vsub.s32 0, %v2593
        %v2595 = vrot.slane %v2590, %v2594
        %v2613 = vunpack.c.l.b16 %v2574
        %v2614 = vunpack.c.l.b16 %v2575
        %v2615 = vunpack.c.l.b16 %v2576
        %v2616 = vunpack.c.l.b16 %v2577
        %v2617 = vunpack.c.l.b16 %v2578
        %v2618 = vunpack.c.l.b16 %v2579
        %v2619 = vunpack.c.l.b16 %v2580
        %v2620 = vunpack.c.l.b16 %v2581
        %v2621 = vunpack.c.l.b16 %v2582
        %v2622 = vunpack.c.l.b16 %v2583
        %v2623 = vunpack.c.l.b16 %v2584
        %v2624 = vunpack.c.l.b16 %v2585
        %v2625 = vunpack.c.l.b16 %v2586
        %v2626 = vunpack.c.l.b16 %v2587
        %v2627 = vunpack.c.l.b16 %v2588
        %v2628 = vunpack.c.l.b16 %v2589
        %v2629 = vpack.c.b16 %v2614, %v2613
        %v2630 = vpack.c.b16 %v2616, %v2615
        %v2631 = vpack.c.b16 %v2618, %v2617
        %v2632 = vpack.c.b16 %v2620, %v2619
        %v2633 = vpack.c.b16 %v2622, %v2621
        %v2634 = vpack.c.b16 %v2624, %v2623
        %v2635 = vpack.c.b16 %v2626, %v2625
        %v2636 = vpack.c.b16 %v2628, %v2627
        %2645 = vmatprep.subr.bf16.mxu0 0
        %2646 = vmatpush1.bf16.msra.mxu0 %v2629
        %2647 = vmatprep.subr.bf16.mxu0 0
        %2648 = vmatpush1.bf16.msra.mxu0 %v2630
        %2649 = vmatprep.subr.bf16.mxu0 0
        %2650 = vmatpush1.bf16.msra.mxu0 %v2631
        %2651 = vmatprep.subr.bf16.mxu0 0
        %2652 = vmatpush1.bf16.msra.mxu0 %v2632
        %2653 = vmatprep.subr.bf16.mxu0 0
        %2654 = vmatpush1.bf16.msra.mxu0 %v2633
        %2655 = vmatprep.subr.bf16.mxu0 0
        %2656 = vmatpush1.bf16.msra.mxu0 %v2634
        %2657 = vmatprep.subr.bf16.mxu0 0
        %2658 = vmatpush1.bf16.msra.mxu0 %v2635
        %2659 = vmatprep.subr.bf16.mxu0 0
        %2660 = vmatpush1.bf16.msra.mxu0 %v2636
        %2661 = vmatprep.subr.bf16.mxu0 0
        %2662 = vmatpush1.bf16.msra.mxu0 0
        %2663 = vmatprep.subr.bf16.mxu0 0
        %2664 = vmatpush1.bf16.msra.mxu0 0
        %2665 = vmatprep.subr.bf16.mxu0 0
        %2666 = vmatpush1.bf16.msra.mxu0 0
        %2667 = vmatprep.subr.bf16.mxu0 0
        %2668 = vmatpush1.bf16.msra.mxu0 0
        %2669 = vmatprep.subr.bf16.mxu0 0
        %2670 = vmatpush1.bf16.msra.mxu0 0
        %2671 = vmatprep.subr.bf16.mxu0 0
        %2672 = vmatpush1.bf16.msra.mxu0 0
        %2673 = vmatprep.subr.bf16.mxu0 0
        %2674 = vmatpush1.bf16.msra.mxu0 0
        %2675 = vmatprep.subr.bf16.mxu0 0
        %2676 = vmatpush1.bf16.msra.mxu0 0
        %2677 = vmatprep.mubr.bf16.mxu0 0
        %2678 = vmatmul.mubr.bf16.gmra.mrb[0].mxu0 %v2570
        %v2679 = vpop.f32.mrb[0].mxu0
        %v2680 = vadd.f32 %v2595, %v2679
        %v2681 = vpop.f32.mrb[0].mxu0
        %v2682 = vpop.f32.mrb[0].mxu0
        %v2683 = vadd.f32 %v2595, %v2682
        %v2684 = vpop.f32.mrb[0].mxu0
        %2685 = vmatprep.mubr.bf16.mxu0 0
        %2686 = vmatmul.mubr.bf16.gmra.mrb[0].mxu0 %v2571
        %v2687 = vpop.f32.mrb[0].mxu0
        %v2688 = vadd.f32 %v2595, %v2687
        %v2689 = vpop.f32.mrb[0].mxu0
        %v2690 = vpop.f32.mrb[0].mxu0
        %v2691 = vadd.f32 %v2595, %v2690
        %v2692 = vpop.f32.mrb[0].mxu0
        %2693 = vmatprep.mubr.bf16.mxu0 0
        %2694 = vmatmul.mubr.bf16.gmra.mrb[0].mxu0 %v2572
        %v2695 = vpop.f32.mrb[0].mxu0
        %v2696 = vadd.f32 %v2595, %v2695
        %v2697 = vpop.f32.mrb[0].mxu0
        %v2698 = vpop.f32.mrb[0].mxu0
        %v2699 = vadd.f32 %v2595, %v2698
        %v2700 = vpop.f32.mrb[0].mxu0
        %2701 = vmatprep.mubr.bf16.mxu0 0
        %2702 = vmatmul.mubr.bf16.gmra.mrb[0].mxu0 %v2573
        %v2703 = vpop.f32.mrb[0].mxu0
        %v2704 = vadd.f32 %v2595, %v2703
        %v2705 = vpop.f32.mrb[0].mxu0
        %v2706 = vpop.f32.mrb[0].mxu0
        %v2707 = vadd.f32 %v2595, %v2706
        %v2708 = vpop.f32.mrb[0].mxu0
        %2709 = vdwg.mxu0
        %v2710 = vadd.f32 %v2680, %v2366
        %v2711 = vadd.f32 %v2683, %v2367
        %v2712 = vadd.f32 %v2688, %v2368
        %v2713 = vadd.f32 %v2691, %v2369
        %v2714 = vadd.f32 %v2696, %v2370
        %v2715 = vadd.f32 %v2699, %v2371
        %v2716 = vadd.f32 %v2704, %v2372
        %v2717 = vadd.f32 %v2707, %v2373
        %v2718 = vld [vmem:[#allocation12 + $0xf] sm:$0x1]
        %v2719 = vld [vmem:[#allocation12 + $0x10] sm:$0x1]
        %2720 = vadd.xlane.f32.xlu0 %v2710
        %v2721 = vpop.xlane.xlu0 %2720
        %2722 = vadd.xlane.f32.xlu0 %v2711
        %v2723 = vpop.xlane.xlu0 %2722
        %2724 = vadd.xlane.f32.xlu0 %v2712
        %v2725 = vpop.xlane.xlu0 %2724
        %2726 = vadd.xlane.f32.xlu0 %v2713
        %v2727 = vpop.xlane.xlu0 %2726
        %2728 = vadd.xlane.f32.xlu0 %v2714
        %v2729 = vpop.xlane.xlu0 %2728
        %2730 = vadd.xlane.f32.xlu0 %v2715
        %v2731 = vpop.xlane.xlu0 %2730
        %2732 = vadd.xlane.f32.xlu0 %v2716
        %v2733 = vpop.xlane.xlu0 %2732
        %2734 = vadd.xlane.f32.xlu0 %v2717
        %v2735 = vpop.xlane.xlu0 %2734
        %v2736 = vmul.f32 %v2721, 0.03125
        %v2737 = vmul.f32 %v2723, 0.03125
        %v2738 = vmul.f32 %v2725, 0.03125
        %v2739 = vmul.f32 %v2727, 0.03125
        %v2740 = vmul.f32 %v2729, 0.03125
        %v2741 = vmul.f32 %v2731, 0.03125
        %v2742 = vmul.f32 %v2733, 0.03125
        %v2743 = vmul.f32 %v2735, 0.03125
        %v2744 = vsub.f32 %v2710, %v2736
        %v2745 = vsub.f32 %v2711, %v2737
        %v2746 = vsub.f32 %v2712, %v2738
        %v2747 = vsub.f32 %v2713, %v2739
        %v2748 = vsub.f32 %v2714, %v2740
        %v2749 = vsub.f32 %v2715, %v2741
        %v2750 = vsub.f32 %v2716, %v2742
        %v2751 = vsub.f32 %v2717, %v2743
        %v2752 = vsel %vm498, %v2744, 0.0
        %v2753 = vsel %vm498, %v2745, 0.0
        %v2754 = vsel %vm498, %v2746, 0.0
        %v2755 = vsel %vm498, %v2747, 0.0
        %v2756 = vsel %vm498, %v2748, 0.0
        %v2757 = vsel %vm498, %v2749, 0.0
        %v2758 = vsel %vm498, %v2750, 0.0
        %v2759 = vsel %vm498, %v2751, 0.0
        %v2760 = vmul.f32 %v2752, %v2752
        %v2761 = vmul.f32 %v2753, %v2753
        %v2762 = vmul.f32 %v2754, %v2754
        %v2763 = vmul.f32 %v2755, %v2755
        %v2764 = vmul.f32 %v2756, %v2756
        %v2765 = vmul.f32 %v2757, %v2757
        %v2766 = vmul.f32 %v2758, %v2758
        %v2767 = vmul.f32 %v2759, %v2759
        %2768 = vadd.xlane.f32.xlu0 %v2760
        %v2769 = vpop.xlane.xlu0 %2768
        %2770 = vadd.xlane.f32.xlu0 %v2761
        %v2771 = vpop.xlane.xlu0 %2770
        %2772 = vadd.xlane.f32.xlu0 %v2762
        %v2773 = vpop.xlane.xlu0 %2772
        %2774 = vadd.xlane.f32.xlu0 %v2763
        %v2775 = vpop.xlane.xlu0 %2774
        %2776 = vadd.xlane.f32.xlu0 %v2764
        %v2777 = vpop.xlane.xlu0 %2776
        %2778 = vadd.xlane.f32.xlu0 %v2765
        %v2779 = vpop.xlane.xlu0 %2778
        %2780 = vadd.xlane.f32.xlu0 %v2766
        %v2781 = vpop.xlane.xlu0 %2780
        %2782 = vadd.xlane.f32.xlu0 %v2767
        %v2783 = vpop.xlane.xlu0 %2782
        %v2784 = vmul.f32 %v2769, 0.03125
        %v2785 = vmul.f32 %v2771, 0.03125
        %v2786 = vmul.f32 %v2773, 0.03125
        %v2787 = vmul.f32 %v2775, 0.03125
        %v2788 = vmul.f32 %v2777, 0.03125
        %v2789 = vmul.f32 %v2779, 0.03125
        %v2790 = vmul.f32 %v2781, 0.03125
        %v2791 = vmul.f32 %v2783, 0.03125
        %v2792 = vadd.f32 %v2784, 1e-05
        %v2793 = vadd.f32 %v2785, 1e-05
        %v2794 = vadd.f32 %v2786, 1e-05
        %v2795 = vadd.f32 %v2787, 1e-05
        %v2796 = vadd.f32 %v2788, 1e-05
        %v2797 = vadd.f32 %v2789, 1e-05
        %v2798 = vadd.f32 %v2790, 1e-05
        %v2799 = vadd.f32 %v2791, 1e-05
        %v2800 = vrsqrt.pop %v2792
        %v2801 = vrsqrt.pop %v2793
        %v2802 = vrsqrt.pop %v2794
        %v2803 = vrsqrt.pop %v2795
        %v2804 = vrsqrt.pop %v2796
        %v2805 = vrsqrt.pop %v2797
        %v2806 = vrsqrt.pop %v2798
        %v2807 = vrsqrt.pop %v2799
        %v2808 = vmul.f32 %v2752, %v2800
        %v2809 = vmul.f32 %v2753, %v2801
        %v2810 = vmul.f32 %v2754, %v2802
        %v2811 = vmul.f32 %v2755, %v2803
        %v2812 = vmul.f32 %v2756, %v2804
        %v2813 = vmul.f32 %v2757, %v2805
        %v2814 = vmul.f32 %v2758, %v2806
        %v2815 = vmul.f32 %v2759, %v2807
        %v2817 = vlaneseq
        %v2818 = vshrl.u32 %v2817, 7
        %v2819 = vsub.s32 0, %v2818
        %v2820 = vrot.slane %v2718, %v2819
        %v2822 = vmul.f32 %v2808, %v2820
        %v2823 = vmul.f32 %v2809, %v2820
        %v2824 = vmul.f32 %v2810, %v2820
        %v2825 = vmul.f32 %v2811, %v2820
        %v2826 = vmul.f32 %v2812, %v2820
        %v2827 = vmul.f32 %v2813, %v2820
        %v2828 = vmul.f32 %v2814, %v2820
        %v2829 = vmul.f32 %v2815, %v2820
        %v2831 = vlaneseq
        %v2832 = vshrl.u32 %v2831, 7
        %v2833 = vsub.s32 0, %v2832
        %v2834 = vrot.slane %v2719, %v2833
        %v2836 = vadd.f32 %v2822, %v2834
        %v2837 = vadd.f32 %v2823, %v2834
        %v2838 = vadd.f32 %v2824, %v2834
        %v2839 = vadd.f32 %v2825, %v2834
        %v2840 = vadd.f32 %v2826, %v2834
        %v2841 = vadd.f32 %v2827, %v2834
        %v2842 = vadd.f32 %v2828, %v2834
        %v2843 = vadd.f32 %v2829, %v2834
        %2844 = vst [vmem:[%s491] sm:$0xff] %v2836
        %2845 = vst [vmem:[%s491 + $0x8] sm:$0xff] %v2837
        %2846 = vst [vmem:[%s491 + $0x10] sm:$0xff] %v2838
        %2847 = vst [vmem:[%s491 + $0x18] sm:$0xff] %v2839
        %2848 = vst [vmem:[%s491 + $0x20] sm:$0xff] %v2840
        %2849 = vst [vmem:[%s491 + $0x28] sm:$0xff] %v2841
        %2850 = vst [vmem:[%s491 + $0x30] sm:$0xff] %v2842
        %2851 = vst [vmem:[%s491 + $0x38] sm:$0xff] %v2843
        %s2852 = sand.u32 %s239, 1
        %s2853 = scalar_lea.sflag [#allocation9], %s2852
        %s2854 = sand.u32 %s239, 1
        %s2855 = smul.addr %s2854, 64
        %s2856 = scalar_lea.vmem [#allocation22], %s2855
        // Predicated region
        $region100: #{fwd.2} parent=55 // pred_check
          %p2857 = pneg %p249
        $region101: #{fwd.2} parent=55 // pred_check_branch
          %2859 = sbr.rel (%p2857) target = $region103
        $region102: #{fwd.2} parent=55 // pred_region
          %s2860 = smul.u32 2, %s32
          %s2862 = ssub.s32 1024, 1024
          %2863 = vsyncadd %s2853, %s2862
          %s2864 = smul.addr %s2860, 4
          %s2865 = smul.addr %s2864, 128
          %s2866 = scalar_lea.hbm %s9, %s2865
          %s2867 = sshll.u32 %s2856, 4
          %s2868 = int_to_ptr.vmem [resolvable:$true] %s2867
          %2873 = dma.vmem_to_hbm [thread:$0]  %s2868, 1024, %s2866, %s2853, 128, 128, 8
        $region103: #{fwd.2} parent=55 // pred_fallthru
          _
      $region56: #{fwd.2} parent=5 // pred_fallthru
        _
      %p2874 = scmp.le.s32.totalorder 2, %s27
      // Predicated region
      $region104: #{fwd.2} parent=5 // pred_check
        %p2875 = pneg %p2874
      $region105: #{fwd.2} parent=5 // pred_check_branch
        %2877 = sbr.rel (%p2875) target = $region107
      $region106: #{fwd.2} parent=5 // pred_region
        %s2878 = ssub.s32 %s27, 2
        // Predicated region
        $region108: #{fwd.2} parent=106 // pred_check
          %p2879 = pneg %p255
        $region109: #{fwd.2} parent=106 // pred_check_branch
          %2881 = sbr.rel (%p2879) target = $region111
        $region110: #{fwd.2} parent=106 // pred_region
          %s2882 = sand.u32 %s240, 1
          %s2883 = scalar_lea.sflag [#allocation9], %s2882
          %s2884 = sand.u32 %s240, 1
          %s2885 = smul.addr %s2884, 64
          %s2886 = scalar_lea.vmem [#allocation22], %s2885
          %2887 = dma.done %s2883, 1024
        $region111: #{fwd.2} parent=106 // pred_fallthru
          _
      $region107: #{fwd.2} parent=5 // pred_fallthru
        _
    $region6: #{fwd.2} parent=1 // loop_footer
      %s31 = sadd.s32 1, %s27
    $region7: #{fwd.2} parent=1 // loop_footer_branch
      %26 = sbr.rel target = $region3
    $region8: #{fwd.2} parent=1 // loop_exit
      _
    %2888 = vsyncpa [#allocation8], 1
    %s2889 = scalar_lea.sflag [#allocation8], 1
    %2890 = vsyncpa %s2889, 1
    %2891 = vsyncpa [#allocation11], 1
    %s2892 = scalar_lea.sflag [#allocation11], 1
    %2893 = vsyncpa %s2892, 1
    %2894 = vsyncpa [#allocation14], 1
    %2895 = vsyncpa [#allocation17], 1
    %2896 = vsyncpa [#allocation20], 1
    %2897 = vsyncpa [#allocation9], 1
    %s2898 = scalar_lea.sflag [#allocation9], 1
    %2899 = vsyncpa %s2898, 1

</llo_original>
